<compile_context>
chip_gen: v6e
topology: v6e:2x2x1
jax: 0.10.0
libtpu: 0.0.40
codegen_flags: <defaults>
</compile_context>

<pallas_src>
import jax
import jax.numpy as jnp
from jax.experimental import pallas as pl
from jax.experimental.pallas import tpu as pltpu

# ---------------- static model config ----------------
N = 16                        # nodes per graph
C_IN = 4                      # in_channels
C_OUT = 8                     # out_channels (multiple of C_IN)
HEADS = C_OUT // C_IN         # GAT heads = 2
DEPTH = 3                     # number of blocks
JK_DEPTH = 7                  # JumpingKnowledge num_layers
K_TAG = 3                     # TAGConv K
C_JK = HEADS * C_IN           # GAT concat width = JK channels = 8
HID = (JK_DEPTH * C_JK) // 2  # bi-LSTM hidden per direction = 28
EPS = 1e-5                    # BatchNorm eps
NEG_SLOPE = 0.2               # GAT leaky_relu slope
B = 8                         # batch of graphs (grid axis)


def _sigmoid(z):
    # exact sigmoid via a single EUP tanh (no exp + divide on the serial path)
    return 0.5 * jnp.tanh(0.5 * z) + 0.5


def attention_block_kernel(
    x_ref,        # [1, N, C_IN]                    (per-graph block)
    a_hat_ref,    # [1, N, N]                       sym-normalized adjacency (no self loops)
    mask_ref,     # [1, N, N]                       edge mask incl. self loops (GAT softmax)
    tag_w_ref,    # [DEPTH, (K_TAG+1)*C_IN, C_IN]   stacked TAGConv hop weights
    tag_b_ref,    # [DEPTH, 1, C_IN]
    gat_w_ref,    # [DEPTH, C_IN, HEADS*C_IN]
    gat_a_ref,    # [DEPTH, HEADS*C_IN, 2*HEADS]    block-diag packed (a_src | a_dst)
    gat_b_ref,    # [DEPTH, 1, HEADS*C_IN]
    wih_ref,      # [2, C_JK, 4*HID]                gates i,f,g,o on the lane axis
    whh_ref,      # [2, HID, 4*HID]
    lb_ref,       # [2, 1, 4*HID]                   combined b_ih + b_hh
    awf_ref,      # [1, HID]                        JK attention weight (forward half)
    awb_ref,      # [1, HID]                        JK attention weight (backward half)
    ab_ref,       # [1, 1]                          JK attention bias
    out_ref,      # [1, N, C_JK]
):
    x = x_ref[0]
    a_hat = a_hat_ref[0]
    mask = mask_ref[0]

    jk_outs = []
    for layer in range(DEPTH):
        # ---------- TAGConv: out = [x | Ax | A^2x | A^3x] @ W_stack + b ----------
        hops = [x]
        h = x
        for _ in range(K_TAG):
            h = jnp.dot(a_hat, h, preferred_element_type=jnp.float32)
            hops.append(h)
        hop_stack = jnp.concatenate(hops, axis=1)                  # [N, (K+1)*C_IN]
        tag_out = (jnp.dot(hop_stack, tag_w_ref[layer],
                           preferred_element_type=jnp.float32)
                   + tag_b_ref[layer])

        # ---------- SublayerConnection: BatchNorm1d(x + sublayer(x)), affine=False ----------
        y = x + tag_out
        mean = jnp.mean(y, axis=0, keepdims=True)
        var = jnp.mean((y - mean) ** 2, axis=0, keepdims=True)
        x = (y - mean) * jax.lax.rsqrt(var + EPS)

        # ---------- GATConv (heads=HEADS, concat=True) ----------
        xw = jnp.dot(x, gat_w_ref[layer], preferred_element_type=jnp.float32)   # [N, H*C]
        # one dot produces [alpha_src_h0, alpha_src_h1, alpha_dst_h0, alpha_dst_h1]
        alpha = jnp.dot(xw, gat_a_ref[layer], preferred_element_type=jnp.float32)  # [N, 2*H]
        head_outs = []
        for hd in range(HEADS):
            a_src = alpha[:, hd:hd + 1]                            # [N, 1]
            a_dst = alpha[:, HEADS + hd:HEADS + hd + 1]            # [N, 1]
            # e[i, j] = leaky_relu(alpha_src[j] + alpha_dst[i]); softmax over edges j->i
            e = a_dst + jnp.transpose(a_src)                       # [N_dst, N_src]
            e = jnp.where(e > 0, e, NEG_SLOPE * e)
            e = jnp.where(mask > 0, e, -1e30)
            e = e - jnp.max(e, axis=1, keepdims=True)
            p = jnp.exp(e)                                         # masked entries -> 0
            p = p * pl.reciprocal(jnp.sum(p, axis=1, keepdims=True), approx=True)
            xw_h = xw[:, hd * C_IN:(hd + 1) * C_IN]
            head_outs.append(jnp.dot(p, xw_h, preferred_element_type=jnp.float32))
        gat_out = jnp.concatenate(head_outs, axis=1) + gat_b_ref[layer]
        jk_outs.append(gat_out)

    # ---------- JumpingKnowledge('lstm'): bi-LSTM + attention over layer outputs ----------
    x_stack = jnp.concatenate(jk_outs, axis=0)                     # [DEPTH*N, C_JK]

    def lstm_direction(direction, order):
        # input transform for all timesteps, hoisted out of the recurrence
        gin = (jnp.dot(x_stack, wih_ref[direction],
                       preferred_element_type=jnp.float32)
               + lb_ref[direction])                                # [DEPTH*N, 4*HID]
        whh = whh_ref[direction]                                   # [HID, 4*HID]
        h = jnp.zeros((N, HID), jnp.float32)
        c = jnp.zeros((N, HID), jnp.float32)
        outs = [None] * DEPTH
        for t in order:
            g_all = (gin[t * N:(t + 1) * N, :]
                     + jnp.dot(h, whh, preferred_element_type=jnp.float32))  # [N, 4*HID]
            i_g = _sigmoid(g_all[:, 0:HID])
            f_g = _sigmoid(g_all[:, HID:2 * HID])
            g_g = jnp.tanh(g_all[:, 2 * HID:3 * HID])
            o_g = _sigmoid(g_all[:, 3 * HID:4 * HID])
            c = f_g * c + i_g * g_g
            h = o_g * jnp.tanh(c)
            outs[t] = h
        return outs

    fwd = lstm_direction(0, range(DEPTH))
    bwd = lstm_direction(1, range(DEPTH - 1, -1, -1))

    aw_f = awf_ref[...]                                            # [1, HID]
    aw_b = awb_ref[...]                                            # [1, HID]
    a_b = ab_ref[...]                                              # [1, 1]
    scores = []
    for t in range(DEPTH):
        # pure VPU/XLU reductions instead of 1-lane-wide MXU dots
        s = (jnp.sum(fwd[t] * aw_f, axis=1, keepdims=True)
             + jnp.sum(bwd[t] * aw_b, axis=1, keepdims=True)
             + a_b)                                                # [N, 1]
        scores.append(s)
    alpha = jnp.concatenate(scores, axis=1)                        # [N, DEPTH]
    alpha = alpha - jnp.max(alpha, axis=1, keepdims=True)
    alpha = jnp.exp(alpha)
    alpha = alpha * pl.reciprocal(jnp.sum(alpha, axis=1, keepdims=True), approx=True)

    out = alpha[:, 0:1] * jk_outs[0]
    for t in range(1, DEPTH):
        out = out + alpha[:, t:t + 1] * jk_outs[t]
    out_ref[0] = out


def attention_block(x, a_hat, mask, params):
    """x: [B,N,C_IN], a_hat/mask: [B,N,N], params: repacked weights (shared across batch)."""
    batch = x.shape[0]

    def graph_spec(shape):
        nrest = len(shape) - 1
        return pl.BlockSpec((1,) + tuple(shape[1:]),
                            lambda b, _n=nrest: (b,) + (0,) * _n)

    def weight_spec(shape):
        nz = len(shape)
        return pl.BlockSpec(tuple(shape), lambda b, _n=nz: (0,) * _n)

    in_specs = [graph_spec(x.shape), graph_spec(a_hat.shape), graph_spec(mask.shape)]
    in_specs += [weight_spec(p.shape) for p in params]
    out_specs = pl.BlockSpec((1, N, C_JK), lambda b: (b, 0, 0))

    return pl.pallas_call(
        attention_block_kernel,
        out_shape=jax.ShapeDtypeStruct((batch, N, C_JK), jnp.float32),
        grid=(batch,),
        in_specs=in_specs,
        out_specs=out_specs,
        compiler_params=pltpu.CompilerParams(dimension_semantics=("parallel",)),
    )(x, a_hat, mask, *params)


# ---------------- deterministic parameter / input construction (glue) ----------------
def xavier_uniform(key, shape, fan_in, fan_out):
    a = jnp.sqrt(6.0 / (fan_in + fan_out))
    return jax.random.uniform(key, shape, jnp.float32, -a, a)


def make_params(key):
    ks = jax.random.split(key, 12)
    # TAGConv: hop weights stacked on sublanes per layer -> whole aligned tile per layer.
    tag_w = xavier_uniform(ks[0], (DEPTH, (K_TAG + 1) * C_IN, C_IN), C_IN, C_IN)
    tag_b = 0.1 * jax.random.normal(ks[1], (DEPTH, 1, C_IN), jnp.float32)
    # GAT linear weight per layer.
    gat_w = xavier_uniform(ks[2], (DEPTH, C_IN, HEADS * C_IN), C_IN, HEADS * C_IN)
    # GAT per-head attention vectors, packed block-diagonally into [H*C, 2*H] so that
    # xw @ gat_a yields [alpha_src(h0), alpha_src(h1), alpha_dst(h0), alpha_dst(h1)].
    gat_as = xavier_uniform(ks[3], (DEPTH, HEADS, C_IN), C_IN, 1)
    gat_ad = xavier_uniform(ks[4], (DEPTH, HEADS, C_IN), C_IN, 1)
    gat_a = jnp.zeros((DEPTH, HEADS * C_IN, 2 * HEADS), jnp.float32)
    for h in range(HEADS):
        gat_a = gat_a.at[:, h * C_IN:(h + 1) * C_IN, h].set(gat_as[:, h, :])
        gat_a = gat_a.at[:, h * C_IN:(h + 1) * C_IN, HEADS + h].set(gat_ad[:, h, :])
    gat_b = 0.1 * jax.random.normal(ks[5], (DEPTH, 1, HEADS * C_IN), jnp.float32)
    # LSTM: gates i,f,g,o concatenated on the lane axis; leading [direction] index axis.
    wih = xavier_uniform(ks[6], (2, C_JK, 4 * HID), C_JK, HID)
    whh = xavier_uniform(ks[7], (2, HID, 4 * HID), HID, HID)
    lb = 0.1 * jax.random.normal(ks[8], (2, 1, 4 * HID), jnp.float32)  # b_ih + b_hh combined
    # JK attention (Linear(2*HID, 1)) split into forward/backward halves as row vectors.
    awf = xavier_uniform(ks[9], (1, HID), 2 * HID, 1)
    awb = xavier_uniform(ks[10], (1, HID), 2 * HID, 1)
    ab = 0.1 * jax.random.normal(ks[11], (1, 1), jnp.float32)
    return (tag_w, tag_b, gat_w, gat_a, gat_b, wih, whh, lb, awf, awb, ab)


def make_graph():
    # symmetric ring + a few chords; no self loops in edge_index.
    # TODO(synk): edge_index -> dense adjacency densification is done in JAX glue
    # (scatter at these tiny sizes has no useful Pallas equivalent).
    src = jnp.arange(N)
    dst = (src + 1) % N
    ch_s = jnp.array([0, 3, 5, 8])
    ch_d = jnp.array([7, 11, 13, 2])
    src_all = jnp.concatenate([src, dst, ch_s, ch_d])
    dst_all = jnp.concatenate([dst, src, ch_d, ch_s])
    edge_index = jnp.stack([src_all, dst_all])             # [2, num_edges]

    adj = jnp.zeros((N, N), jnp.float32).at[dst_all, src_all].set(1.0)
    deg = adj.sum(axis=1)
    dinv = jnp.where(deg > 0, 1.0 / jnp.sqrt(deg), 0.0)
    a_hat = adj * dinv[:, None] * dinv[None, :]            # TAGConv gcn_norm (no self loops)
    mask = jnp.clip(adj + jnp.eye(N, dtype=jnp.float32), 0.0, 1.0)  # GAT: edges + self loops
    return edge_index, a_hat, mask


if __name__ == "__main__":
    key = jax.random.PRNGKey(0)
    k_x, k_p = jax.random.split(key)
    x = jax.random.normal(k_x, (B, N, C_IN), jnp.float32)
    edge_index, a_hat, mask = make_graph()
    a_hat_b = jnp.tile(a_hat[None], (B, 1, 1))
    mask_b = jnp.tile(mask[None], (B, 1, 1))
    params = make_params(k_p)

    out = attention_block(x, a_hat_b, mask_b, params)
    out = jax.block_until_ready(out)
    assert out.shape == (B, N, C_JK)
    assert bool(jnp.all(jnp.isfinite(out)))
    print("KERNEL_OK")
</pallas_src>

<mosaic_0001>
module attributes {stable_mosaic.version = 11 : i64} {
  func.func @attention_block_kernel(%arg0: i32, %arg1: memref<1x16x4xf32, #tpu.memory_space<vmem>>, %arg2: memref<1x16x16xf32, #tpu.memory_space<vmem>>, %arg3: memref<1x16x16xf32, #tpu.memory_space<vmem>>, %arg4: memref<3x16x4xf32, #tpu.memory_space<vmem>>, %arg5: memref<3x1x4xf32, #tpu.memory_space<vmem>>, %arg6: memref<3x4x8xf32, #tpu.memory_space<vmem>>, %arg7: memref<3x8x4xf32, #tpu.memory_space<vmem>>, %arg8: memref<3x1x8xf32, #tpu.memory_space<vmem>>, %arg9: memref<2x8x112xf32, #tpu.memory_space<vmem>>, %arg10: memref<2x28x112xf32, #tpu.memory_space<vmem>>, %arg11: memref<2x1x112xf32, #tpu.memory_space<vmem>>, %arg12: memref<1x28xf32, #tpu.memory_space<vmem>>, %arg13: memref<1x28xf32, #tpu.memory_space<vmem>>, %arg14: memref<1x1xf32, #tpu.memory_space<vmem>>, %arg15: memref<1x16x8xf32, #tpu.memory_space<vmem>>) attributes {dimension_semantics = [#tpu.dimension_semantics<parallel>], iteration_bounds = array<i64: 8>, scalar_prefetch = 0 : i64, scratch_operands = 0 : i64, tpu.core_type = #tpu.core_type<tc>, window_params = [{transform_indices = @transform_0, window_bounds = array<i64: 1, 16, 4>}, {transform_indices = @transform_1, window_bounds = array<i64: 1, 16, 16>}, {transform_indices = @transform_2, window_bounds = array<i64: 1, 16, 16>}, {pipeline_mode = #tpu.pipeline_mode<synchronous>, transform_indices = @transform_3, window_bounds = array<i64: 3, 16, 4>}, {pipeline_mode = #tpu.pipeline_mode<synchronous>, transform_indices = @transform_4, window_bounds = array<i64: 3, 1, 4>}, {pipeline_mode = #tpu.pipeline_mode<synchronous>, transform_indices = @transform_5, window_bounds = array<i64: 3, 4, 8>}, {pipeline_mode = #tpu.pipeline_mode<synchronous>, transform_indices = @transform_6, window_bounds = array<i64: 3, 8, 4>}, {pipeline_mode = #tpu.pipeline_mode<synchronous>, transform_indices = @transform_7, window_bounds = array<i64: 3, 1, 8>}, {pipeline_mode = #tpu.pipeline_mode<synchronous>, transform_indices = @transform_8, window_bounds = array<i64: 2, 8, 112>}, {pipeline_mode = #tpu.pipeline_mode<synchronous>, transform_indices = @transform_9, window_bounds = array<i64: 2, 28, 112>}, {pipeline_mode = #tpu.pipeline_mode<synchronous>, transform_indices = @transform_10, window_bounds = array<i64: 2, 1, 112>}, {pipeline_mode = #tpu.pipeline_mode<synchronous>, transform_indices = @transform_11, window_bounds = array<i64: 1, 28>}, {pipeline_mode = #tpu.pipeline_mode<synchronous>, transform_indices = @transform_12, window_bounds = array<i64: 1, 28>}, {pipeline_mode = #tpu.pipeline_mode<synchronous>, transform_indices = @transform_13, window_bounds = array<i64: 1, 1>}, {transform_indices = @transform_14, window_bounds = array<i64: 1, 16, 8>}]} {
    %c0 = arith.constant 0 : index
    %c0_0 = arith.constant 0 : index
    %c0_1 = arith.constant 0 : index
    %0 = vector.load %arg1[%c0, %c0_0, %c0_1] : memref<1x16x4xf32, #tpu.memory_space<vmem>>, vector<1x16x4xf32>
    %1 = vector.shape_cast %0 : vector<1x16x4xf32> to vector<16x4xf32>
    %c0_2 = arith.constant 0 : index
    %c0_3 = arith.constant 0 : index
    %c0_4 = arith.constant 0 : index
    %2 = vector.load %arg2[%c0_2, %c0_3, %c0_4] : memref<1x16x16xf32, #tpu.memory_space<vmem>>, vector<1x16x16xf32>
    %3 = vector.shape_cast %2 : vector<1x16x16xf32> to vector<16x16xf32>
    %c0_5 = arith.constant 0 : index
    %c0_6 = arith.constant 0 : index
    %c0_7 = arith.constant 0 : index
    %4 = vector.load %arg3[%c0_5, %c0_6, %c0_7] : memref<1x16x16xf32, #tpu.memory_space<vmem>>, vector<1x16x16xf32>
    %5 = vector.shape_cast %4 : vector<1x16x16xf32> to vector<16x16xf32>
    %cst = arith.constant dense<0.000000e+00> : vector<16x4xf32>
    %6 = tpu.matmul %3, %1, %cst {dimension_numbers = #tpu.dot_dimension_numbers<[1], [0], [0], [1], [0, 0, 1, 1], [], []>} : vector<16x16xf32>, vector<16x4xf32>, vector<16x4xf32> -> vector<16x4xf32>
    %cst_8 = arith.constant dense<0.000000e+00> : vector<16x4xf32>
    %7 = tpu.matmul %3, %6, %cst_8 {dimension_numbers = #tpu.dot_dimension_numbers<[1], [0], [0], [1], [0, 0, 1, 1], [], []>} : vector<16x16xf32>, vector<16x4xf32>, vector<16x4xf32> -> vector<16x4xf32>
    %cst_9 = arith.constant dense<0.000000e+00> : vector<16x4xf32>
    %8 = tpu.matmul %3, %7, %cst_9 {dimension_numbers = #tpu.dot_dimension_numbers<[1], [0], [0], [1], [0, 0, 1, 1], [], []>} : vector<16x16xf32>, vector<16x4xf32>, vector<16x4xf32> -> vector<16x4xf32>
    %9 = tpu.concatenate %1, %6, %7, %8 in 1 : vector<16x4xf32>, vector<16x4xf32>, vector<16x4xf32>, vector<16x4xf32> -> vector<16x16xf32>
    %c0_10 = arith.constant 0 : index
    %c0_11 = arith.constant 0 : index
    %c0_12 = arith.constant 0 : index
    %10 = vector.load %arg4[%c0_10, %c0_11, %c0_12] : memref<3x16x4xf32, #tpu.memory_space<vmem>>, vector<1x16x4xf32>
    %11 = vector.shape_cast %10 : vector<1x16x4xf32> to vector<16x4xf32>
    %cst_13 = arith.constant dense<0.000000e+00> : vector<16x4xf32>
    %12 = tpu.matmul %9, %11, %cst_13 {dimension_numbers = #tpu.dot_dimension_numbers<[1], [0], [0], [1], [0, 0, 1, 1], [], []>} : vector<16x16xf32>, vector<16x4xf32>, vector<16x4xf32> -> vector<16x4xf32>
    %c0_14 = arith.constant 0 : index
    %c0_15 = arith.constant 0 : index
    %c0_16 = arith.constant 0 : index
    %13 = vector.load %arg5[%c0_14, %c0_15, %c0_16] : memref<3x1x4xf32, #tpu.memory_space<vmem>>, vector<1x1x4xf32>
    %14 = vector.shape_cast %13 : vector<1x1x4xf32> to vector<1x4xf32>
    %15 = vector.broadcast %14 : vector<1x4xf32> to vector<16x4xf32>
    %16 = arith.addf %12, %15 : vector<16x4xf32>
    %17 = arith.addf %1, %16 : vector<16x4xf32>
    %cst_17 = arith.constant dense<0.000000e+00> : vector<4xf32>
    %18 = vector.multi_reduction <add>, %17, %cst_17 [0] : vector<16x4xf32> to vector<4xf32>
    %19 = vector.shape_cast %18 : vector<4xf32> to vector<1x4xf32>
    %cst_18 = arith.constant 1.600000e+01 : f32
    %20 = vector.broadcast %cst_18 : f32 to vector<1x4xf32>
    %21 = arith.divf %19, %20 : vector<1x4xf32>
    %22 = vector.broadcast %21 : vector<1x4xf32> to vector<16x4xf32>
    %23 = arith.subf %17, %22 : vector<16x4xf32>
    %24 = arith.mulf %23, %23 : vector<16x4xf32>
    %cst_19 = arith.constant dense<0.000000e+00> : vector<4xf32>
    %25 = vector.multi_reduction <add>, %24, %cst_19 [0] : vector<16x4xf32> to vector<4xf32>
    %26 = vector.shape_cast %25 : vector<4xf32> to vector<1x4xf32>
    %cst_20 = arith.constant 1.600000e+01 : f32
    %27 = vector.broadcast %cst_20 : f32 to vector<1x4xf32>
    %28 = arith.divf %26, %27 : vector<1x4xf32>
    %29 = vector.broadcast %21 : vector<1x4xf32> to vector<16x4xf32>
    %30 = arith.subf %17, %29 : vector<16x4xf32>
    %cst_21 = arith.constant 9.99999974E-6 : f32
    %31 = vector.broadcast %cst_21 : f32 to vector<1x4xf32>
    %32 = arith.addf %28, %31 : vector<1x4xf32>
    %33 = math.rsqrt %32 : vector<1x4xf32>
    %34 = vector.broadcast %33 : vector<1x4xf32> to vector<16x4xf32>
    %35 = arith.mulf %30, %34 : vector<16x4xf32>
    %c0_22 = arith.constant 0 : index
    %c0_23 = arith.constant 0 : index
    %c0_24 = arith.constant 0 : index
    %36 = vector.load %arg6[%c0_22, %c0_23, %c0_24] : memref<3x4x8xf32, #tpu.memory_space<vmem>>, vector<1x4x8xf32>
    %37 = vector.shape_cast %36 : vector<1x4x8xf32> to vector<4x8xf32>
    %cst_25 = arith.constant dense<0.000000e+00> : vector<16x8xf32>
    %38 = tpu.matmul %35, %37, %cst_25 {dimension_numbers = #tpu.dot_dimension_numbers<[1], [0], [0], [1], [0, 0, 1, 1], [], []>} : vector<16x4xf32>, vector<4x8xf32>, vector<16x8xf32> -> vector<16x8xf32>
    %c0_26 = arith.constant 0 : index
    %c0_27 = arith.constant 0 : index
    %c0_28 = arith.constant 0 : index
    %39 = vector.load %arg7[%c0_26, %c0_27, %c0_28] : memref<3x8x4xf32, #tpu.memory_space<vmem>>, vector<1x8x4xf32>
    %40 = vector.shape_cast %39 : vector<1x8x4xf32> to vector<8x4xf32>
    %cst_29 = arith.constant dense<0.000000e+00> : vector<16x4xf32>
    %41 = tpu.matmul %38, %40, %cst_29 {dimension_numbers = #tpu.dot_dimension_numbers<[1], [0], [0], [1], [0, 0, 1, 1], [], []>} : vector<16x8xf32>, vector<8x4xf32>, vector<16x4xf32> -> vector<16x4xf32>
    %42 = vector.extract_strided_slice %41 {offsets = [0, 0], sizes = [16, 1], strides = [1, 1]} : vector<16x4xf32> to vector<16x1xf32>
    %43 = vector.extract_strided_slice %41 {offsets = [0, 2], sizes = [16, 1], strides = [1, 1]} : vector<16x4xf32> to vector<16x1xf32>
    %44 = tpu.transpose %42, [1, 0] : vector<16x1xf32> -> vector<1x16xf32>
    %45 = vector.broadcast %43 : vector<16x1xf32> to vector<16x16xf32>
    %46 = vector.broadcast %44 : vector<1x16xf32> to vector<16x16xf32>
    %47 = arith.addf %45, %46 : vector<16x16xf32>
    %cst_30 = arith.constant 0.000000e+00 : f32
    %48 = vector.broadcast %cst_30 : f32 to vector<16x16xf32>
    %49 = arith.cmpf ogt, %47, %48 : vector<16x16xf32>
    %cst_31 = arith.constant 2.000000e-01 : f32
    %50 = vector.broadcast %cst_31 : f32 to vector<16x16xf32>
    %51 = arith.mulf %50, %47 : vector<16x16xf32>
    %52 = arith.select %49, %47, %51 : vector<16x16xi1>, vector<16x16xf32>
    %cst_32 = arith.constant 0.000000e+00 : f32
    %53 = vector.broadcast %cst_32 : f32 to vector<16x16xf32>
    %54 = arith.cmpf ogt, %5, %53 : vector<16x16xf32>
    %cst_33 = arith.constant -1.000000e+30 : f32
    %55 = vector.broadcast %cst_33 : f32 to vector<16x16xf32>
    %56 = arith.select %54, %52, %55 : vector<16x16xi1>, vector<16x16xf32>
    %cst_34 = arith.constant dense<0xFF800000> : vector<16xf32>
    %57 = vector.multi_reduction <maximumf>, %56, %cst_34 [1] : vector<16x16xf32> to vector<16xf32>
    %58 = vector.shape_cast %57 : vector<16xf32> to vector<16x1xf32>
    %59 = vector.broadcast %58 : vector<16x1xf32> to vector<16x16xf32>
    %60 = arith.subf %56, %59 : vector<16x16xf32>
    %61 = math.exp %60 : vector<16x16xf32>
    %cst_35 = arith.constant dense<0.000000e+00> : vector<16xf32>
    %62 = vector.multi_reduction <add>, %61, %cst_35 [1] : vector<16x16xf32> to vector<16xf32>
    %63 = vector.shape_cast %62 : vector<16xf32> to vector<16x1xf32>
    %64 = tpu.reciprocal %63 {approx = true} : vector<16x1xf32> -> vector<16x1xf32>
    %65 = vector.broadcast %64 : vector<16x1xf32> to vector<16x16xf32>
    %66 = arith.mulf %61, %65 : vector<16x16xf32>
    %67 = vector.extract_strided_slice %38 {offsets = [0, 0], sizes = [16, 4], strides = [1, 1]} : vector<16x8xf32> to vector<16x4xf32>
    %cst_36 = arith.constant dense<0.000000e+00> : vector<16x4xf32>
    %68 = tpu.matmul %66, %67, %cst_36 {dimension_numbers = #tpu.dot_dimension_numbers<[1], [0], [0], [1], [0, 0, 1, 1], [], []>} : vector<16x16xf32>, vector<16x4xf32>, vector<16x4xf32> -> vector<16x4xf32>
    %69 = vector.extract_strided_slice %41 {offsets = [0, 1], sizes = [16, 1], strides = [1, 1]} : vector<16x4xf32> to vector<16x1xf32>
    %70 = vector.extract_strided_slice %41 {offsets = [0, 3], sizes = [16, 1], strides = [1, 1]} : vector<16x4xf32> to vector<16x1xf32>
    %71 = tpu.transpose %69, [1, 0] : vector<16x1xf32> -> vector<1x16xf32>
    %72 = vector.broadcast %70 : vector<16x1xf32> to vector<16x16xf32>
    %73 = vector.broadcast %71 : vector<1x16xf32> to vector<16x16xf32>
    %74 = arith.addf %72, %73 : vector<16x16xf32>
    %cst_37 = arith.constant 0.000000e+00 : f32
    %75 = vector.broadcast %cst_37 : f32 to vector<16x16xf32>
    %76 = arith.cmpf ogt, %74, %75 : vector<16x16xf32>
    %cst_38 = arith.constant 2.000000e-01 : f32
    %77 = vector.broadcast %cst_38 : f32 to vector<16x16xf32>
    %78 = arith.mulf %77, %74 : vector<16x16xf32>
    %79 = arith.select %76, %74, %78 : vector<16x16xi1>, vector<16x16xf32>
    %cst_39 = arith.constant 0.000000e+00 : f32
    %80 = vector.broadcast %cst_39 : f32 to vector<16x16xf32>
    %81 = arith.cmpf ogt, %5, %80 : vector<16x16xf32>
    %cst_40 = arith.constant -1.000000e+30 : f32
    %82 = vector.broadcast %cst_40 : f32 to vector<16x16xf32>
    %83 = arith.select %81, %79, %82 : vector<16x16xi1>, vector<16x16xf32>
    %cst_41 = arith.constant dense<0xFF800000> : vector<16xf32>
    %84 = vector.multi_reduction <maximumf>, %83, %cst_41 [1] : vector<16x16xf32> to vector<16xf32>
    %85 = vector.shape_cast %84 : vector<16xf32> to vector<16x1xf32>
    %86 = vector.broadcast %85 : vector<16x1xf32> to vector<16x16xf32>
    %87 = arith.subf %83, %86 : vector<16x16xf32>
    %88 = math.exp %87 : vector<16x16xf32>
    %cst_42 = arith.constant dense<0.000000e+00> : vector<16xf32>
    %89 = vector.multi_reduction <add>, %88, %cst_42 [1] : vector<16x16xf32> to vector<16xf32>
    %90 = vector.shape_cast %89 : vector<16xf32> to vector<16x1xf32>
    %91 = tpu.reciprocal %90 {approx = true} : vector<16x1xf32> -> vector<16x1xf32>
    %92 = vector.broadcast %91 : vector<16x1xf32> to vector<16x16xf32>
    %93 = arith.mulf %88, %92 : vector<16x16xf32>
    %94 = vector.extract_strided_slice %38 {offsets = [0, 4], sizes = [16, 4], strides = [1, 1]} : vector<16x8xf32> to vector<16x4xf32>
    %cst_43 = arith.constant dense<0.000000e+00> : vector<16x4xf32>
    %95 = tpu.matmul %93, %94, %cst_43 {dimension_numbers = #tpu.dot_dimension_numbers<[1], [0], [0], [1], [0, 0, 1, 1], [], []>} : vector<16x16xf32>, vector<16x4xf32>, vector<16x4xf32> -> vector<16x4xf32>
    %96 = tpu.concatenate %68, %95 in 1 : vector<16x4xf32>, vector<16x4xf32> -> vector<16x8xf32>
    %c0_44 = arith.constant 0 : index
    %c0_45 = arith.constant 0 : index
    %c0_46 = arith.constant 0 : index
    %97 = vector.load %arg8[%c0_44, %c0_45, %c0_46] : memref<3x1x8xf32, #tpu.memory_space<vmem>>, vector<1x1x8xf32>
    %98 = vector.shape_cast %97 : vector<1x1x8xf32> to vector<1x8xf32>
    %99 = vector.broadcast %98 : vector<1x8xf32> to vector<16x8xf32>
    %100 = arith.addf %96, %99 : vector<16x8xf32>
    %cst_47 = arith.constant dense<0.000000e+00> : vector<16x4xf32>
    %101 = tpu.matmul %3, %35, %cst_47 {dimension_numbers = #tpu.dot_dimension_numbers<[1], [0], [0], [1], [0, 0, 1, 1], [], []>} : vector<16x16xf32>, vector<16x4xf32>, vector<16x4xf32> -> vector<16x4xf32>
    %cst_48 = arith.constant dense<0.000000e+00> : vector<16x4xf32>
    %102 = tpu.matmul %3, %101, %cst_48 {dimension_numbers = #tpu.dot_dimension_numbers<[1], [0], [0], [1], [0, 0, 1, 1], [], []>} : vector<16x16xf32>, vector<16x4xf32>, vector<16x4xf32> -> vector<16x4xf32>
    %cst_49 = arith.constant dense<0.000000e+00> : vector<16x4xf32>
    %103 = tpu.matmul %3, %102, %cst_49 {dimension_numbers = #tpu.dot_dimension_numbers<[1], [0], [0], [1], [0, 0, 1, 1], [], []>} : vector<16x16xf32>, vector<16x4xf32>, vector<16x4xf32> -> vector<16x4xf32>
    %104 = tpu.concatenate %35, %101, %102, %103 in 1 : vector<16x4xf32>, vector<16x4xf32>, vector<16x4xf32>, vector<16x4xf32> -> vector<16x16xf32>
    %c1 = arith.constant 1 : index
    %c0_50 = arith.constant 0 : index
    %c0_51 = arith.constant 0 : index
    %105 = vector.load %arg4[%c1, %c0_50, %c0_51] : memref<3x16x4xf32, #tpu.memory_space<vmem>>, vector<1x16x4xf32>
    %106 = vector.shape_cast %105 : vector<1x16x4xf32> to vector<16x4xf32>
    %cst_52 = arith.constant dense<0.000000e+00> : vector<16x4xf32>
    %107 = tpu.matmul %104, %106, %cst_52 {dimension_numbers = #tpu.dot_dimension_numbers<[1], [0], [0], [1], [0, 0, 1, 1], [], []>} : vector<16x16xf32>, vector<16x4xf32>, vector<16x4xf32> -> vector<16x4xf32>
    %c1_53 = arith.constant 1 : index
    %c0_54 = arith.constant 0 : index
    %c0_55 = arith.constant 0 : index
    %108 = vector.load %arg5[%c1_53, %c0_54, %c0_55] : memref<3x1x4xf32, #tpu.memory_space<vmem>>, vector<1x1x4xf32>
    %109 = vector.shape_cast %108 : vector<1x1x4xf32> to vector<1x4xf32>
    %110 = vector.broadcast %109 : vector<1x4xf32> to vector<16x4xf32>
    %111 = arith.addf %107, %110 : vector<16x4xf32>
    %112 = arith.addf %35, %111 : vector<16x4xf32>
    %cst_56 = arith.constant dense<0.000000e+00> : vector<4xf32>
    %113 = vector.multi_reduction <add>, %112, %cst_56 [0] : vector<16x4xf32> to vector<4xf32>
    %114 = vector.shape_cast %113 : vector<4xf32> to vector<1x4xf32>
    %cst_57 = arith.constant 1.600000e+01 : f32
    %115 = vector.broadcast %cst_57 : f32 to vector<1x4xf32>
    %116 = arith.divf %114, %115 : vector<1x4xf32>
    %117 = vector.broadcast %116 : vector<1x4xf32> to vector<16x4xf32>
    %118 = arith.subf %112, %117 : vector<16x4xf32>
    %119 = arith.mulf %118, %118 : vector<16x4xf32>
    %cst_58 = arith.constant dense<0.000000e+00> : vector<4xf32>
    %120 = vector.multi_reduction <add>, %119, %cst_58 [0] : vector<16x4xf32> to vector<4xf32>
    %121 = vector.shape_cast %120 : vector<4xf32> to vector<1x4xf32>
    %cst_59 = arith.constant 1.600000e+01 : f32
    %122 = vector.broadcast %cst_59 : f32 to vector<1x4xf32>
    %123 = arith.divf %121, %122 : vector<1x4xf32>
    %124 = vector.broadcast %116 : vector<1x4xf32> to vector<16x4xf32>
    %125 = arith.subf %112, %124 : vector<16x4xf32>
    %cst_60 = arith.constant 9.99999974E-6 : f32
    %126 = vector.broadcast %cst_60 : f32 to vector<1x4xf32>
    %127 = arith.addf %123, %126 : vector<1x4xf32>
    %128 = math.rsqrt %127 : vector<1x4xf32>
    %129 = vector.broadcast %128 : vector<1x4xf32> to vector<16x4xf32>
    %130 = arith.mulf %125, %129 : vector<16x4xf32>
    %c1_61 = arith.constant 1 : index
    %c0_62 = arith.constant 0 : index
    %c0_63 = arith.constant 0 : index
    %131 = vector.load %arg6[%c1_61, %c0_62, %c0_63] : memref<3x4x8xf32, #tpu.memory_space<vmem>>, vector<1x4x8xf32>
    %132 = vector.shape_cast %131 : vector<1x4x8xf32> to vector<4x8xf32>
    %cst_64 = arith.constant dense<0.000000e+00> : vector<16x8xf32>
    %133 = tpu.matmul %130, %132, %cst_64 {dimension_numbers = #tpu.dot_dimension_numbers<[1], [0], [0], [1], [0, 0, 1, 1], [], []>} : vector<16x4xf32>, vector<4x8xf32>, vector<16x8xf32> -> vector<16x8xf32>
    %c1_65 = arith.constant 1 : index
    %c0_66 = arith.constant 0 : index
    %c0_67 = arith.constant 0 : index
    %134 = vector.load %arg7[%c1_65, %c0_66, %c0_67] : memref<3x8x4xf32, #tpu.memory_space<vmem>>, vector<1x8x4xf32>
    %135 = vector.shape_cast %134 : vector<1x8x4xf32> to vector<8x4xf32>
    %cst_68 = arith.constant dense<0.000000e+00> : vector<16x4xf32>
    %136 = tpu.matmul %133, %135, %cst_68 {dimension_numbers = #tpu.dot_dimension_numbers<[1], [0], [0], [1], [0, 0, 1, 1], [], []>} : vector<16x8xf32>, vector<8x4xf32>, vector<16x4xf32> -> vector<16x4xf32>
    %137 = vector.extract_strided_slice %136 {offsets = [0, 0], sizes = [16, 1], strides = [1, 1]} : vector<16x4xf32> to vector<16x1xf32>
    %138 = vector.extract_strided_slice %136 {offsets = [0, 2], sizes = [16, 1], strides = [1, 1]} : vector<16x4xf32> to vector<16x1xf32>
    %139 = tpu.transpose %137, [1, 0] : vector<16x1xf32> -> vector<1x16xf32>
    %140 = vector.broadcast %138 : vector<16x1xf32> to vector<16x16xf32>
    %141 = vector.broadcast %139 : vector<1x16xf32> to vector<16x16xf32>
    %142 = arith.addf %140, %141 : vector<16x16xf32>
    %cst_69 = arith.constant 0.000000e+00 : f32
    %143 = vector.broadcast %cst_69 : f32 to vector<16x16xf32>
    %144 = arith.cmpf ogt, %142, %143 : vector<16x16xf32>
    %cst_70 = arith.constant 2.000000e-01 : f32
    %145 = vector.broadcast %cst_70 : f32 to vector<16x16xf32>
    %146 = arith.mulf %145, %142 : vector<16x16xf32>
    %147 = arith.select %144, %142, %146 : vector<16x16xi1>, vector<16x16xf32>
    %cst_71 = arith.constant 0.000000e+00 : f32
    %148 = vector.broadcast %cst_71 : f32 to vector<16x16xf32>
    %149 = arith.cmpf ogt, %5, %148 : vector<16x16xf32>
    %cst_72 = arith.constant -1.000000e+30 : f32
    %150 = vector.broadcast %cst_72 : f32 to vector<16x16xf32>
    %151 = arith.select %149, %147, %150 : vector<16x16xi1>, vector<16x16xf32>
    %cst_73 = arith.constant dense<0xFF800000> : vector<16xf32>
    %152 = vector.multi_reduction <maximumf>, %151, %cst_73 [1] : vector<16x16xf32> to vector<16xf32>
    %153 = vector.shape_cast %152 : vector<16xf32> to vector<16x1xf32>
    %154 = vector.broadcast %153 : vector<16x1xf32> to vector<16x16xf32>
    %155 = arith.subf %151, %154 : vector<16x16xf32>
    %156 = math.exp %155 : vector<16x16xf32>
    %cst_74 = arith.constant dense<0.000000e+00> : vector<16xf32>
    %157 = vector.multi_reduction <add>, %156, %cst_74 [1] : vector<16x16xf32> to vector<16xf32>
    %158 = vector.shape_cast %157 : vector<16xf32> to vector<16x1xf32>
    %159 = tpu.reciprocal %158 {approx = true} : vector<16x1xf32> -> vector<16x1xf32>
    %160 = vector.broadcast %159 : vector<16x1xf32> to vector<16x16xf32>
    %161 = arith.mulf %156, %160 : vector<16x16xf32>
    %162 = vector.extract_strided_slice %133 {offsets = [0, 0], sizes = [16, 4], strides = [1, 1]} : vector<16x8xf32> to vector<16x4xf32>
    %cst_75 = arith.constant dense<0.000000e+00> : vector<16x4xf32>
    %163 = tpu.matmul %161, %162, %cst_75 {dimension_numbers = #tpu.dot_dimension_numbers<[1], [0], [0], [1], [0, 0, 1, 1], [], []>} : vector<16x16xf32>, vector<16x4xf32>, vector<16x4xf32> -> vector<16x4xf32>
    %164 = vector.extract_strided_slice %136 {offsets = [0, 1], sizes = [16, 1], strides = [1, 1]} : vector<16x4xf32> to vector<16x1xf32>
    %165 = vector.extract_strided_slice %136 {offsets = [0, 3], sizes = [16, 1], strides = [1, 1]} : vector<16x4xf32> to vector<16x1xf32>
    %166 = tpu.transpose %164, [1, 0] : vector<16x1xf32> -> vector<1x16xf32>
    %167 = vector.broadcast %165 : vector<16x1xf32> to vector<16x16xf32>
    %168 = vector.broadcast %166 : vector<1x16xf32> to vector<16x16xf32>
    %169 = arith.addf %167, %168 : vector<16x16xf32>
    %cst_76 = arith.constant 0.000000e+00 : f32
    %170 = vector.broadcast %cst_76 : f32 to vector<16x16xf32>
    %171 = arith.cmpf ogt, %169, %170 : vector<16x16xf32>
    %cst_77 = arith.constant 2.000000e-01 : f32
    %172 = vector.broadcast %cst_77 : f32 to vector<16x16xf32>
    %173 = arith.mulf %172, %169 : vector<16x16xf32>
    %174 = arith.select %171, %169, %173 : vector<16x16xi1>, vector<16x16xf32>
    %cst_78 = arith.constant 0.000000e+00 : f32
    %175 = vector.broadcast %cst_78 : f32 to vector<16x16xf32>
    %176 = arith.cmpf ogt, %5, %175 : vector<16x16xf32>
    %cst_79 = arith.constant -1.000000e+30 : f32
    %177 = vector.broadcast %cst_79 : f32 to vector<16x16xf32>
    %178 = arith.select %176, %174, %177 : vector<16x16xi1>, vector<16x16xf32>
    %cst_80 = arith.constant dense<0xFF800000> : vector<16xf32>
    %179 = vector.multi_reduction <maximumf>, %178, %cst_80 [1] : vector<16x16xf32> to vector<16xf32>
    %180 = vector.shape_cast %179 : vector<16xf32> to vector<16x1xf32>
    %181 = vector.broadcast %180 : vector<16x1xf32> to vector<16x16xf32>
    %182 = arith.subf %178, %181 : vector<16x16xf32>
    %183 = math.exp %182 : vector<16x16xf32>
    %cst_81 = arith.constant dense<0.000000e+00> : vector<16xf32>
    %184 = vector.multi_reduction <add>, %183, %cst_81 [1] : vector<16x16xf32> to vector<16xf32>
    %185 = vector.shape_cast %184 : vector<16xf32> to vector<16x1xf32>
    %186 = tpu.reciprocal %185 {approx = true} : vector<16x1xf32> -> vector<16x1xf32>
    %187 = vector.broadcast %186 : vector<16x1xf32> to vector<16x16xf32>
    %188 = arith.mulf %183, %187 : vector<16x16xf32>
    %189 = vector.extract_strided_slice %133 {offsets = [0, 4], sizes = [16, 4], strides = [1, 1]} : vector<16x8xf32> to vector<16x4xf32>
    %cst_82 = arith.constant dense<0.000000e+00> : vector<16x4xf32>
    %190 = tpu.matmul %188, %189, %cst_82 {dimension_numbers = #tpu.dot_dimension_numbers<[1], [0], [0], [1], [0, 0, 1, 1], [], []>} : vector<16x16xf32>, vector<16x4xf32>, vector<16x4xf32> -> vector<16x4xf32>
    %191 = tpu.concatenate %163, %190 in 1 : vector<16x4xf32>, vector<16x4xf32> -> vector<16x8xf32>
    %c1_83 = arith.constant 1 : index
    %c0_84 = arith.constant 0 : index
    %c0_85 = arith.constant 0 : index
    %192 = vector.load %arg8[%c1_83, %c0_84, %c0_85] : memref<3x1x8xf32, #tpu.memory_space<vmem>>, vector<1x1x8xf32>
    %193 = vector.shape_cast %192 : vector<1x1x8xf32> to vector<1x8xf32>
    %194 = vector.broadcast %193 : vector<1x8xf32> to vector<16x8xf32>
    %195 = arith.addf %191, %194 : vector<16x8xf32>
    %cst_86 = arith.constant dense<0.000000e+00> : vector<16x4xf32>
    %196 = tpu.matmul %3, %130, %cst_86 {dimension_numbers = #tpu.dot_dimension_numbers<[1], [0], [0], [1], [0, 0, 1, 1], [], []>} : vector<16x16xf32>, vector<16x4xf32>, vector<16x4xf32> -> vector<16x4xf32>
    %cst_87 = arith.constant dense<0.000000e+00> : vector<16x4xf32>
    %197 = tpu.matmul %3, %196, %cst_87 {dimension_numbers = #tpu.dot_dimension_numbers<[1], [0], [0], [1], [0, 0, 1, 1], [], []>} : vector<16x16xf32>, vector<16x4xf32>, vector<16x4xf32> -> vector<16x4xf32>
    %cst_88 = arith.constant dense<0.000000e+00> : vector<16x4xf32>
    %198 = tpu.matmul %3, %197, %cst_88 {dimension_numbers = #tpu.dot_dimension_numbers<[1], [0], [0], [1], [0, 0, 1, 1], [], []>} : vector<16x16xf32>, vector<16x4xf32>, vector<16x4xf32> -> vector<16x4xf32>
    %199 = tpu.concatenate %130, %196, %197, %198 in 1 : vector<16x4xf32>, vector<16x4xf32>, vector<16x4xf32>, vector<16x4xf32> -> vector<16x16xf32>
    %c2 = arith.constant 2 : index
    %c0_89 = arith.constant 0 : index
    %c0_90 = arith.constant 0 : index
    %200 = vector.load %arg4[%c2, %c0_89, %c0_90] : memref<3x16x4xf32, #tpu.memory_space<vmem>>, vector<1x16x4xf32>
    %201 = vector.shape_cast %200 : vector<1x16x4xf32> to vector<16x4xf32>
    %cst_91 = arith.constant dense<0.000000e+00> : vector<16x4xf32>
    %202 = tpu.matmul %199, %201, %cst_91 {dimension_numbers = #tpu.dot_dimension_numbers<[1], [0], [0], [1], [0, 0, 1, 1], [], []>} : vector<16x16xf32>, vector<16x4xf32>, vector<16x4xf32> -> vector<16x4xf32>
    %c2_92 = arith.constant 2 : index
    %c0_93 = arith.constant 0 : index
    %c0_94 = arith.constant 0 : index
    %203 = vector.load %arg5[%c2_92, %c0_93, %c0_94] : memref<3x1x4xf32, #tpu.memory_space<vmem>>, vector<1x1x4xf32>
    %204 = vector.shape_cast %203 : vector<1x1x4xf32> to vector<1x4xf32>
    %205 = vector.broadcast %204 : vector<1x4xf32> to vector<16x4xf32>
    %206 = arith.addf %202, %205 : vector<16x4xf32>
    %207 = arith.addf %130, %206 : vector<16x4xf32>
    %cst_95 = arith.constant dense<0.000000e+00> : vector<4xf32>
    %208 = vector.multi_reduction <add>, %207, %cst_95 [0] : vector<16x4xf32> to vector<4xf32>
    %209 = vector.shape_cast %208 : vector<4xf32> to vector<1x4xf32>
    %cst_96 = arith.constant 1.600000e+01 : f32
    %210 = vector.broadcast %cst_96 : f32 to vector<1x4xf32>
    %211 = arith.divf %209, %210 : vector<1x4xf32>
    %212 = vector.broadcast %211 : vector<1x4xf32> to vector<16x4xf32>
    %213 = arith.subf %207, %212 : vector<16x4xf32>
    %214 = arith.mulf %213, %213 : vector<16x4xf32>
    %cst_97 = arith.constant dense<0.000000e+00> : vector<4xf32>
    %215 = vector.multi_reduction <add>, %214, %cst_97 [0] : vector<16x4xf32> to vector<4xf32>
    %216 = vector.shape_cast %215 : vector<4xf32> to vector<1x4xf32>
    %cst_98 = arith.constant 1.600000e+01 : f32
    %217 = vector.broadcast %cst_98 : f32 to vector<1x4xf32>
    %218 = arith.divf %216, %217 : vector<1x4xf32>
    %219 = vector.broadcast %211 : vector<1x4xf32> to vector<16x4xf32>
    %220 = arith.subf %207, %219 : vector<16x4xf32>
    %cst_99 = arith.constant 9.99999974E-6 : f32
    %221 = vector.broadcast %cst_99 : f32 to vector<1x4xf32>
    %222 = arith.addf %218, %221 : vector<1x4xf32>
    %223 = math.rsqrt %222 : vector<1x4xf32>
    %224 = vector.broadcast %223 : vector<1x4xf32> to vector<16x4xf32>
    %225 = arith.mulf %220, %224 : vector<16x4xf32>
    %c2_100 = arith.constant 2 : index
    %c0_101 = arith.constant 0 : index
    %c0_102 = arith.constant 0 : index
    %226 = vector.load %arg6[%c2_100, %c0_101, %c0_102] : memref<3x4x8xf32, #tpu.memory_space<vmem>>, vector<1x4x8xf32>
    %227 = vector.shape_cast %226 : vector<1x4x8xf32> to vector<4x8xf32>
    %cst_103 = arith.constant dense<0.000000e+00> : vector<16x8xf32>
    %228 = tpu.matmul %225, %227, %cst_103 {dimension_numbers = #tpu.dot_dimension_numbers<[1], [0], [0], [1], [0, 0, 1, 1], [], []>} : vector<16x4xf32>, vector<4x8xf32>, vector<16x8xf32> -> vector<16x8xf32>
    %c2_104 = arith.constant 2 : index
    %c0_105 = arith.constant 0 : index
    %c0_106 = arith.constant 0 : index
    %229 = vector.load %arg7[%c2_104, %c0_105, %c0_106] : memref<3x8x4xf32, #tpu.memory_space<vmem>>, vector<1x8x4xf32>
    %230 = vector.shape_cast %229 : vector<1x8x4xf32> to vector<8x4xf32>
    %cst_107 = arith.constant dense<0.000000e+00> : vector<16x4xf32>
    %231 = tpu.matmul %228, %230, %cst_107 {dimension_numbers = #tpu.dot_dimension_numbers<[1], [0], [0], [1], [0, 0, 1, 1], [], []>} : vector<16x8xf32>, vector<8x4xf32>, vector<16x4xf32> -> vector<16x4xf32>
    %232 = vector.extract_strided_slice %231 {offsets = [0, 0], sizes = [16, 1], strides = [1, 1]} : vector<16x4xf32> to vector<16x1xf32>
    %233 = vector.extract_strided_slice %231 {offsets = [0, 2], sizes = [16, 1], strides = [1, 1]} : vector<16x4xf32> to vector<16x1xf32>
    %234 = tpu.transpose %232, [1, 0] : vector<16x1xf32> -> vector<1x16xf32>
    %235 = vector.broadcast %233 : vector<16x1xf32> to vector<16x16xf32>
    %236 = vector.broadcast %234 : vector<1x16xf32> to vector<16x16xf32>
    %237 = arith.addf %235, %236 : vector<16x16xf32>
    %cst_108 = arith.constant 0.000000e+00 : f32
    %238 = vector.broadcast %cst_108 : f32 to vector<16x16xf32>
    %239 = arith.cmpf ogt, %237, %238 : vector<16x16xf32>
    %cst_109 = arith.constant 2.000000e-01 : f32
    %240 = vector.broadcast %cst_109 : f32 to vector<16x16xf32>
    %241 = arith.mulf %240, %237 : vector<16x16xf32>
    %242 = arith.select %239, %237, %241 : vector<16x16xi1>, vector<16x16xf32>
    %cst_110 = arith.constant 0.000000e+00 : f32
    %243 = vector.broadcast %cst_110 : f32 to vector<16x16xf32>
    %244 = arith.cmpf ogt, %5, %243 : vector<16x16xf32>
    %cst_111 = arith.constant -1.000000e+30 : f32
    %245 = vector.broadcast %cst_111 : f32 to vector<16x16xf32>
    %246 = arith.select %244, %242, %245 : vector<16x16xi1>, vector<16x16xf32>
    %cst_112 = arith.constant dense<0xFF800000> : vector<16xf32>
    %247 = vector.multi_reduction <maximumf>, %246, %cst_112 [1] : vector<16x16xf32> to vector<16xf32>
    %248 = vector.shape_cast %247 : vector<16xf32> to vector<16x1xf32>
    %249 = vector.broadcast %248 : vector<16x1xf32> to vector<16x16xf32>
    %250 = arith.subf %246, %249 : vector<16x16xf32>
    %251 = math.exp %250 : vector<16x16xf32>
    %cst_113 = arith.constant dense<0.000000e+00> : vector<16xf32>
    %252 = vector.multi_reduction <add>, %251, %cst_113 [1] : vector<16x16xf32> to vector<16xf32>
    %253 = vector.shape_cast %252 : vector<16xf32> to vector<16x1xf32>
    %254 = tpu.reciprocal %253 {approx = true} : vector<16x1xf32> -> vector<16x1xf32>
    %255 = vector.broadcast %254 : vector<16x1xf32> to vector<16x16xf32>
    %256 = arith.mulf %251, %255 : vector<16x16xf32>
    %257 = vector.extract_strided_slice %228 {offsets = [0, 0], sizes = [16, 4], strides = [1, 1]} : vector<16x8xf32> to vector<16x4xf32>
    %cst_114 = arith.constant dense<0.000000e+00> : vector<16x4xf32>
    %258 = tpu.matmul %256, %257, %cst_114 {dimension_numbers = #tpu.dot_dimension_numbers<[1], [0], [0], [1], [0, 0, 1, 1], [], []>} : vector<16x16xf32>, vector<16x4xf32>, vector<16x4xf32> -> vector<16x4xf32>
    %259 = vector.extract_strided_slice %231 {offsets = [0, 1], sizes = [16, 1], strides = [1, 1]} : vector<16x4xf32> to vector<16x1xf32>
    %260 = vector.extract_strided_slice %231 {offsets = [0, 3], sizes = [16, 1], strides = [1, 1]} : vector<16x4xf32> to vector<16x1xf32>
    %261 = tpu.transpose %259, [1, 0] : vector<16x1xf32> -> vector<1x16xf32>
    %262 = vector.broadcast %260 : vector<16x1xf32> to vector<16x16xf32>
    %263 = vector.broadcast %261 : vector<1x16xf32> to vector<16x16xf32>
    %264 = arith.addf %262, %263 : vector<16x16xf32>
    %cst_115 = arith.constant 0.000000e+00 : f32
    %265 = vector.broadcast %cst_115 : f32 to vector<16x16xf32>
    %266 = arith.cmpf ogt, %264, %265 : vector<16x16xf32>
    %cst_116 = arith.constant 2.000000e-01 : f32
    %267 = vector.broadcast %cst_116 : f32 to vector<16x16xf32>
    %268 = arith.mulf %267, %264 : vector<16x16xf32>
    %269 = arith.select %266, %264, %268 : vector<16x16xi1>, vector<16x16xf32>
    %cst_117 = arith.constant 0.000000e+00 : f32
    %270 = vector.broadcast %cst_117 : f32 to vector<16x16xf32>
    %271 = arith.cmpf ogt, %5, %270 : vector<16x16xf32>
    %cst_118 = arith.constant -1.000000e+30 : f32
    %272 = vector.broadcast %cst_118 : f32 to vector<16x16xf32>
    %273 = arith.select %271, %269, %272 : vector<16x16xi1>, vector<16x16xf32>
    %cst_119 = arith.constant dense<0xFF800000> : vector<16xf32>
    %274 = vector.multi_reduction <maximumf>, %273, %cst_119 [1] : vector<16x16xf32> to vector<16xf32>
    %275 = vector.shape_cast %274 : vector<16xf32> to vector<16x1xf32>
    %276 = vector.broadcast %275 : vector<16x1xf32> to vector<16x16xf32>
    %277 = arith.subf %273, %276 : vector<16x16xf32>
    %278 = math.exp %277 : vector<16x16xf32>
    %cst_120 = arith.constant dense<0.000000e+00> : vector<16xf32>
    %279 = vector.multi_reduction <add>, %278, %cst_120 [1] : vector<16x16xf32> to vector<16xf32>
    %280 = vector.shape_cast %279 : vector<16xf32> to vector<16x1xf32>
    %281 = tpu.reciprocal %280 {approx = true} : vector<16x1xf32> -> vector<16x1xf32>
    %282 = vector.broadcast %281 : vector<16x1xf32> to vector<16x16xf32>
    %283 = arith.mulf %278, %282 : vector<16x16xf32>
    %284 = vector.extract_strided_slice %228 {offsets = [0, 4], sizes = [16, 4], strides = [1, 1]} : vector<16x8xf32> to vector<16x4xf32>
    %cst_121 = arith.constant dense<0.000000e+00> : vector<16x4xf32>
    %285 = tpu.matmul %283, %284, %cst_121 {dimension_numbers = #tpu.dot_dimension_numbers<[1], [0], [0], [1], [0, 0, 1, 1], [], []>} : vector<16x16xf32>, vector<16x4xf32>, vector<16x4xf32> -> vector<16x4xf32>
    %286 = tpu.concatenate %258, %285 in 1 : vector<16x4xf32>, vector<16x4xf32> -> vector<16x8xf32>
    %c2_122 = arith.constant 2 : index
    %c0_123 = arith.constant 0 : index
    %c0_124 = arith.constant 0 : index
    %287 = vector.load %arg8[%c2_122, %c0_123, %c0_124] : memref<3x1x8xf32, #tpu.memory_space<vmem>>, vector<1x1x8xf32>
    %288 = vector.shape_cast %287 : vector<1x1x8xf32> to vector<1x8xf32>
    %289 = vector.broadcast %288 : vector<1x8xf32> to vector<16x8xf32>
    %290 = arith.addf %286, %289 : vector<16x8xf32>
    %291 = tpu.concatenate %100, %195, %290 in 0 : vector<16x8xf32>, vector<16x8xf32>, vector<16x8xf32> -> vector<48x8xf32>
    %c0_125 = arith.constant 0 : index
    %c0_126 = arith.constant 0 : index
    %c0_127 = arith.constant 0 : index
    %292 = vector.load %arg9[%c0_125, %c0_126, %c0_127] : memref<2x8x112xf32, #tpu.memory_space<vmem>>, vector<1x8x112xf32>
    %293 = vector.shape_cast %292 : vector<1x8x112xf32> to vector<8x112xf32>
    %cst_128 = arith.constant dense<0.000000e+00> : vector<48x112xf32>
    %294 = tpu.matmul %291, %293, %cst_128 {dimension_numbers = #tpu.dot_dimension_numbers<[1], [0], [0], [1], [0, 0, 1, 1], [], []>} : vector<48x8xf32>, vector<8x112xf32>, vector<48x112xf32> -> vector<48x112xf32>
    %c0_129 = arith.constant 0 : index
    %c0_130 = arith.constant 0 : index
    %c0_131 = arith.constant 0 : index
    %295 = vector.load %arg11[%c0_129, %c0_130, %c0_131] : memref<2x1x112xf32, #tpu.memory_space<vmem>>, vector<1x1x112xf32>
    %296 = vector.shape_cast %295 : vector<1x1x112xf32> to vector<1x112xf32>
    %297 = vector.broadcast %296 : vector<1x112xf32> to vector<48x112xf32>
    %298 = arith.addf %294, %297 : vector<48x112xf32>
    %c0_132 = arith.constant 0 : index
    %c0_133 = arith.constant 0 : index
    %c0_134 = arith.constant 0 : index
    %299 = vector.load %arg10[%c0_132, %c0_133, %c0_134] : memref<2x28x112xf32, #tpu.memory_space<vmem>>, vector<1x28x112xf32>
    %300 = vector.shape_cast %299 : vector<1x28x112xf32> to vector<28x112xf32>
    %cst_135 = arith.constant 0.000000e+00 : f32
    %301 = vector.broadcast %cst_135 : f32 to vector<16x28xf32>
    %cst_136 = arith.constant 0.000000e+00 : f32
    %302 = vector.broadcast %cst_136 : f32 to vector<16x28xf32>
    %303 = vector.extract_strided_slice %298 {offsets = [0, 0], sizes = [16, 112], strides = [1, 1]} : vector<48x112xf32> to vector<16x112xf32>
    %cst_137 = arith.constant dense<0.000000e+00> : vector<16x112xf32>
    %304 = tpu.matmul %301, %300, %cst_137 {dimension_numbers = #tpu.dot_dimension_numbers<[1], [0], [0], [1], [0, 0, 1, 1], [], []>} : vector<16x28xf32>, vector<28x112xf32>, vector<16x112xf32> -> vector<16x112xf32>
    %305 = arith.addf %303, %304 : vector<16x112xf32>
    %306 = vector.extract_strided_slice %305 {offsets = [0, 0], sizes = [16, 28], strides = [1, 1]} : vector<16x112xf32> to vector<16x28xf32>
    %cst_138 = arith.constant 5.000000e-01 : f32
    %307 = vector.broadcast %cst_138 : f32 to vector<16x28xf32>
    %308 = arith.mulf %307, %306 : vector<16x28xf32>
    %309 = math.tanh %308 : vector<16x28xf32>
    %cst_139 = arith.constant 5.000000e-01 : f32
    %310 = vector.broadcast %cst_139 : f32 to vector<16x28xf32>
    %311 = arith.mulf %310, %309 : vector<16x28xf32>
    %cst_140 = arith.constant 5.000000e-01 : f32
    %312 = vector.broadcast %cst_140 : f32 to vector<16x28xf32>
    %313 = arith.addf %311, %312 : vector<16x28xf32>
    %314 = vector.extract_strided_slice %305 {offsets = [0, 28], sizes = [16, 28], strides = [1, 1]} : vector<16x112xf32> to vector<16x28xf32>
    %cst_141 = arith.constant 5.000000e-01 : f32
    %315 = vector.broadcast %cst_141 : f32 to vector<16x28xf32>
    %316 = arith.mulf %315, %314 : vector<16x28xf32>
    %317 = math.tanh %316 : vector<16x28xf32>
    %cst_142 = arith.constant 5.000000e-01 : f32
    %318 = vector.broadcast %cst_142 : f32 to vector<16x28xf32>
    %319 = arith.mulf %318, %317 : vector<16x28xf32>
    %cst_143 = arith.constant 5.000000e-01 : f32
    %320 = vector.broadcast %cst_143 : f32 to vector<16x28xf32>
    %321 = arith.addf %319, %320 : vector<16x28xf32>
    %322 = vector.extract_strided_slice %305 {offsets = [0, 56], sizes = [16, 28], strides = [1, 1]} : vector<16x112xf32> to vector<16x28xf32>
    %323 = math.tanh %322 : vector<16x28xf32>
    %324 = vector.extract_strided_slice %305 {offsets = [0, 84], sizes = [16, 28], strides = [1, 1]} : vector<16x112xf32> to vector<16x28xf32>
    %cst_144 = arith.constant 5.000000e-01 : f32
    %325 = vector.broadcast %cst_144 : f32 to vector<16x28xf32>
    %326 = arith.mulf %325, %324 : vector<16x28xf32>
    %327 = math.tanh %326 : vector<16x28xf32>
    %cst_145 = arith.constant 5.000000e-01 : f32
    %328 = vector.broadcast %cst_145 : f32 to vector<16x28xf32>
    %329 = arith.mulf %328, %327 : vector<16x28xf32>
    %cst_146 = arith.constant 5.000000e-01 : f32
    %330 = vector.broadcast %cst_146 : f32 to vector<16x28xf32>
    %331 = arith.addf %329, %330 : vector<16x28xf32>
    %332 = arith.mulf %321, %302 : vector<16x28xf32>
    %333 = arith.mulf %313, %323 : vector<16x28xf32>
    %334 = arith.addf %332, %333 : vector<16x28xf32>
    %335 = math.tanh %334 : vector<16x28xf32>
    %336 = arith.mulf %331, %335 : vector<16x28xf32>
    %337 = vector.extract_strided_slice %298 {offsets = [16, 0], sizes = [16, 112], strides = [1, 1]} : vector<48x112xf32> to vector<16x112xf32>
    %cst_147 = arith.constant dense<0.000000e+00> : vector<16x112xf32>
    %338 = tpu.matmul %336, %300, %cst_147 {dimension_numbers = #tpu.dot_dimension_numbers<[1], [0], [0], [1], [0, 0, 1, 1], [], []>} : vector<16x28xf32>, vector<28x112xf32>, vector<16x112xf32> -> vector<16x112xf32>
    %339 = arith.addf %337, %338 : vector<16x112xf32>
    %340 = vector.extract_strided_slice %339 {offsets = [0, 0], sizes = [16, 28], strides = [1, 1]} : vector<16x112xf32> to vector<16x28xf32>
    %cst_148 = arith.constant 5.000000e-01 : f32
    %341 = vector.broadcast %cst_148 : f32 to vector<16x28xf32>
    %342 = arith.mulf %341, %340 : vector<16x28xf32>
    %343 = math.tanh %342 : vector<16x28xf32>
    %cst_149 = arith.constant 5.000000e-01 : f32
    %344 = vector.broadcast %cst_149 : f32 to vector<16x28xf32>
    %345 = arith.mulf %344, %343 : vector<16x28xf32>
    %cst_150 = arith.constant 5.000000e-01 : f32
    %346 = vector.broadcast %cst_150 : f32 to vector<16x28xf32>
    %347 = arith.addf %345, %346 : vector<16x28xf32>
    %348 = vector.extract_strided_slice %339 {offsets = [0, 28], sizes = [16, 28], strides = [1, 1]} : vector<16x112xf32> to vector<16x28xf32>
    %cst_151 = arith.constant 5.000000e-01 : f32
    %349 = vector.broadcast %cst_151 : f32 to vector<16x28xf32>
    %350 = arith.mulf %349, %348 : vector<16x28xf32>
    %351 = math.tanh %350 : vector<16x28xf32>
    %cst_152 = arith.constant 5.000000e-01 : f32
    %352 = vector.broadcast %cst_152 : f32 to vector<16x28xf32>
    %353 = arith.mulf %352, %351 : vector<16x28xf32>
    %cst_153 = arith.constant 5.000000e-01 : f32
    %354 = vector.broadcast %cst_153 : f32 to vector<16x28xf32>
    %355 = arith.addf %353, %354 : vector<16x28xf32>
    %356 = vector.extract_strided_slice %339 {offsets = [0, 56], sizes = [16, 28], strides = [1, 1]} : vector<16x112xf32> to vector<16x28xf32>
    %357 = math.tanh %356 : vector<16x28xf32>
    %358 = vector.extract_strided_slice %339 {offsets = [0, 84], sizes = [16, 28], strides = [1, 1]} : vector<16x112xf32> to vector<16x28xf32>
    %cst_154 = arith.constant 5.000000e-01 : f32
    %359 = vector.broadcast %cst_154 : f32 to vector<16x28xf32>
    %360 = arith.mulf %359, %358 : vector<16x28xf32>
    %361 = math.tanh %360 : vector<16x28xf32>
    %cst_155 = arith.constant 5.000000e-01 : f32
    %362 = vector.broadcast %cst_155 : f32 to vector<16x28xf32>
    %363 = arith.mulf %362, %361 : vector<16x28xf32>
    %cst_156 = arith.constant 5.000000e-01 : f32
    %364 = vector.broadcast %cst_156 : f32 to vector<16x28xf32>
    %365 = arith.addf %363, %364 : vector<16x28xf32>
    %366 = arith.mulf %355, %334 : vector<16x28xf32>
    %367 = arith.mulf %347, %357 : vector<16x28xf32>
    %368 = arith.addf %366, %367 : vector<16x28xf32>
    %369 = math.tanh %368 : vector<16x28xf32>
    %370 = arith.mulf %365, %369 : vector<16x28xf32>
    %371 = vector.extract_strided_slice %298 {offsets = [32, 0], sizes = [16, 112], strides = [1, 1]} : vector<48x112xf32> to vector<16x112xf32>
    %cst_157 = arith.constant dense<0.000000e+00> : vector<16x112xf32>
    %372 = tpu.matmul %370, %300, %cst_157 {dimension_numbers = #tpu.dot_dimension_numbers<[1], [0], [0], [1], [0, 0, 1, 1], [], []>} : vector<16x28xf32>, vector<28x112xf32>, vector<16x112xf32> -> vector<16x112xf32>
    %373 = arith.addf %371, %372 : vector<16x112xf32>
    %374 = vector.extract_strided_slice %373 {offsets = [0, 0], sizes = [16, 28], strides = [1, 1]} : vector<16x112xf32> to vector<16x28xf32>
    %cst_158 = arith.constant 5.000000e-01 : f32
    %375 = vector.broadcast %cst_158 : f32 to vector<16x28xf32>
    %376 = arith.mulf %375, %374 : vector<16x28xf32>
    %377 = math.tanh %376 : vector<16x28xf32>
    %cst_159 = arith.constant 5.000000e-01 : f32
    %378 = vector.broadcast %cst_159 : f32 to vector<16x28xf32>
    %379 = arith.mulf %378, %377 : vector<16x28xf32>
    %cst_160 = arith.constant 5.000000e-01 : f32
    %380 = vector.broadcast %cst_160 : f32 to vector<16x28xf32>
    %381 = arith.addf %379, %380 : vector<16x28xf32>
    %382 = vector.extract_strided_slice %373 {offsets = [0, 28], sizes = [16, 28], strides = [1, 1]} : vector<16x112xf32> to vector<16x28xf32>
    %cst_161 = arith.constant 5.000000e-01 : f32
    %383 = vector.broadcast %cst_161 : f32 to vector<16x28xf32>
    %384 = arith.mulf %383, %382 : vector<16x28xf32>
    %385 = math.tanh %384 : vector<16x28xf32>
    %cst_162 = arith.constant 5.000000e-01 : f32
    %386 = vector.broadcast %cst_162 : f32 to vector<16x28xf32>
    %387 = arith.mulf %386, %385 : vector<16x28xf32>
    %cst_163 = arith.constant 5.000000e-01 : f32
    %388 = vector.broadcast %cst_163 : f32 to vector<16x28xf32>
    %389 = arith.addf %387, %388 : vector<16x28xf32>
    %390 = vector.extract_strided_slice %373 {offsets = [0, 56], sizes = [16, 28], strides = [1, 1]} : vector<16x112xf32> to vector<16x28xf32>
    %391 = math.tanh %390 : vector<16x28xf32>
    %392 = vector.extract_strided_slice %373 {offsets = [0, 84], sizes = [16, 28], strides = [1, 1]} : vector<16x112xf32> to vector<16x28xf32>
    %cst_164 = arith.constant 5.000000e-01 : f32
    %393 = vector.broadcast %cst_164 : f32 to vector<16x28xf32>
    %394 = arith.mulf %393, %392 : vector<16x28xf32>
    %395 = math.tanh %394 : vector<16x28xf32>
    %cst_165 = arith.constant 5.000000e-01 : f32
    %396 = vector.broadcast %cst_165 : f32 to vector<16x28xf32>
    %397 = arith.mulf %396, %395 : vector<16x28xf32>
    %cst_166 = arith.constant 5.000000e-01 : f32
    %398 = vector.broadcast %cst_166 : f32 to vector<16x28xf32>
    %399 = arith.addf %397, %398 : vector<16x28xf32>
    %400 = arith.mulf %389, %368 : vector<16x28xf32>
    %401 = arith.mulf %381, %391 : vector<16x28xf32>
    %402 = arith.addf %400, %401 : vector<16x28xf32>
    %403 = math.tanh %402 : vector<16x28xf32>
    %404 = arith.mulf %399, %403 : vector<16x28xf32>
    %c1_167 = arith.constant 1 : index
    %c0_168 = arith.constant 0 : index
    %c0_169 = arith.constant 0 : index
    %405 = vector.load %arg9[%c1_167, %c0_168, %c0_169] : memref<2x8x112xf32, #tpu.memory_space<vmem>>, vector<1x8x112xf32>
    %406 = vector.shape_cast %405 : vector<1x8x112xf32> to vector<8x112xf32>
    %cst_170 = arith.constant dense<0.000000e+00> : vector<48x112xf32>
    %407 = tpu.matmul %291, %406, %cst_170 {dimension_numbers = #tpu.dot_dimension_numbers<[1], [0], [0], [1], [0, 0, 1, 1], [], []>} : vector<48x8xf32>, vector<8x112xf32>, vector<48x112xf32> -> vector<48x112xf32>
    %c1_171 = arith.constant 1 : index
    %c0_172 = arith.constant 0 : index
    %c0_173 = arith.constant 0 : index
    %408 = vector.load %arg11[%c1_171, %c0_172, %c0_173] : memref<2x1x112xf32, #tpu.memory_space<vmem>>, vector<1x1x112xf32>
    %409 = vector.shape_cast %408 : vector<1x1x112xf32> to vector<1x112xf32>
    %410 = vector.broadcast %409 : vector<1x112xf32> to vector<48x112xf32>
    %411 = arith.addf %407, %410 : vector<48x112xf32>
    %c1_174 = arith.constant 1 : index
    %c0_175 = arith.constant 0 : index
    %c0_176 = arith.constant 0 : index
    %412 = vector.load %arg10[%c1_174, %c0_175, %c0_176] : memref<2x28x112xf32, #tpu.memory_space<vmem>>, vector<1x28x112xf32>
    %413 = vector.shape_cast %412 : vector<1x28x112xf32> to vector<28x112xf32>
    %cst_177 = arith.constant 0.000000e+00 : f32
    %414 = vector.broadcast %cst_177 : f32 to vector<16x28xf32>
    %cst_178 = arith.constant 0.000000e+00 : f32
    %415 = vector.broadcast %cst_178 : f32 to vector<16x28xf32>
    %416 = vector.extract_strided_slice %411 {offsets = [32, 0], sizes = [16, 112], strides = [1, 1]} : vector<48x112xf32> to vector<16x112xf32>
    %cst_179 = arith.constant dense<0.000000e+00> : vector<16x112xf32>
    %417 = tpu.matmul %414, %413, %cst_179 {dimension_numbers = #tpu.dot_dimension_numbers<[1], [0], [0], [1], [0, 0, 1, 1], [], []>} : vector<16x28xf32>, vector<28x112xf32>, vector<16x112xf32> -> vector<16x112xf32>
    %418 = arith.addf %416, %417 : vector<16x112xf32>
    %419 = vector.extract_strided_slice %418 {offsets = [0, 0], sizes = [16, 28], strides = [1, 1]} : vector<16x112xf32> to vector<16x28xf32>
    %cst_180 = arith.constant 5.000000e-01 : f32
    %420 = vector.broadcast %cst_180 : f32 to vector<16x28xf32>
    %421 = arith.mulf %420, %419 : vector<16x28xf32>
    %422 = math.tanh %421 : vector<16x28xf32>
    %cst_181 = arith.constant 5.000000e-01 : f32
    %423 = vector.broadcast %cst_181 : f32 to vector<16x28xf32>
    %424 = arith.mulf %423, %422 : vector<16x28xf32>
    %cst_182 = arith.constant 5.000000e-01 : f32
    %425 = vector.broadcast %cst_182 : f32 to vector<16x28xf32>
    %426 = arith.addf %424, %425 : vector<16x28xf32>
    %427 = vector.extract_strided_slice %418 {offsets = [0, 28], sizes = [16, 28], strides = [1, 1]} : vector<16x112xf32> to vector<16x28xf32>
    %cst_183 = arith.constant 5.000000e-01 : f32
    %428 = vector.broadcast %cst_183 : f32 to vector<16x28xf32>
    %429 = arith.mulf %428, %427 : vector<16x28xf32>
    %430 = math.tanh %429 : vector<16x28xf32>
    %cst_184 = arith.constant 5.000000e-01 : f32
    %431 = vector.broadcast %cst_184 : f32 to vector<16x28xf32>
    %432 = arith.mulf %431, %430 : vector<16x28xf32>
    %cst_185 = arith.constant 5.000000e-01 : f32
    %433 = vector.broadcast %cst_185 : f32 to vector<16x28xf32>
    %434 = arith.addf %432, %433 : vector<16x28xf32>
    %435 = vector.extract_strided_slice %418 {offsets = [0, 56], sizes = [16, 28], strides = [1, 1]} : vector<16x112xf32> to vector<16x28xf32>
    %436 = math.tanh %435 : vector<16x28xf32>
    %437 = vector.extract_strided_slice %418 {offsets = [0, 84], sizes = [16, 28], strides = [1, 1]} : vector<16x112xf32> to vector<16x28xf32>
    %cst_186 = arith.constant 5.000000e-01 : f32
    %438 = vector.broadcast %cst_186 : f32 to vector<16x28xf32>
    %439 = arith.mulf %438, %437 : vector<16x28xf32>
    %440 = math.tanh %439 : vector<16x28xf32>
    %cst_187 = arith.constant 5.000000e-01 : f32
    %441 = vector.broadcast %cst_187 : f32 to vector<16x28xf32>
    %442 = arith.mulf %441, %440 : vector<16x28xf32>
    %cst_188 = arith.constant 5.000000e-01 : f32
    %443 = vector.broadcast %cst_188 : f32 to vector<16x28xf32>
    %444 = arith.addf %442, %443 : vector<16x28xf32>
    %445 = arith.mulf %434, %415 : vector<16x28xf32>
    %446 = arith.mulf %426, %436 : vector<16x28xf32>
    %447 = arith.addf %445, %446 : vector<16x28xf32>
    %448 = math.tanh %447 : vector<16x28xf32>
    %449 = arith.mulf %444, %448 : vector<16x28xf32>
    %450 = vector.extract_strided_slice %411 {offsets = [16, 0], sizes = [16, 112], strides = [1, 1]} : vector<48x112xf32> to vector<16x112xf32>
    %cst_189 = arith.constant dense<0.000000e+00> : vector<16x112xf32>
    %451 = tpu.matmul %449, %413, %cst_189 {dimension_numbers = #tpu.dot_dimension_numbers<[1], [0], [0], [1], [0, 0, 1, 1], [], []>} : vector<16x28xf32>, vector<28x112xf32>, vector<16x112xf32> -> vector<16x112xf32>
    %452 = arith.addf %450, %451 : vector<16x112xf32>
    %453 = vector.extract_strided_slice %452 {offsets = [0, 0], sizes = [16, 28], strides = [1, 1]} : vector<16x112xf32> to vector<16x28xf32>
    %cst_190 = arith.constant 5.000000e-01 : f32
    %454 = vector.broadcast %cst_190 : f32 to vector<16x28xf32>
    %455 = arith.mulf %454, %453 : vector<16x28xf32>
    %456 = math.tanh %455 : vector<16x28xf32>
    %cst_191 = arith.constant 5.000000e-01 : f32
    %457 = vector.broadcast %cst_191 : f32 to vector<16x28xf32>
    %458 = arith.mulf %457, %456 : vector<16x28xf32>
    %cst_192 = arith.constant 5.000000e-01 : f32
    %459 = vector.broadcast %cst_192 : f32 to vector<16x28xf32>
    %460 = arith.addf %458, %459 : vector<16x28xf32>
    %461 = vector.extract_strided_slice %452 {offsets = [0, 28], sizes = [16, 28], strides = [1, 1]} : vector<16x112xf32> to vector<16x28xf32>
    %cst_193 = arith.constant 5.000000e-01 : f32
    %462 = vector.broadcast %cst_193 : f32 to vector<16x28xf32>
    %463 = arith.mulf %462, %461 : vector<16x28xf32>
    %464 = math.tanh %463 : vector<16x28xf32>
    %cst_194 = arith.constant 5.000000e-01 : f32
    %465 = vector.broadcast %cst_194 : f32 to vector<16x28xf32>
    %466 = arith.mulf %465, %464 : vector<16x28xf32>
    %cst_195 = arith.constant 5.000000e-01 : f32
    %467 = vector.broadcast %cst_195 : f32 to vector<16x28xf32>
    %468 = arith.addf %466, %467 : vector<16x28xf32>
    %469 = vector.extract_strided_slice %452 {offsets = [0, 56], sizes = [16, 28], strides = [1, 1]} : vector<16x112xf32> to vector<16x28xf32>
    %470 = math.tanh %469 : vector<16x28xf32>
    %471 = vector.extract_strided_slice %452 {offsets = [0, 84], sizes = [16, 28], strides = [1, 1]} : vector<16x112xf32> to vector<16x28xf32>
    %cst_196 = arith.constant 5.000000e-01 : f32
    %472 = vector.broadcast %cst_196 : f32 to vector<16x28xf32>
    %473 = arith.mulf %472, %471 : vector<16x28xf32>
    %474 = math.tanh %473 : vector<16x28xf32>
    %cst_197 = arith.constant 5.000000e-01 : f32
    %475 = vector.broadcast %cst_197 : f32 to vector<16x28xf32>
    %476 = arith.mulf %475, %474 : vector<16x28xf32>
    %cst_198 = arith.constant 5.000000e-01 : f32
    %477 = vector.broadcast %cst_198 : f32 to vector<16x28xf32>
    %478 = arith.addf %476, %477 : vector<16x28xf32>
    %479 = arith.mulf %468, %447 : vector<16x28xf32>
    %480 = arith.mulf %460, %470 : vector<16x28xf32>
    %481 = arith.addf %479, %480 : vector<16x28xf32>
    %482 = math.tanh %481 : vector<16x28xf32>
    %483 = arith.mulf %478, %482 : vector<16x28xf32>
    %484 = vector.extract_strided_slice %411 {offsets = [0, 0], sizes = [16, 112], strides = [1, 1]} : vector<48x112xf32> to vector<16x112xf32>
    %cst_199 = arith.constant dense<0.000000e+00> : vector<16x112xf32>
    %485 = tpu.matmul %483, %413, %cst_199 {dimension_numbers = #tpu.dot_dimension_numbers<[1], [0], [0], [1], [0, 0, 1, 1], [], []>} : vector<16x28xf32>, vector<28x112xf32>, vector<16x112xf32> -> vector<16x112xf32>
    %486 = arith.addf %484, %485 : vector<16x112xf32>
    %487 = vector.extract_strided_slice %486 {offsets = [0, 0], sizes = [16, 28], strides = [1, 1]} : vector<16x112xf32> to vector<16x28xf32>
    %cst_200 = arith.constant 5.000000e-01 : f32
    %488 = vector.broadcast %cst_200 : f32 to vector<16x28xf32>
    %489 = arith.mulf %488, %487 : vector<16x28xf32>
    %490 = math.tanh %489 : vector<16x28xf32>
    %cst_201 = arith.constant 5.000000e-01 : f32
    %491 = vector.broadcast %cst_201 : f32 to vector<16x28xf32>
    %492 = arith.mulf %491, %490 : vector<16x28xf32>
    %cst_202 = arith.constant 5.000000e-01 : f32
    %493 = vector.broadcast %cst_202 : f32 to vector<16x28xf32>
    %494 = arith.addf %492, %493 : vector<16x28xf32>
    %495 = vector.extract_strided_slice %486 {offsets = [0, 28], sizes = [16, 28], strides = [1, 1]} : vector<16x112xf32> to vector<16x28xf32>
    %cst_203 = arith.constant 5.000000e-01 : f32
    %496 = vector.broadcast %cst_203 : f32 to vector<16x28xf32>
    %497 = arith.mulf %496, %495 : vector<16x28xf32>
    %498 = math.tanh %497 : vector<16x28xf32>
    %cst_204 = arith.constant 5.000000e-01 : f32
    %499 = vector.broadcast %cst_204 : f32 to vector<16x28xf32>
    %500 = arith.mulf %499, %498 : vector<16x28xf32>
    %cst_205 = arith.constant 5.000000e-01 : f32
    %501 = vector.broadcast %cst_205 : f32 to vector<16x28xf32>
    %502 = arith.addf %500, %501 : vector<16x28xf32>
    %503 = vector.extract_strided_slice %486 {offsets = [0, 56], sizes = [16, 28], strides = [1, 1]} : vector<16x112xf32> to vector<16x28xf32>
    %504 = math.tanh %503 : vector<16x28xf32>
    %505 = vector.extract_strided_slice %486 {offsets = [0, 84], sizes = [16, 28], strides = [1, 1]} : vector<16x112xf32> to vector<16x28xf32>
    %cst_206 = arith.constant 5.000000e-01 : f32
    %506 = vector.broadcast %cst_206 : f32 to vector<16x28xf32>
    %507 = arith.mulf %506, %505 : vector<16x28xf32>
    %508 = math.tanh %507 : vector<16x28xf32>
    %cst_207 = arith.constant 5.000000e-01 : f32
    %509 = vector.broadcast %cst_207 : f32 to vector<16x28xf32>
    %510 = arith.mulf %509, %508 : vector<16x28xf32>
    %cst_208 = arith.constant 5.000000e-01 : f32
    %511 = vector.broadcast %cst_208 : f32 to vector<16x28xf32>
    %512 = arith.addf %510, %511 : vector<16x28xf32>
    %513 = arith.mulf %502, %481 : vector<16x28xf32>
    %514 = arith.mulf %494, %504 : vector<16x28xf32>
    %515 = arith.addf %513, %514 : vector<16x28xf32>
    %516 = math.tanh %515 : vector<16x28xf32>
    %517 = arith.mulf %512, %516 : vector<16x28xf32>
    %c0_209 = arith.constant 0 : index
    %c0_210 = arith.constant 0 : index
    %518 = vector.load %arg12[%c0_209, %c0_210] : memref<1x28xf32, #tpu.memory_space<vmem>>, vector<1x28xf32>
    %c0_211 = arith.constant 0 : index
    %c0_212 = arith.constant 0 : index
    %519 = vector.load %arg13[%c0_211, %c0_212] : memref<1x28xf32, #tpu.memory_space<vmem>>, vector<1x28xf32>
    %c0_213 = arith.constant 0 : index
    %c0_214 = arith.constant 0 : index
    %520 = vector.load %arg14[%c0_213, %c0_214] : memref<1x1xf32, #tpu.memory_space<vmem>>, vector<1x1xf32>
    %521 = vector.broadcast %518 : vector<1x28xf32> to vector<16x28xf32>
    %522 = arith.mulf %336, %521 : vector<16x28xf32>
    %cst_215 = arith.constant dense<0.000000e+00> : vector<16xf32>
    %523 = vector.multi_reduction <add>, %522, %cst_215 [1] : vector<16x28xf32> to vector<16xf32>
    %524 = vector.shape_cast %523 : vector<16xf32> to vector<16x1xf32>
    %525 = vector.broadcast %519 : vector<1x28xf32> to vector<16x28xf32>
    %526 = arith.mulf %517, %525 : vector<16x28xf32>
    %cst_216 = arith.constant dense<0.000000e+00> : vector<16xf32>
    %527 = vector.multi_reduction <add>, %526, %cst_216 [1] : vector<16x28xf32> to vector<16xf32>
    %528 = vector.shape_cast %527 : vector<16xf32> to vector<16x1xf32>
    %529 = arith.addf %524, %528 : vector<16x1xf32>
    %530 = vector.broadcast %520 : vector<1x1xf32> to vector<16x1xf32>
    %531 = arith.addf %529, %530 : vector<16x1xf32>
    %532 = vector.broadcast %518 : vector<1x28xf32> to vector<16x28xf32>
    %533 = arith.mulf %370, %532 : vector<16x28xf32>
    %cst_217 = arith.constant dense<0.000000e+00> : vector<16xf32>
    %534 = vector.multi_reduction <add>, %533, %cst_217 [1] : vector<16x28xf32> to vector<16xf32>
    %535 = vector.shape_cast %534 : vector<16xf32> to vector<16x1xf32>
    %536 = vector.broadcast %519 : vector<1x28xf32> to vector<16x28xf32>
    %537 = arith.mulf %483, %536 : vector<16x28xf32>
    %cst_218 = arith.constant dense<0.000000e+00> : vector<16xf32>
    %538 = vector.multi_reduction <add>, %537, %cst_218 [1] : vector<16x28xf32> to vector<16xf32>
    %539 = vector.shape_cast %538 : vector<16xf32> to vector<16x1xf32>
    %540 = arith.addf %535, %539 : vector<16x1xf32>
    %541 = vector.broadcast %520 : vector<1x1xf32> to vector<16x1xf32>
    %542 = arith.addf %540, %541 : vector<16x1xf32>
    %543 = vector.broadcast %518 : vector<1x28xf32> to vector<16x28xf32>
    %544 = arith.mulf %404, %543 : vector<16x28xf32>
    %cst_219 = arith.constant dense<0.000000e+00> : vector<16xf32>
    %545 = vector.multi_reduction <add>, %544, %cst_219 [1] : vector<16x28xf32> to vector<16xf32>
    %546 = vector.shape_cast %545 : vector<16xf32> to vector<16x1xf32>
    %547 = vector.broadcast %519 : vector<1x28xf32> to vector<16x28xf32>
    %548 = arith.mulf %449, %547 : vector<16x28xf32>
    %cst_220 = arith.constant dense<0.000000e+00> : vector<16xf32>
    %549 = vector.multi_reduction <add>, %548, %cst_220 [1] : vector<16x28xf32> to vector<16xf32>
    %550 = vector.shape_cast %549 : vector<16xf32> to vector<16x1xf32>
    %551 = arith.addf %546, %550 : vector<16x1xf32>
    %552 = vector.broadcast %520 : vector<1x1xf32> to vector<16x1xf32>
    %553 = arith.addf %551, %552 : vector<16x1xf32>
    %554 = tpu.concatenate %531, %542, %553 in 1 : vector<16x1xf32>, vector<16x1xf32>, vector<16x1xf32> -> vector<16x3xf32>
    %cst_221 = arith.constant dense<0xFF800000> : vector<16xf32>
    %555 = vector.multi_reduction <maximumf>, %554, %cst_221 [1] : vector<16x3xf32> to vector<16xf32>
    %556 = vector.shape_cast %555 : vector<16xf32> to vector<16x1xf32>
    %557 = vector.broadcast %556 : vector<16x1xf32> to vector<16x3xf32>
    %558 = arith.subf %554, %557 : vector<16x3xf32>
    %559 = math.exp %558 : vector<16x3xf32>
    %cst_222 = arith.constant dense<0.000000e+00> : vector<16xf32>
    %560 = vector.multi_reduction <add>, %559, %cst_222 [1] : vector<16x3xf32> to vector<16xf32>
    %561 = vector.shape_cast %560 : vector<16xf32> to vector<16x1xf32>
    %562 = tpu.reciprocal %561 {approx = true} : vector<16x1xf32> -> vector<16x1xf32>
    %563 = vector.broadcast %562 : vector<16x1xf32> to vector<16x3xf32>
    %564 = arith.mulf %559, %563 : vector<16x3xf32>
    %565 = vector.extract_strided_slice %564 {offsets = [0, 0], sizes = [16, 1], strides = [1, 1]} : vector<16x3xf32> to vector<16x1xf32>
    %566 = vector.broadcast %565 : vector<16x1xf32> to vector<16x8xf32>
    %567 = arith.mulf %566, %100 : vector<16x8xf32>
    %568 = vector.extract_strided_slice %564 {offsets = [0, 1], sizes = [16, 1], strides = [1, 1]} : vector<16x3xf32> to vector<16x1xf32>
    %569 = vector.broadcast %568 : vector<16x1xf32> to vector<16x8xf32>
    %570 = arith.mulf %569, %195 : vector<16x8xf32>
    %571 = arith.addf %567, %570 : vector<16x8xf32>
    %572 = vector.extract_strided_slice %564 {offsets = [0, 2], sizes = [16, 1], strides = [1, 1]} : vector<16x3xf32> to vector<16x1xf32>
    %573 = vector.broadcast %572 : vector<16x1xf32> to vector<16x8xf32>
    %574 = arith.mulf %573, %290 : vector<16x8xf32>
    %575 = arith.addf %571, %574 : vector<16x8xf32>
    %c0_223 = arith.constant 0 : index
    %c0_224 = arith.constant 0 : index
    %c0_225 = arith.constant 0 : index
    %576 = vector.load %arg15[%c0_223, %c0_224, %c0_225] : memref<1x16x8xf32, #tpu.memory_space<vmem>>, vector<1x16x8xf32>
    %577 = vector.shape_cast %576 : vector<1x16x8xf32> to vector<16x8xf32>
    %578 = vector.shape_cast %575 : vector<16x8xf32> to vector<1x16x8xf32>
    tpu.vector_store %arg15[%c0_223, %c0_224, %c0_225], %578 {strides = array<i32>} : memref<1x16x8xf32, #tpu.memory_space<vmem>>, vector<1x16x8xf32>,
    return
  }
  func.func @transform_0(%arg0: i32) -> (i32, i32, i32) {
    %c0_i32 = arith.constant 0 : i32
    %c0_i32_0 = arith.constant 0 : i32
    %c0_i32_1 = arith.constant 0 : i32
    return %arg0, %c0_i32, %c0_i32_0 : i32, i32, i32
  }
  func.func @transform_1(%arg0: i32) -> (i32, i32, i32) {
    %c0_i32 = arith.constant 0 : i32
    %c0_i32_0 = arith.constant 0 : i32
    %c0_i32_1 = arith.constant 0 : i32
    return %arg0, %c0_i32, %c0_i32_0 : i32, i32, i32
  }
  func.func @transform_2(%arg0: i32) -> (i32, i32, i32) {
    %c0_i32 = arith.constant 0 : i32
    %c0_i32_0 = arith.constant 0 : i32
    %c0_i32_1 = arith.constant 0 : i32
    return %arg0, %c0_i32, %c0_i32_0 : i32, i32, i32
  }
  func.func @transform_3(%arg0: i32) -> (i32, i32, i32) {
    %c0_i32 = arith.constant 0 : i32
    %c0_i32_0 = arith.constant 0 : i32
    %c0_i32_1 = arith.constant 0 : i32
    %c0_i32_2 = arith.constant 0 : i32
    return %c0_i32, %c0_i32_0, %c0_i32_1 : i32, i32, i32
  }
  func.func @transform_4(%arg0: i32) -> (i32, i32, i32) {
    %c0_i32 = arith.constant 0 : i32
    %c0_i32_0 = arith.constant 0 : i32
    %c0_i32_1 = arith.constant 0 : i32
    %c0_i32_2 = arith.constant 0 : i32
    return %c0_i32, %c0_i32_0, %c0_i32_1 : i32, i32, i32
  }
  func.func @transform_5(%arg0: i32) -> (i32, i32, i32) {
    %c0_i32 = arith.constant 0 : i32
    %c0_i32_0 = arith.constant 0 : i32
    %c0_i32_1 = arith.constant 0 : i32
    %c0_i32_2 = arith.constant 0 : i32
    return %c0_i32, %c0_i32_0, %c0_i32_1 : i32, i32, i32
  }
  func.func @transform_6(%arg0: i32) -> (i32, i32, i32) {
    %c0_i32 = arith.constant 0 : i32
    %c0_i32_0 = arith.constant 0 : i32
    %c0_i32_1 = arith.constant 0 : i32
    %c0_i32_2 = arith.constant 0 : i32
    return %c0_i32, %c0_i32_0, %c0_i32_1 : i32, i32, i32
  }
  func.func @transform_7(%arg0: i32) -> (i32, i32, i32) {
    %c0_i32 = arith.constant 0 : i32
    %c0_i32_0 = arith.constant 0 : i32
    %c0_i32_1 = arith.constant 0 : i32
    %c0_i32_2 = arith.constant 0 : i32
    return %c0_i32, %c0_i32_0, %c0_i32_1 : i32, i32, i32
  }
  func.func @transform_8(%arg0: i32) -> (i32, i32, i32) {
    %c0_i32 = arith.constant 0 : i32
    %c0_i32_0 = arith.constant 0 : i32
    %c0_i32_1 = arith.constant 0 : i32
    %c0_i32_2 = arith.constant 0 : i32
    return %c0_i32, %c0_i32_0, %c0_i32_1 : i32, i32, i32
  }
  func.func @transform_9(%arg0: i32) -> (i32, i32, i32) {
    %c0_i32 = arith.constant 0 : i32
    %c0_i32_0 = arith.constant 0 : i32
    %c0_i32_1 = arith.constant 0 : i32
    %c0_i32_2 = arith.constant 0 : i32
    return %c0_i32, %c0_i32_0, %c0_i32_1 : i32, i32, i32
  }
  func.func @transform_10(%arg0: i32) -> (i32, i32, i32) {
    %c0_i32 = arith.constant 0 : i32
    %c0_i32_0 = arith.constant 0 : i32
    %c0_i32_1 = arith.constant 0 : i32
    %c0_i32_2 = arith.constant 0 : i32
    return %c0_i32, %c0_i32_0, %c0_i32_1 : i32, i32, i32
  }
  func.func @transform_11(%arg0: i32) -> (i32, i32) {
    %c0_i32 = arith.constant 0 : i32
    %c0_i32_0 = arith.constant 0 : i32
    %c0_i32_1 = arith.constant 0 : i32
    return %c0_i32, %c0_i32_0 : i32, i32
  }
  func.func @transform_12(%arg0: i32) -> (i32, i32) {
    %c0_i32 = arith.constant 0 : i32
    %c0_i32_0 = arith.constant 0 : i32
    %c0_i32_1 = arith.constant 0 : i32
    return %c0_i32, %c0_i32_0 : i32, i32
  }
  func.func @transform_13(%arg0: i32) -> (i32, i32) {
    %c0_i32 = arith.constant 0 : i32
    %c0_i32_0 = arith.constant 0 : i32
    %c0_i32_1 = arith.constant 0 : i32
    return %c0_i32, %c0_i32_0 : i32, i32
  }
  func.func @transform_14(%arg0: i32) -> (i32, i32, i32) {
    %c0_i32 = arith.constant 0 : i32
    %c0_i32_0 = arith.constant 0 : i32
    %c0_i32_1 = arith.constant 0 : i32
    return %arg0, %c0_i32, %c0_i32_0 : i32, i32, i32
  }
}

</mosaic_0001>

<llo_original>
// kernel: tpu_custom_call.1
$region0: #{tpu_custom_call.1}
  #allocation0 [shape = 'u32[]', space=smem, size = 0x4, offset = 0x4, fixed_abs, tag = 'smem constant byte address 0x4 - core index']
  #allocation1 [shape = 'u32[144,128]{1,0:T(1,128)}', space=vmem, size = 0x12000, scoped, tag = 'internal scratch']
  #allocation2 [shape = 'f32[1,1]{1,0:T(1,128)S(1)}', space=vmem, size = 0x200, scoped, tag = 'scoped memory for tpu_custom_call.1']
  %s0 = inlined_call_operand.vmem [shape: f32[8,16,4], index: 0, kind: input, shape index: {}]
  %s1 = inlined_call_operand.vmem [shape: f32[8,16,16], index: 1, kind: input, shape index: {}]
  %s2 = inlined_call_operand.vmem [shape: f32[8,16,16], index: 2, kind: input, shape index: {}]
  %s3 = inlined_call_operand.vmem [shape: f32[3,16,4], index: 3, kind: input, shape index: {}]
  %s4 = inlined_call_operand.vmem [shape: f32[3,1,4], index: 4, kind: input, shape index: {}]
  %s5 = inlined_call_operand.vmem [shape: f32[3,4,8], index: 5, kind: input, shape index: {}]
  %s6 = inlined_call_operand.vmem [shape: f32[3,8,4], index: 6, kind: input, shape index: {}]
  %s7 = inlined_call_operand.vmem [shape: f32[3,1,8], index: 7, kind: input, shape index: {}]
  %s8 = inlined_call_operand.vmem [shape: f32[2,8,112], index: 8, kind: input, shape index: {}]
  %s9 = inlined_call_operand.vmem [shape: f32[2,28,112], index: 9, kind: input, shape index: {}]
  %s10 = inlined_call_operand.vmem [shape: f32[2,1,112], index: 10, kind: input, shape index: {}]
  %s11 = inlined_call_operand.vmem [shape: f32[1,28], index: 11, kind: input, shape index: {}]
  %s12 = inlined_call_operand.vmem [shape: f32[1,28], index: 12, kind: input, shape index: {}]
  %s13 = inlined_call_operand.<no memory space> [shape: f32[1,1], index: 13, kind: input, shape index: {}]
  %s14 = inlined_call_operand.vmem [shape: f32[8,16,8], index: 14, kind: output, shape index: {}]
  %s15 = sld [smem:[#allocation0]]
  $region89: #{tpu_custom_call.1} parent=0
    _
  %s17 = ssub.s32 1, %s15
  %s18 = scalar_select 0, %s17, %s15
  %v19 = vstv %s13
  %20 = vst [vmem:[#allocation2] sm:$0x1] %v19
  loop: start=0, step=1, limit=10
  $region2: #{tpu_custom_call.1} parent=0 // loop_pre_header
    _
  $region3: #{tpu_custom_call.1} parent=0 // loop_header
    %s22 = sphi 0, %s26
    %p23 = scmp.ge.s32.totalorder %s22, 10
    %s32 = sphi 0, %s34
    %s35 = sphi 0, %s32
    %s36 = sphi 0, %s35
    %s52 = sphi 0, %s36
    %s58 = sphi 0, %s60
    %s61 = sphi 0, %s58
    %s62 = sphi 0, %s61
    %s78 = sphi 0, %s62
    %s84 = sphi 0, %s86
    %s87 = sphi 0, %s84
    %s88 = sphi 0, %s87
    %s104 = sphi 0, %s88
    %s108 = sphi 0, %s108
    %s110 = sphi 0, %s108
    %s111 = sphi 0, %s110
    %s125 = sphi 0, %s111
    %s129 = sphi 0, %s129
    %s131 = sphi 0, %s129
    %s132 = sphi 0, %s131
    %s146 = sphi 0, %s132
    %s150 = sphi 0, %s150
    %s152 = sphi 0, %s150
    %s153 = sphi 0, %s152
    %s167 = sphi 0, %s153
    %s171 = sphi 0, %s171
    %s173 = sphi 0, %s171
    %s174 = sphi 0, %s173
    %s188 = sphi 0, %s174
    %s192 = sphi 0, %s192
    %s194 = sphi 0, %s192
    %s195 = sphi 0, %s194
    %s209 = sphi 0, %s195
    %s213 = sphi 0, %s213
    %s215 = sphi 0, %s213
    %s216 = sphi 0, %s215
    %s230 = sphi 0, %s216
    %s234 = sphi 0, %s234
    %s236 = sphi 0, %s234
    %s237 = sphi 0, %s236
    %s251 = sphi 0, %s237
    %s255 = sphi 0, %s255
    %s257 = sphi 0, %s255
    %s258 = sphi 0, %s257
    %s272 = sphi 0, %s258
    %s276 = sphi 0, %s276
    %s278 = sphi 0, %s276
    %s279 = sphi 0, %s278
    %s293 = sphi 0, %s279
    %s297 = sphi 0, %s297
    %s299 = sphi 0, %s297
    %s300 = sphi 0, %s299
    %s314 = sphi 0, %s300
    %s318 = sphi 0, %s318
    %s320 = sphi 0, %s318
    %s321 = sphi 0, %s320
    %s335 = sphi 0, %s321
    %s341 = sphi 0, %s343
    %s344 = sphi 0, %s341
    %s345 = sphi 0, %s344
    %s361 = sphi 0, %s345
  $region4: #{tpu_custom_call.1} parent=0 // loop_header_branch
    %25 = sbr.rel (%p23) target = $region8
  $region5: #{tpu_custom_call.1} parent=0 // loop_body
    %s27 = ssub.s32 %s22, 1
    %s28 = ssub.s32 %s22, 2
    %s29 = sadd.s32 %s22, 1
    %s30 = ssub.s32 %s22, %s29
    %p31 = scmp.eq.s32.totalorder %s30, 0
    %s33 = sadd.s32 %s32, 1
    %s34 = scalar_select %p31, %s32, %s33
    %p37 = pneg %p31
    %p38 = scmp.eq.s32.totalorder %s22, 7
    %p39 = por %p37, %p38
    %p40 = scmp.ne.s32.totalorder %s32, %s35
    %p41 = scmp.eq.s32.totalorder %s22, 0
    %p42 = por %p40, %p41
    %p43 = scmp.ne.s32.totalorder %s32, %s35
    %p44 = scmp.eq.s32.totalorder %s27, 7
    %p45 = por %p43, %p44
    %p46 = scmp.ne.s32.totalorder %s35, %s36
    %p47 = scmp.eq.s32.totalorder %s27, 0
    %p48 = por %p46, %p47
    %p49 = scmp.ne.s32.totalorder %s35, %s36
    %p50 = scmp.eq.s32.totalorder %s28, 7
    %p51 = por %p49, %p50
    %p53 = scmp.ne.s32.totalorder %s36, %s52
    %p54 = scmp.eq.s32.totalorder %s28, 0
    %p55 = por %p53, %p54
    %s56 = ssub.s32 %s22, %s29
    %p57 = scmp.eq.s32.totalorder %s56, 0
    %s59 = sadd.s32 %s58, 1
    %s60 = scalar_select %p57, %s58, %s59
    %p63 = pneg %p57
    %p64 = scmp.eq.s32.totalorder %s22, 7
    %p65 = por %p63, %p64
    %p66 = scmp.ne.s32.totalorder %s58, %s61
    %p67 = scmp.eq.s32.totalorder %s22, 0
    %p68 = por %p66, %p67
    %p69 = scmp.ne.s32.totalorder %s58, %s61
    %p70 = scmp.eq.s32.totalorder %s27, 7
    %p71 = por %p69, %p70
    %p72 = scmp.ne.s32.totalorder %s61, %s62
    %p73 = scmp.eq.s32.totalorder %s27, 0
    %p74 = por %p72, %p73
    %p75 = scmp.ne.s32.totalorder %s61, %s62
    %p76 = scmp.eq.s32.totalorder %s28, 7
    %p77 = por %p75, %p76
    %p79 = scmp.ne.s32.totalorder %s62, %s78
    %p80 = scmp.eq.s32.totalorder %s28, 0
    %p81 = por %p79, %p80
    %s82 = ssub.s32 %s22, %s29
    %p83 = scmp.eq.s32.totalorder %s82, 0
    %s85 = sadd.s32 %s84, 1
    %s86 = scalar_select %p83, %s84, %s85
    %p89 = pneg %p83
    %p90 = scmp.eq.s32.totalorder %s22, 7
    %p91 = por %p89, %p90
    %p92 = scmp.ne.s32.totalorder %s84, %s87
    %p93 = scmp.eq.s32.totalorder %s22, 0
    %p94 = por %p92, %p93
    %p95 = scmp.ne.s32.totalorder %s84, %s87
    %p96 = scmp.eq.s32.totalorder %s27, 7
    %p97 = por %p95, %p96
    %p98 = scmp.ne.s32.totalorder %s87, %s88
    %p99 = scmp.eq.s32.totalorder %s27, 0
    %p100 = por %p98, %p99
    %p101 = scmp.ne.s32.totalorder %s87, %s88
    %p102 = scmp.eq.s32.totalorder %s28, 7
    %p103 = por %p101, %p102
    %p105 = scmp.ne.s32.totalorder %s88, %s104
    %p106 = scmp.eq.s32.totalorder %s28, 0
    %p107 = por %p105, %p106
    %s109 = sadd.s32 %s108, 1
    %p112 = scmp.eq.s32.totalorder %s22, 7
    %p113 = scmp.ne.s32.totalorder %s108, %s110
    %p114 = scmp.eq.s32.totalorder %s22, 0
    %p115 = por %p113, %p114
    %p116 = scmp.ne.s32.totalorder %s108, %s110
    %p117 = scmp.eq.s32.totalorder %s27, 7
    %p118 = por %p116, %p117
    %p119 = scmp.ne.s32.totalorder %s110, %s111
    %p120 = scmp.eq.s32.totalorder %s27, 0
    %p121 = por %p119, %p120
    %p122 = scmp.ne.s32.totalorder %s110, %s111
    %p123 = scmp.eq.s32.totalorder %s28, 7
    %p124 = por %p122, %p123
    %p126 = scmp.ne.s32.totalorder %s111, %s125
    %p127 = scmp.eq.s32.totalorder %s28, 0
    %p128 = por %p126, %p127
    %s130 = sadd.s32 %s129, 1
    %p133 = scmp.eq.s32.totalorder %s22, 7
    %p134 = scmp.ne.s32.totalorder %s129, %s131
    %p135 = scmp.eq.s32.totalorder %s22, 0
    %p136 = por %p134, %p135
    %p137 = scmp.ne.s32.totalorder %s129, %s131
    %p138 = scmp.eq.s32.totalorder %s27, 7
    %p139 = por %p137, %p138
    %p140 = scmp.ne.s32.totalorder %s131, %s132
    %p141 = scmp.eq.s32.totalorder %s27, 0
    %p142 = por %p140, %p141
    %p143 = scmp.ne.s32.totalorder %s131, %s132
    %p144 = scmp.eq.s32.totalorder %s28, 7
    %p145 = por %p143, %p144
    %p147 = scmp.ne.s32.totalorder %s132, %s146
    %p148 = scmp.eq.s32.totalorder %s28, 0
    %p149 = por %p147, %p148
    %s151 = sadd.s32 %s150, 1
    %p154 = scmp.eq.s32.totalorder %s22, 7
    %p155 = scmp.ne.s32.totalorder %s150, %s152
    %p156 = scmp.eq.s32.totalorder %s22, 0
    %p157 = por %p155, %p156
    %p158 = scmp.ne.s32.totalorder %s150, %s152
    %p159 = scmp.eq.s32.totalorder %s27, 7
    %p160 = por %p158, %p159
    %p161 = scmp.ne.s32.totalorder %s152, %s153
    %p162 = scmp.eq.s32.totalorder %s27, 0
    %p163 = por %p161, %p162
    %p164 = scmp.ne.s32.totalorder %s152, %s153
    %p165 = scmp.eq.s32.totalorder %s28, 7
    %p166 = por %p164, %p165
    %p168 = scmp.ne.s32.totalorder %s153, %s167
    %p169 = scmp.eq.s32.totalorder %s28, 0
    %p170 = por %p168, %p169
    %s172 = sadd.s32 %s171, 1
    %p175 = scmp.eq.s32.totalorder %s22, 7
    %p176 = scmp.ne.s32.totalorder %s171, %s173
    %p177 = scmp.eq.s32.totalorder %s22, 0
    %p178 = por %p176, %p177
    %p179 = scmp.ne.s32.totalorder %s171, %s173
    %p180 = scmp.eq.s32.totalorder %s27, 7
    %p181 = por %p179, %p180
    %p182 = scmp.ne.s32.totalorder %s173, %s174
    %p183 = scmp.eq.s32.totalorder %s27, 0
    %p184 = por %p182, %p183
    %p185 = scmp.ne.s32.totalorder %s173, %s174
    %p186 = scmp.eq.s32.totalorder %s28, 7
    %p187 = por %p185, %p186
    %p189 = scmp.ne.s32.totalorder %s174, %s188
    %p190 = scmp.eq.s32.totalorder %s28, 0
    %p191 = por %p189, %p190
    %s193 = sadd.s32 %s192, 1
    %p196 = scmp.eq.s32.totalorder %s22, 7
    %p197 = scmp.ne.s32.totalorder %s192, %s194
    %p198 = scmp.eq.s32.totalorder %s22, 0
    %p199 = por %p197, %p198
    %p200 = scmp.ne.s32.totalorder %s192, %s194
    %p201 = scmp.eq.s32.totalorder %s27, 7
    %p202 = por %p200, %p201
    %p203 = scmp.ne.s32.totalorder %s194, %s195
    %p204 = scmp.eq.s32.totalorder %s27, 0
    %p205 = por %p203, %p204
    %p206 = scmp.ne.s32.totalorder %s194, %s195
    %p207 = scmp.eq.s32.totalorder %s28, 7
    %p208 = por %p206, %p207
    %p210 = scmp.ne.s32.totalorder %s195, %s209
    %p211 = scmp.eq.s32.totalorder %s28, 0
    %p212 = por %p210, %p211
    %s214 = sadd.s32 %s213, 1
    %p217 = scmp.eq.s32.totalorder %s22, 7
    %p218 = scmp.ne.s32.totalorder %s213, %s215
    %p219 = scmp.eq.s32.totalorder %s22, 0
    %p220 = por %p218, %p219
    %p221 = scmp.ne.s32.totalorder %s213, %s215
    %p222 = scmp.eq.s32.totalorder %s27, 7
    %p223 = por %p221, %p222
    %p224 = scmp.ne.s32.totalorder %s215, %s216
    %p225 = scmp.eq.s32.totalorder %s27, 0
    %p226 = por %p224, %p225
    %p227 = scmp.ne.s32.totalorder %s215, %s216
    %p228 = scmp.eq.s32.totalorder %s28, 7
    %p229 = por %p227, %p228
    %p231 = scmp.ne.s32.totalorder %s216, %s230
    %p232 = scmp.eq.s32.totalorder %s28, 0
    %p233 = por %p231, %p232
    %s235 = sadd.s32 %s234, 1
    %p238 = scmp.eq.s32.totalorder %s22, 7
    %p239 = scmp.ne.s32.totalorder %s234, %s236
    %p240 = scmp.eq.s32.totalorder %s22, 0
    %p241 = por %p239, %p240
    %p242 = scmp.ne.s32.totalorder %s234, %s236
    %p243 = scmp.eq.s32.totalorder %s27, 7
    %p244 = por %p242, %p243
    %p245 = scmp.ne.s32.totalorder %s236, %s237
    %p246 = scmp.eq.s32.totalorder %s27, 0
    %p247 = por %p245, %p246
    %p248 = scmp.ne.s32.totalorder %s236, %s237
    %p249 = scmp.eq.s32.totalorder %s28, 7
    %p250 = por %p248, %p249
    %p252 = scmp.ne.s32.totalorder %s237, %s251
    %p253 = scmp.eq.s32.totalorder %s28, 0
    %p254 = por %p252, %p253
    %s256 = sadd.s32 %s255, 1
    %p259 = scmp.eq.s32.totalorder %s22, 7
    %p260 = scmp.ne.s32.totalorder %s255, %s257
    %p261 = scmp.eq.s32.totalorder %s22, 0
    %p262 = por %p260, %p261
    %p263 = scmp.ne.s32.totalorder %s255, %s257
    %p264 = scmp.eq.s32.totalorder %s27, 7
    %p265 = por %p263, %p264
    %p266 = scmp.ne.s32.totalorder %s257, %s258
    %p267 = scmp.eq.s32.totalorder %s27, 0
    %p268 = por %p266, %p267
    %p269 = scmp.ne.s32.totalorder %s257, %s258
    %p270 = scmp.eq.s32.totalorder %s28, 7
    %p271 = por %p269, %p270
    %p273 = scmp.ne.s32.totalorder %s258, %s272
    %p274 = scmp.eq.s32.totalorder %s28, 0
    %p275 = por %p273, %p274
    %s277 = sadd.s32 %s276, 1
    %p280 = scmp.eq.s32.totalorder %s22, 7
    %p281 = scmp.ne.s32.totalorder %s276, %s278
    %p282 = scmp.eq.s32.totalorder %s22, 0
    %p283 = por %p281, %p282
    %p284 = scmp.ne.s32.totalorder %s276, %s278
    %p285 = scmp.eq.s32.totalorder %s27, 7
    %p286 = por %p284, %p285
    %p287 = scmp.ne.s32.totalorder %s278, %s279
    %p288 = scmp.eq.s32.totalorder %s27, 0
    %p289 = por %p287, %p288
    %p290 = scmp.ne.s32.totalorder %s278, %s279
    %p291 = scmp.eq.s32.totalorder %s28, 7
    %p292 = por %p290, %p291
    %p294 = scmp.ne.s32.totalorder %s279, %s293
    %p295 = scmp.eq.s32.totalorder %s28, 0
    %p296 = por %p294, %p295
    %s298 = sadd.s32 %s297, 1
    %p301 = scmp.eq.s32.totalorder %s22, 7
    %p302 = scmp.ne.s32.totalorder %s297, %s299
    %p303 = scmp.eq.s32.totalorder %s22, 0
    %p304 = por %p302, %p303
    %p305 = scmp.ne.s32.totalorder %s297, %s299
    %p306 = scmp.eq.s32.totalorder %s27, 7
    %p307 = por %p305, %p306
    %p308 = scmp.ne.s32.totalorder %s299, %s300
    %p309 = scmp.eq.s32.totalorder %s27, 0
    %p310 = por %p308, %p309
    %p311 = scmp.ne.s32.totalorder %s299, %s300
    %p312 = scmp.eq.s32.totalorder %s28, 7
    %p313 = por %p311, %p312
    %p315 = scmp.ne.s32.totalorder %s300, %s314
    %p316 = scmp.eq.s32.totalorder %s28, 0
    %p317 = por %p315, %p316
    %s319 = sadd.s32 %s318, 1
    %p322 = scmp.eq.s32.totalorder %s22, 7
    %p323 = scmp.ne.s32.totalorder %s318, %s320
    %p324 = scmp.eq.s32.totalorder %s22, 0
    %p325 = por %p323, %p324
    %p326 = scmp.ne.s32.totalorder %s318, %s320
    %p327 = scmp.eq.s32.totalorder %s27, 7
    %p328 = por %p326, %p327
    %p329 = scmp.ne.s32.totalorder %s320, %s321
    %p330 = scmp.eq.s32.totalorder %s27, 0
    %p331 = por %p329, %p330
    %p332 = scmp.ne.s32.totalorder %s320, %s321
    %p333 = scmp.eq.s32.totalorder %s28, 7
    %p334 = por %p332, %p333
    %p336 = scmp.ne.s32.totalorder %s321, %s335
    %p337 = scmp.eq.s32.totalorder %s28, 0
    %p338 = por %p336, %p337
    %s339 = ssub.s32 %s22, %s29
    %p340 = scmp.eq.s32.totalorder %s339, 0
    %s342 = sadd.s32 %s341, 1
    %s343 = scalar_select %p340, %s341, %s342
    %p346 = pneg %p340
    %p347 = scmp.eq.s32.totalorder %s22, 7
    %p348 = por %p346, %p347
    %p349 = scmp.ne.s32.totalorder %s341, %s344
    %p350 = scmp.eq.s32.totalorder %s22, 0
    %p351 = por %p349, %p350
    %p352 = scmp.ne.s32.totalorder %s341, %s344
    %p353 = scmp.eq.s32.totalorder %s27, 7
    %p354 = por %p352, %p353
    %p355 = scmp.ne.s32.totalorder %s344, %s345
    %p356 = scmp.eq.s32.totalorder %s27, 0
    %p357 = por %p355, %p356
    %p358 = scmp.ne.s32.totalorder %s344, %s345
    %p359 = scmp.eq.s32.totalorder %s28, 7
    %p360 = por %p358, %p359
    %p362 = scmp.ne.s32.totalorder %s345, %s361
    %p363 = scmp.eq.s32.totalorder %s28, 0
    %p364 = por %p362, %p363
    %p365 = scmp.le.s32.totalorder 1, %s22
    %p366 = scmp.lt.s32.totalorder %s22, 9
    %p367 = pnand %p365, %p366
    %p368 = pneg %p367
    // Predicated region
    $region9: #{tpu_custom_call.1} parent=5 // pred_check
      _
    $region10: #{tpu_custom_call.1} parent=5 // pred_check_branch
      %370 = sbr.rel (%p367) target = $region12
    $region11: #{tpu_custom_call.1} parent=5 // pred_region
      %s371 = ssub.s32 %s22, 1
      // Predicated region
      $region13: #{tpu_custom_call.1} parent=11 // pred_check
        %p372 = pneg %p121
      $region14: #{tpu_custom_call.1} parent=11 // pred_check_branch
        %374 = sbr.rel (%p372) target = $region16
      $region15: #{tpu_custom_call.1} parent=11 // pred_region
        _
      $region16: #{tpu_custom_call.1} parent=11 // pred_fallthru
        _
      // Predicated region
      $region17: #{tpu_custom_call.1} parent=11 // pred_check
        %p375 = pneg %p142
      $region18: #{tpu_custom_call.1} parent=11 // pred_check_branch
        %377 = sbr.rel (%p375) target = $region20
      $region19: #{tpu_custom_call.1} parent=11 // pred_region
        _
      $region20: #{tpu_custom_call.1} parent=11 // pred_fallthru
        _
      // Predicated region
      $region21: #{tpu_custom_call.1} parent=11 // pred_check
        %p378 = pneg %p163
      $region22: #{tpu_custom_call.1} parent=11 // pred_check_branch
        %380 = sbr.rel (%p378) target = $region24
      $region23: #{tpu_custom_call.1} parent=11 // pred_region
        _
      $region24: #{tpu_custom_call.1} parent=11 // pred_fallthru
        _
      // Predicated region
      $region25: #{tpu_custom_call.1} parent=11 // pred_check
        %p381 = pneg %p184
      $region26: #{tpu_custom_call.1} parent=11 // pred_check_branch
        %383 = sbr.rel (%p381) target = $region28
      $region27: #{tpu_custom_call.1} parent=11 // pred_region
        _
      $region28: #{tpu_custom_call.1} parent=11 // pred_fallthru
        _
      // Predicated region
      $region29: #{tpu_custom_call.1} parent=11 // pred_check
        %p384 = pneg %p205
      $region30: #{tpu_custom_call.1} parent=11 // pred_check_branch
        %386 = sbr.rel (%p384) target = $region32
      $region31: #{tpu_custom_call.1} parent=11 // pred_region
        _
      $region32: #{tpu_custom_call.1} parent=11 // pred_fallthru
        _
      // Predicated region
      $region33: #{tpu_custom_call.1} parent=11 // pred_check
        %p387 = pneg %p226
      $region34: #{tpu_custom_call.1} parent=11 // pred_check_branch
        %389 = sbr.rel (%p387) target = $region36
      $region35: #{tpu_custom_call.1} parent=11 // pred_region
        _
      $region36: #{tpu_custom_call.1} parent=11 // pred_fallthru
        _
      // Predicated region
      $region37: #{tpu_custom_call.1} parent=11 // pred_check
        %p390 = pneg %p247
      $region38: #{tpu_custom_call.1} parent=11 // pred_check_branch
        %392 = sbr.rel (%p390) target = $region40
      $region39: #{tpu_custom_call.1} parent=11 // pred_region
        _
      $region40: #{tpu_custom_call.1} parent=11 // pred_fallthru
        _
      // Predicated region
      $region41: #{tpu_custom_call.1} parent=11 // pred_check
        %p393 = pneg %p268
      $region42: #{tpu_custom_call.1} parent=11 // pred_check_branch
        %395 = sbr.rel (%p393) target = $region44
      $region43: #{tpu_custom_call.1} parent=11 // pred_region
        _
      $region44: #{tpu_custom_call.1} parent=11 // pred_fallthru
        _
      // Predicated region
      $region45: #{tpu_custom_call.1} parent=11 // pred_check
        %p396 = pneg %p289
      $region46: #{tpu_custom_call.1} parent=11 // pred_check_branch
        %398 = sbr.rel (%p396) target = $region48
      $region47: #{tpu_custom_call.1} parent=11 // pred_region
        _
      $region48: #{tpu_custom_call.1} parent=11 // pred_fallthru
        _
      // Predicated region
      $region49: #{tpu_custom_call.1} parent=11 // pred_check
        %p399 = pneg %p310
      $region50: #{tpu_custom_call.1} parent=11 // pred_check_branch
        %401 = sbr.rel (%p399) target = $region52
      $region51: #{tpu_custom_call.1} parent=11 // pred_region
        _
      $region52: #{tpu_custom_call.1} parent=11 // pred_fallthru
        _
      // Predicated region
      $region53: #{tpu_custom_call.1} parent=11 // pred_check
        %p402 = pneg %p331
      $region54: #{tpu_custom_call.1} parent=11 // pred_check_branch
        %404 = sbr.rel (%p402) target = $region56
      $region55: #{tpu_custom_call.1} parent=11 // pred_region
        _
      $region56: #{tpu_custom_call.1} parent=11 // pred_fallthru
        _
    $region12: #{tpu_custom_call.1} parent=5 // pred_fallthru
      _
    %p405 = scmp.lt.s32.totalorder %s22, 8
    // Predicated region
    $region57: #{tpu_custom_call.1} parent=5 // pred_check
      %p406 = pneg %p405
    $region58: #{tpu_custom_call.1} parent=5 // pred_check_branch
      %408 = sbr.rel (%p406) target = $region60
    $region59: #{tpu_custom_call.1} parent=5 // pred_region
      // Predicated region
      $region61: #{tpu_custom_call.1} parent=59 // pred_check
        %p409 = pneg %p42
      $region62: #{tpu_custom_call.1} parent=59 // pred_check_branch
        %411 = sbr.rel (%p409) target = $region64
      $region63: #{tpu_custom_call.1} parent=59 // pred_region
        %p412 = scmp.lt.s32.totalorder %s22, 7
        %s413 = scalar_select %p412, %s22, 7
        %s414 = smul.addr %s413, 2
        %s415 = smul.addr %s414, 8
        %s416 = scalar_lea.vmem %s0, %s415
      $region64: #{tpu_custom_call.1} parent=59 // pred_fallthru
        _
      // Predicated region
      $region65: #{tpu_custom_call.1} parent=59 // pred_check
        %p417 = pneg %p68
      $region66: #{tpu_custom_call.1} parent=59 // pred_check_branch
        %419 = sbr.rel (%p417) target = $region68
      $region67: #{tpu_custom_call.1} parent=59 // pred_region
        %p420 = scmp.lt.s32.totalorder %s22, 7
        %s421 = scalar_select %p420, %s22, 7
        %s422 = smul.addr %s421, 2
        %s423 = smul.addr %s422, 8
        %s424 = scalar_lea.vmem %s1, %s423
      $region68: #{tpu_custom_call.1} parent=59 // pred_fallthru
        _
      // Predicated region
      $region69: #{tpu_custom_call.1} parent=59 // pred_check
        %p425 = pneg %p94
      $region70: #{tpu_custom_call.1} parent=59 // pred_check_branch
        %427 = sbr.rel (%p425) target = $region72
      $region71: #{tpu_custom_call.1} parent=59 // pred_region
        %p428 = scmp.lt.s32.totalorder %s22, 7
        %s429 = scalar_select %p428, %s22, 7
        %s430 = smul.addr %s429, 2
        %s431 = smul.addr %s430, 8
        %s432 = scalar_lea.vmem %s2, %s431
      $region72: #{tpu_custom_call.1} parent=59 // pred_fallthru
        _
    $region60: #{tpu_custom_call.1} parent=5 // pred_fallthru
      _
    %p433 = scmp.le.s32.totalorder 1, %s22
    %p434 = scmp.lt.s32.totalorder %s22, 9
    %p435 = pnand %p433, %p434
    %p436 = pneg %p435
    // Predicated region
    $region73: #{tpu_custom_call.1} parent=5 // pred_check
      _
    $region74: #{tpu_custom_call.1} parent=5 // pred_check_branch
      %438 = sbr.rel (%p435) target = $region76
    $region75: #{tpu_custom_call.1} parent=5 // pred_region
      %s439 = ssub.s32 %s22, 1
      %p440 = scmp.lt.s32.totalorder %s27, 7
      %s441 = scalar_select %p440, %s27, 7
      %s442 = smul.addr %s441, 2
      %s443 = smul.addr %s442, 8
      %s444 = scalar_lea.vmem %s0, %s443
      %p445 = pneg %p48
      %p446 = pneg %p45
      %p447 = scmp.lt.s32.totalorder %s27, 7
      %s448 = scalar_select %p447, %s27, 7
      %s449 = smul.addr %s448, 2
      %s450 = smul.addr %s449, 8
      %s451 = scalar_lea.vmem %s1, %s450
      %p452 = pneg %p74
      %p453 = pneg %p71
      %p454 = scmp.lt.s32.totalorder %s27, 7
      %s455 = scalar_select %p454, %s27, 7
      %s456 = smul.addr %s455, 2
      %s457 = smul.addr %s456, 8
      %s458 = scalar_lea.vmem %s2, %s457
      %p459 = pneg %p100
      %p460 = pneg %p97
      %p461 = pneg %p121
      %p462 = pneg %p118
      %p463 = pneg %p142
      %p464 = pneg %p139
      %p465 = pneg %p163
      %p466 = pneg %p160
      %p467 = pneg %p184
      %p468 = pneg %p181
      %p469 = pneg %p205
      %p470 = pneg %p202
      %p471 = pneg %p226
      %p472 = pneg %p223
      %p473 = pneg %p247
      %p474 = pneg %p244
      %p475 = pneg %p268
      %p476 = pneg %p265
      %p477 = pneg %p289
      %p478 = pneg %p286
      %p479 = pneg %p310
      %p480 = pneg %p307
      %p481 = pneg %p331
      %p482 = pneg %p328
      %p483 = pneg %p357
      %p484 = pneg %p354
      %p485 = scmp.lt.s32.totalorder %s27, 7
      %s486 = scalar_select %p485, %s27, 7
      %s487 = smul.addr %s486, 2
      %s488 = smul.addr %s487, 8
      %s489 = scalar_lea.vmem %s14, %s488
      %p490 = scmp.lt.s32.totalorder %s27, 7
      %s491 = scalar_select %p490, %s27, 7
      %s492 = smul.addr %s491, 2
      %s493 = smul.addr %s492, 8
      %s494 = scalar_lea.vmem %s0, %s493
      %p495 = scmp.lt.s32.totalorder %s27, 7
      %s496 = scalar_select %p495, %s27, 7
      %s497 = smul.addr %s496, 2
      %s498 = smul.addr %s497, 8
      %s499 = scalar_lea.vmem %s1, %s498
      %p500 = scmp.lt.s32.totalorder %s27, 7
      %s501 = scalar_select %p500, %s27, 7
      %s502 = smul.addr %s501, 2
      %s503 = smul.addr %s502, 8
      %s504 = scalar_lea.vmem %s2, %s503
      %p505 = scmp.lt.s32.totalorder %s27, 7
      %s506 = scalar_select %p505, %s27, 7
      %s507 = smul.addr %s506, 2
      %s508 = smul.addr %s507, 8
      %s509 = scalar_lea.vmem %s14, %s508
      %v510 = vld [vmem:[%s494] sm:$0xff]
      %v511 = vld [vmem:[%s494 + $0x8] sm:$0xff]
      %v512 = vld [vmem:[%s499] sm:$0xff]
      %v513 = vld [vmem:[%s499 + $0x8] sm:$0xff]
      %v514 = vld [vmem:[%s504] sm:$0xff]
      %v515 = vld [vmem:[%s504 + $0x8] sm:$0xff]
      %vm516 = vcmask 130048
      %v518 = vsel %vm516, %v512, 0
      %v521 = vsel %vm516, %v513, 0
      %523 = vmatprep.subr.mxu0 0.0
      %524 = vmatpush1.msra.mxu0 0.0
      %525 = vmatprep.subr.mxu0 0.0
      %526 = vmatpush1.msra.mxu0 0.0
      %527 = vmatprep.subr.mxu0 0.0
      %528 = vmatpush1.msra.mxu0 0.0
      %529 = vmatprep.subr.mxu0 0.0
      %530 = vmatpush1.msra.mxu0 0.0
      %531 = vmatprep.subr.mxu0 0.0
      %532 = vmatpush1.msra.mxu0 0.0
      %533 = vmatprep.subr.mxu0 0.0
      %534 = vmatpush1.msra.mxu0 0.0
      %535 = vmatprep.subr.mxu0 0.0
      %536 = vmatpush1.msra.mxu0 0.0
      %537 = vmatprep.subr.mxu0 0.0
      %538 = vmatpush1.msra.mxu0 0.0
      %539 = vmatprep.subr.mxu0 0.0
      %540 = vmatpush1.msra.mxu0 0.0
      %541 = vmatprep.subr.mxu0 0.0
      %542 = vmatpush1.msra.mxu0 0.0
      %543 = vmatprep.subr.mxu0 0.0
      %544 = vmatpush1.msra.mxu0 0.0
      %545 = vmatprep.subr.mxu0 0.0
      %546 = vmatpush1.msra.mxu0 0.0
      %547 = vmatprep.subr.mxu0 0.0
      %548 = vmatpush1.msra.mxu0 0.0
      %549 = vmatprep.subr.mxu0 0.0
      %550 = vmatpush1.msra.mxu0 0.0
      %551 = vmatprep.subr.mxu0 0.0
      %552 = vmatpush1.msra.mxu0 %v511
      %553 = vmatprep.subr.mxu0 0.0
      %554 = vmatpush1.msra.mxu0 %v510
      %555 = vmatprep.subr.mxu0 0.0
      %556 = vmatpush2.msra.mxu0 0.0
      %557 = vmatprep.subr.mxu0 0.0
      %558 = vmatpush2.msra.mxu0 0.0
      %559 = vmatprep.subr.mxu0 0.0
      %560 = vmatpush2.msra.mxu0 0.0
      %561 = vmatprep.subr.mxu0 0.0
      %562 = vmatpush2.msra.mxu0 0.0
      %563 = vmatprep.subr.mxu0 0.0
      %564 = vmatpush2.msra.mxu0 0.0
      %565 = vmatprep.subr.mxu0 0.0
      %566 = vmatpush2.msra.mxu0 0.0
      %567 = vmatprep.subr.mxu0 0.0
      %568 = vmatpush2.msra.mxu0 0.0
      %569 = vmatprep.subr.mxu0 0.0
      %570 = vmatpush2.msra.mxu0 0.0
      %571 = vmatprep.subr.mxu0 0.0
      %572 = vmatpush2.msra.mxu0 0.0
      %573 = vmatprep.subr.mxu0 0.0
      %574 = vmatpush2.msra.mxu0 0.0
      %575 = vmatprep.subr.mxu0 0.0
      %576 = vmatpush2.msra.mxu0 0.0
      %577 = vmatprep.subr.mxu0 0.0
      %578 = vmatpush2.msra.mxu0 0.0
      %579 = vmatprep.subr.mxu0 0.0
      %580 = vmatpush2.msra.mxu0 0.0
      %581 = vmatprep.subr.mxu0 0.0
      %582 = vmatpush2.msra.mxu0 0.0
      %583 = vmatprep.subr.mxu0 0.0
      %584 = vmatpush2.msra.mxu0 0.0
      %585 = vmatprep.subr.mxu0 0.0
      %586 = vmatpush2.msra.mxu0 0.0
      %587 = vmatprep.mubr.f32.mxu0 0.0
      %588 = vmatmul.mubr.f32.gmra.mxu0 %v518
      %v589 = vpop.f32.mrf.mxu0
      %v590 = vadd.f32 0.0, %v589
      %v591 = vpop.f32.mrf.mxu0
      %592 = vmatprep.mubr.f32.mxu0 0.0
      %593 = vmatmul.mubr.f32.gmra.mxu0 %v521
      %v594 = vpop.f32.mrf.mxu0
      %v595 = vadd.f32 0.0, %v594
      %v596 = vpop.f32.mrf.mxu0
      %597 = vdwg.mxu0
      %598 = vmatprep.subr.mxu0 0.0
      %599 = vmatpush1.msra.mxu0 0.0
      %600 = vmatprep.subr.mxu0 0.0
      %601 = vmatpush1.msra.mxu0 0.0
      %602 = vmatprep.subr.mxu0 0.0
      %603 = vmatpush1.msra.mxu0 0.0
      %604 = vmatprep.subr.mxu0 0.0
      %605 = vmatpush1.msra.mxu0 0.0
      %606 = vmatprep.subr.mxu0 0.0
      %607 = vmatpush1.msra.mxu0 0.0
      %608 = vmatprep.subr.mxu0 0.0
      %609 = vmatpush1.msra.mxu0 0.0
      %610 = vmatprep.subr.mxu0 0.0
      %611 = vmatpush1.msra.mxu0 0.0
      %612 = vmatprep.subr.mxu0 0.0
      %613 = vmatpush1.msra.mxu0 0.0
      %614 = vmatprep.subr.mxu0 0.0
      %615 = vmatpush1.msra.mxu0 0.0
      %616 = vmatprep.subr.mxu0 0.0
      %617 = vmatpush1.msra.mxu0 0.0
      %618 = vmatprep.subr.mxu0 0.0
      %619 = vmatpush1.msra.mxu0 0.0
      %620 = vmatprep.subr.mxu0 0.0
      %621 = vmatpush1.msra.mxu0 0.0
      %622 = vmatprep.subr.mxu0 0.0
      %623 = vmatpush1.msra.mxu0 0.0
      %624 = vmatprep.subr.mxu0 0.0
      %625 = vmatpush1.msra.mxu0 0.0
      %626 = vmatprep.subr.mxu0 0.0
      %627 = vmatpush1.msra.mxu0 %v595
      %628 = vmatprep.subr.mxu0 0.0
      %629 = vmatpush1.msra.mxu0 %v590
      %630 = vmatprep.subr.mxu0 0.0
      %631 = vmatpush2.msra.mxu0 0.0
      %632 = vmatprep.subr.mxu0 0.0
      %633 = vmatpush2.msra.mxu0 0.0
      %634 = vmatprep.subr.mxu0 0.0
      %635 = vmatpush2.msra.mxu0 0.0
      %636 = vmatprep.subr.mxu0 0.0
      %637 = vmatpush2.msra.mxu0 0.0
      %638 = vmatprep.subr.mxu0 0.0
      %639 = vmatpush2.msra.mxu0 0.0
      %640 = vmatprep.subr.mxu0 0.0
      %641 = vmatpush2.msra.mxu0 0.0
      %642 = vmatprep.subr.mxu0 0.0
      %643 = vmatpush2.msra.mxu0 0.0
      %644 = vmatprep.subr.mxu0 0.0
      %645 = vmatpush2.msra.mxu0 0.0
      %646 = vmatprep.subr.mxu0 0.0
      %647 = vmatpush2.msra.mxu0 0.0
      %648 = vmatprep.subr.mxu0 0.0
      %649 = vmatpush2.msra.mxu0 0.0
      %650 = vmatprep.subr.mxu0 0.0
      %651 = vmatpush2.msra.mxu0 0.0
      %652 = vmatprep.subr.mxu0 0.0
      %653 = vmatpush2.msra.mxu0 0.0
      %654 = vmatprep.subr.mxu0 0.0
      %655 = vmatpush2.msra.mxu0 0.0
      %656 = vmatprep.subr.mxu0 0.0
      %657 = vmatpush2.msra.mxu0 0.0
      %658 = vmatprep.subr.mxu0 0.0
      %659 = vmatpush2.msra.mxu0 0.0
      %660 = vmatprep.subr.mxu0 0.0
      %661 = vmatpush2.msra.mxu0 0.0
      %662 = vmatprep.mubr.f32.mxu0 0.0
      %663 = vmatmul.mubr.f32.gmra.mxu0 %v518
      %v664 = vpop.f32.mrf.mxu0
      %v665 = vadd.f32 0.0, %v664
      %v666 = vpop.f32.mrf.mxu0
      %667 = vmatprep.mubr.f32.mxu0 0.0
      %668 = vmatmul.mubr.f32.gmra.mxu0 %v521
      %v669 = vpop.f32.mrf.mxu0
      %v670 = vadd.f32 0.0, %v669
      %v671 = vpop.f32.mrf.mxu0
      %672 = vdwg.mxu0
      %673 = vmatprep.subr.mxu0 0.0
      %674 = vmatpush1.msra.mxu0 0.0
      %675 = vmatprep.subr.mxu0 0.0
      %676 = vmatpush1.msra.mxu0 0.0
      %677 = vmatprep.subr.mxu0 0.0
      %678 = vmatpush1.msra.mxu0 0.0
      %679 = vmatprep.subr.mxu0 0.0
      %680 = vmatpush1.msra.mxu0 0.0
      %681 = vmatprep.subr.mxu0 0.0
      %682 = vmatpush1.msra.mxu0 0.0
      %683 = vmatprep.subr.mxu0 0.0
      %684 = vmatpush1.msra.mxu0 0.0
      %685 = vmatprep.subr.mxu0 0.0
      %686 = vmatpush1.msra.mxu0 0.0
      %687 = vmatprep.subr.mxu0 0.0
      %688 = vmatpush1.msra.mxu0 0.0
      %689 = vmatprep.subr.mxu0 0.0
      %690 = vmatpush1.msra.mxu0 0.0
      %691 = vmatprep.subr.mxu0 0.0
      %692 = vmatpush1.msra.mxu0 0.0
      %693 = vmatprep.subr.mxu0 0.0
      %694 = vmatpush1.msra.mxu0 0.0
      %695 = vmatprep.subr.mxu0 0.0
      %696 = vmatpush1.msra.mxu0 0.0
      %697 = vmatprep.subr.mxu0 0.0
      %698 = vmatpush1.msra.mxu0 0.0
      %699 = vmatprep.subr.mxu0 0.0
      %700 = vmatpush1.msra.mxu0 0.0
      %701 = vmatprep.subr.mxu0 0.0
      %702 = vmatpush1.msra.mxu0 %v670
      %703 = vmatprep.subr.mxu0 0.0
      %704 = vmatpush1.msra.mxu0 %v665
      %705 = vmatprep.subr.mxu0 0.0
      %706 = vmatpush2.msra.mxu0 0.0
      %707 = vmatprep.subr.mxu0 0.0
      %708 = vmatpush2.msra.mxu0 0.0
      %709 = vmatprep.subr.mxu0 0.0
      %710 = vmatpush2.msra.mxu0 0.0
      %711 = vmatprep.subr.mxu0 0.0
      %712 = vmatpush2.msra.mxu0 0.0
      %713 = vmatprep.subr.mxu0 0.0
      %714 = vmatpush2.msra.mxu0 0.0
      %715 = vmatprep.subr.mxu0 0.0
      %716 = vmatpush2.msra.mxu0 0.0
      %717 = vmatprep.subr.mxu0 0.0
      %718 = vmatpush2.msra.mxu0 0.0
      %719 = vmatprep.subr.mxu0 0.0
      %720 = vmatpush2.msra.mxu0 0.0
      %721 = vmatprep.subr.mxu0 0.0
      %722 = vmatpush2.msra.mxu0 0.0
      %723 = vmatprep.subr.mxu0 0.0
      %724 = vmatpush2.msra.mxu0 0.0
      %725 = vmatprep.subr.mxu0 0.0
      %726 = vmatpush2.msra.mxu0 0.0
      %727 = vmatprep.subr.mxu0 0.0
      %728 = vmatpush2.msra.mxu0 0.0
      %729 = vmatprep.subr.mxu0 0.0
      %730 = vmatpush2.msra.mxu0 0.0
      %731 = vmatprep.subr.mxu0 0.0
      %732 = vmatpush2.msra.mxu0 0.0
      %733 = vmatprep.subr.mxu0 0.0
      %734 = vmatpush2.msra.mxu0 0.0
      %735 = vmatprep.subr.mxu0 0.0
      %736 = vmatpush2.msra.mxu0 0.0
      %737 = vmatprep.mubr.f32.mxu0 0.0
      %738 = vmatmul.mubr.f32.gmra.mxu0 %v518
      %v739 = vpop.f32.mrf.mxu0
      %v740 = vadd.f32 0.0, %v739
      %v741 = vpop.f32.mrf.mxu0
      %742 = vmatprep.mubr.f32.mxu0 0.0
      %743 = vmatmul.mubr.f32.gmra.mxu0 %v521
      %v744 = vpop.f32.mrf.mxu0
      %v745 = vadd.f32 0.0, %v744
      %v746 = vpop.f32.mrf.mxu0
      %747 = vdwg.mxu0
      %750 = vrot.lane.b32.xlu0 %v590, 4
      %v751 = vpop.permute.xlu0 %750
      %752 = vrot.lane.b32.xlu0 %v595, 4
      %v753 = vpop.permute.xlu0 %752
      %758 = vrot.lane.b32.xlu0 %v665, 8
      %v759 = vpop.permute.xlu0 %758
      %760 = vrot.lane.b32.xlu0 %v670, 8
      %v761 = vpop.permute.xlu0 %760
      %766 = vrot.lane.b32.xlu0 %v740, 12
      %v767 = vpop.permute.xlu0 %766
      %768 = vrot.lane.b32.xlu0 %v745, 12
      %v769 = vpop.permute.xlu0 %768
      %vm772 = vcmask 31744
      %v773 = vsel %vm772, %v510, %v751
      %v774 = vsel %vm772, %v511, %v753
      %vm775 = vcmask 64512
      %v776 = vsel %vm775, %v773, %v759
      %v777 = vsel %vm775, %v774, %v761
      %vm778 = vcmask 97280
      %v779 = vsel %vm778, %v776, %v767
      %v780 = vsel %vm778, %v777, %v769
      %v781 = vld [vmem:[%s3] sm:$0xff]
      %v782 = vld [vmem:[%s3 + $0x8] sm:$0xff]
      %v783 = vld [vmem:[%s4] sm:$0x1]
      %v785 = vlaneseq
      %v786 = vshrl.u32 %v785, 7
      %v787 = vsub.s32 0, %v786
      %v788 = vrot.slane %v783, %v787
      %v791 = vsel %vm516, %v779, 0
      %v794 = vsel %vm516, %v780, 0
      %796 = vmatprep.subr.mxu0 0.0
      %797 = vmatpush1.msra.mxu0 0.0
      %798 = vmatprep.subr.mxu0 0.0
      %799 = vmatpush1.msra.mxu0 0.0
      %800 = vmatprep.subr.mxu0 0.0
      %801 = vmatpush1.msra.mxu0 0.0
      %802 = vmatprep.subr.mxu0 0.0
      %803 = vmatpush1.msra.mxu0 0.0
      %804 = vmatprep.subr.mxu0 0.0
      %805 = vmatpush1.msra.mxu0 0.0
      %806 = vmatprep.subr.mxu0 0.0
      %807 = vmatpush1.msra.mxu0 0.0
      %808 = vmatprep.subr.mxu0 0.0
      %809 = vmatpush1.msra.mxu0 0.0
      %810 = vmatprep.subr.mxu0 0.0
      %811 = vmatpush1.msra.mxu0 0.0
      %812 = vmatprep.subr.mxu0 0.0
      %813 = vmatpush1.msra.mxu0 0.0
      %814 = vmatprep.subr.mxu0 0.0
      %815 = vmatpush1.msra.mxu0 0.0
      %816 = vmatprep.subr.mxu0 0.0
      %817 = vmatpush1.msra.mxu0 0.0
      %818 = vmatprep.subr.mxu0 0.0
      %819 = vmatpush1.msra.mxu0 0.0
      %820 = vmatprep.subr.mxu0 0.0
      %821 = vmatpush1.msra.mxu0 0.0
      %822 = vmatprep.subr.mxu0 0.0
      %823 = vmatpush1.msra.mxu0 0.0
      %824 = vmatprep.subr.mxu0 0.0
      %825 = vmatpush1.msra.mxu0 %v782
      %826 = vmatprep.subr.mxu0 0.0
      %827 = vmatpush1.msra.mxu0 %v781
      %828 = vmatprep.subr.mxu0 0.0
      %829 = vmatpush2.msra.mxu0 0.0
      %830 = vmatprep.subr.mxu0 0.0
      %831 = vmatpush2.msra.mxu0 0.0
      %832 = vmatprep.subr.mxu0 0.0
      %833 = vmatpush2.msra.mxu0 0.0
      %834 = vmatprep.subr.mxu0 0.0
      %835 = vmatpush2.msra.mxu0 0.0
      %836 = vmatprep.subr.mxu0 0.0
      %837 = vmatpush2.msra.mxu0 0.0
      %838 = vmatprep.subr.mxu0 0.0
      %839 = vmatpush2.msra.mxu0 0.0
      %840 = vmatprep.subr.mxu0 0.0
      %841 = vmatpush2.msra.mxu0 0.0
      %842 = vmatprep.subr.mxu0 0.0
      %843 = vmatpush2.msra.mxu0 0.0
      %844 = vmatprep.subr.mxu0 0.0
      %845 = vmatpush2.msra.mxu0 0.0
      %846 = vmatprep.subr.mxu0 0.0
      %847 = vmatpush2.msra.mxu0 0.0
      %848 = vmatprep.subr.mxu0 0.0
      %849 = vmatpush2.msra.mxu0 0.0
      %850 = vmatprep.subr.mxu0 0.0
      %851 = vmatpush2.msra.mxu0 0.0
      %852 = vmatprep.subr.mxu0 0.0
      %853 = vmatpush2.msra.mxu0 0.0
      %854 = vmatprep.subr.mxu0 0.0
      %855 = vmatpush2.msra.mxu0 0.0
      %856 = vmatprep.subr.mxu0 0.0
      %857 = vmatpush2.msra.mxu0 0.0
      %858 = vmatprep.subr.mxu0 0.0
      %859 = vmatpush2.msra.mxu0 0.0
      %860 = vmatprep.mubr.f32.mxu0 0.0
      %861 = vmatmul.mubr.f32.gmra.mxu0 %v791
      %v862 = vpop.f32.mrf.mxu0
      %v863 = vadd.f32 %v788, %v862
      %v864 = vpop.f32.mrf.mxu0
      %865 = vmatprep.mubr.f32.mxu0 0.0
      %866 = vmatmul.mubr.f32.gmra.mxu0 %v794
      %v867 = vpop.f32.mrf.mxu0
      %v868 = vadd.f32 %v788, %v867
      %v869 = vpop.f32.mrf.mxu0
      %870 = vdwg.mxu0
      %v871 = vadd.f32 %v510, %v863
      %v872 = vadd.f32 %v511, %v868
      %v873 = vsel %vm772, %v871, 0.0
      %v874 = vsel %vm772, %v872, 0.0
      %v875 = vadd.f32 %v873, %v874
      %v876 = vrot.slane %v875, 4
      %v877 = vadd.f32 %v875, %v876
      %v878 = vrot.slane %v877, 2
      %v879 = vadd.f32 %v877, %v878
      %v880 = vrot.slane %v879, 1
      %v881 = vadd.f32 %v879, %v880
      %v882 = vrcp.pop 16.0
      %v883 = vmul.f32 %v881, %v882
      %v884 = vsub.f32 %v871, %v883
      %v885 = vsub.f32 %v872, %v883
      %v886 = vmul.f32 %v884, %v884
      %v887 = vmul.f32 %v885, %v885
      %v888 = vsel %vm772, %v886, 0.0
      %v889 = vsel %vm772, %v887, 0.0
      %v890 = vadd.f32 %v888, %v889
      %v891 = vrot.slane %v890, 4
      %v892 = vadd.f32 %v890, %v891
      %v893 = vrot.slane %v892, 2
      %v894 = vadd.f32 %v892, %v893
      %v895 = vrot.slane %v894, 1
      %v896 = vadd.f32 %v894, %v895
      %v897 = vmul.f32 %v896, %v882
      %v898 = vadd.f32 %v897, 1e-05
      %v899 = vrsqrt.pop %v898
      %v900 = vmul.f32 %v884, %v899
      %v901 = vmul.f32 %v885, %v899
      %v902 = vld [vmem:[%s5] sm:$0xf]
      %v904 = vsel %vm772, %v900, 0
      %v907 = vsel %vm772, %v901, 0
      %vm909 = vcmask 1043456
      %v911 = vsel %vm909, %v902, 0
      %913 = vmatprep.subr.mxu0 0.0
      %914 = vmatpush1.msra.mxu0 0.0
      %915 = vmatprep.subr.mxu0 0.0
      %916 = vmatpush1.msra.mxu0 0.0
      %917 = vmatprep.subr.mxu0 0.0
      %918 = vmatpush1.msra.mxu0 0.0
      %919 = vmatprep.subr.mxu0 0.0
      %920 = vmatpush1.msra.mxu0 0.0
      %921 = vmatprep.subr.mxu0 0.0
      %922 = vmatpush1.msra.mxu0 0.0
      %923 = vmatprep.subr.mxu0 0.0
      %924 = vmatpush1.msra.mxu0 0.0
      %925 = vmatprep.subr.mxu0 0.0
      %926 = vmatpush1.msra.mxu0 0.0
      %927 = vmatprep.subr.mxu0 0.0
      %928 = vmatpush1.msra.mxu0 0.0
      %929 = vmatprep.subr.mxu0 0.0
      %930 = vmatpush1.msra.mxu0 0.0
      %931 = vmatprep.subr.mxu0 0.0
      %932 = vmatpush1.msra.mxu0 0.0
      %933 = vmatprep.subr.mxu0 0.0
      %934 = vmatpush1.msra.mxu0 0.0
      %935 = vmatprep.subr.mxu0 0.0
      %936 = vmatpush1.msra.mxu0 0.0
      %937 = vmatprep.subr.mxu0 0.0
      %938 = vmatpush1.msra.mxu0 0.0
      %939 = vmatprep.subr.mxu0 0.0
      %940 = vmatpush1.msra.mxu0 0.0
      %941 = vmatprep.subr.mxu0 0.0
      %942 = vmatpush1.msra.mxu0 0.0
      %943 = vmatprep.subr.mxu0 0.0
      %944 = vmatpush1.msra.mxu0 %v911
      %945 = vmatprep.subr.mxu0 0.0
      %946 = vmatpush2.msra.mxu0 0.0
      %947 = vmatprep.subr.mxu0 0.0
      %948 = vmatpush2.msra.mxu0 0.0
      %949 = vmatprep.subr.mxu0 0.0
      %950 = vmatpush2.msra.mxu0 0.0
      %951 = vmatprep.subr.mxu0 0.0
      %952 = vmatpush2.msra.mxu0 0.0
      %953 = vmatprep.subr.mxu0 0.0
      %954 = vmatpush2.msra.mxu0 0.0
      %955 = vmatprep.subr.mxu0 0.0
      %956 = vmatpush2.msra.mxu0 0.0
      %957 = vmatprep.subr.mxu0 0.0
      %958 = vmatpush2.msra.mxu0 0.0
      %959 = vmatprep.subr.mxu0 0.0
      %960 = vmatpush2.msra.mxu0 0.0
      %961 = vmatprep.subr.mxu0 0.0
      %962 = vmatpush2.msra.mxu0 0.0
      %963 = vmatprep.subr.mxu0 0.0
      %964 = vmatpush2.msra.mxu0 0.0
      %965 = vmatprep.subr.mxu0 0.0
      %966 = vmatpush2.msra.mxu0 0.0
      %967 = vmatprep.subr.mxu0 0.0
      %968 = vmatpush2.msra.mxu0 0.0
      %969 = vmatprep.subr.mxu0 0.0
      %970 = vmatpush2.msra.mxu0 0.0
      %971 = vmatprep.subr.mxu0 0.0
      %972 = vmatpush2.msra.mxu0 0.0
      %973 = vmatprep.subr.mxu0 0.0
      %974 = vmatpush2.msra.mxu0 0.0
      %975 = vmatprep.subr.mxu0 0.0
      %976 = vmatpush2.msra.mxu0 0.0
      %977 = vmatprep.mubr.f32.mxu0 0.0
      %978 = vmatmul.mubr.f32.gmra.mxu0 %v904
      %v979 = vpop.f32.mrf.mxu0
      %v980 = vadd.f32 0.0, %v979
      %v981 = vpop.f32.mrf.mxu0
      %982 = vmatprep.mubr.f32.mxu0 0.0
      %983 = vmatmul.mubr.f32.gmra.mxu0 %v907
      %v984 = vpop.f32.mrf.mxu0
      %v985 = vadd.f32 0.0, %v984
      %v986 = vpop.f32.mrf.mxu0
      %987 = vdwg.mxu0
      %v988 = vld [vmem:[%s6] sm:$0xff]
      %v990 = vsel %vm775, %v980, 0
      %v993 = vsel %vm775, %v985, 0
      %995 = vmatprep.subr.mxu0 0.0
      %996 = vmatpush1.msra.mxu0 0.0
      %997 = vmatprep.subr.mxu0 0.0
      %998 = vmatpush1.msra.mxu0 0.0
      %999 = vmatprep.subr.mxu0 0.0
      %1000 = vmatpush1.msra.mxu0 0.0
      %1001 = vmatprep.subr.mxu0 0.0
      %1002 = vmatpush1.msra.mxu0 0.0
      %1003 = vmatprep.subr.mxu0 0.0
      %1004 = vmatpush1.msra.mxu0 0.0
      %1005 = vmatprep.subr.mxu0 0.0
      %1006 = vmatpush1.msra.mxu0 0.0
      %1007 = vmatprep.subr.mxu0 0.0
      %1008 = vmatpush1.msra.mxu0 0.0
      %1009 = vmatprep.subr.mxu0 0.0
      %1010 = vmatpush1.msra.mxu0 0.0
      %1011 = vmatprep.subr.mxu0 0.0
      %1012 = vmatpush1.msra.mxu0 0.0
      %1013 = vmatprep.subr.mxu0 0.0
      %1014 = vmatpush1.msra.mxu0 0.0
      %1015 = vmatprep.subr.mxu0 0.0
      %1016 = vmatpush1.msra.mxu0 0.0
      %1017 = vmatprep.subr.mxu0 0.0
      %1018 = vmatpush1.msra.mxu0 0.0
      %1019 = vmatprep.subr.mxu0 0.0
      %1020 = vmatpush1.msra.mxu0 0.0
      %1021 = vmatprep.subr.mxu0 0.0
      %1022 = vmatpush1.msra.mxu0 0.0
      %1023 = vmatprep.subr.mxu0 0.0
      %1024 = vmatpush1.msra.mxu0 0.0
      %1025 = vmatprep.subr.mxu0 0.0
      %1026 = vmatpush1.msra.mxu0 %v988
      %1027 = vmatprep.subr.mxu0 0.0
      %1028 = vmatpush2.msra.mxu0 0.0
      %1029 = vmatprep.subr.mxu0 0.0
      %1030 = vmatpush2.msra.mxu0 0.0
      %1031 = vmatprep.subr.mxu0 0.0
      %1032 = vmatpush2.msra.mxu0 0.0
      %1033 = vmatprep.subr.mxu0 0.0
      %1034 = vmatpush2.msra.mxu0 0.0
      %1035 = vmatprep.subr.mxu0 0.0
      %1036 = vmatpush2.msra.mxu0 0.0
      %1037 = vmatprep.subr.mxu0 0.0
      %1038 = vmatpush2.msra.mxu0 0.0
      %1039 = vmatprep.subr.mxu0 0.0
      %1040 = vmatpush2.msra.mxu0 0.0
      %1041 = vmatprep.subr.mxu0 0.0
      %1042 = vmatpush2.msra.mxu0 0.0
      %1043 = vmatprep.subr.mxu0 0.0
      %1044 = vmatpush2.msra.mxu0 0.0
      %1045 = vmatprep.subr.mxu0 0.0
      %1046 = vmatpush2.msra.mxu0 0.0
      %1047 = vmatprep.subr.mxu0 0.0
      %1048 = vmatpush2.msra.mxu0 0.0
      %1049 = vmatprep.subr.mxu0 0.0
      %1050 = vmatpush2.msra.mxu0 0.0
      %1051 = vmatprep.subr.mxu0 0.0
      %1052 = vmatpush2.msra.mxu0 0.0
      %1053 = vmatprep.subr.mxu0 0.0
      %1054 = vmatpush2.msra.mxu0 0.0
      %1055 = vmatprep.subr.mxu0 0.0
      %1056 = vmatpush2.msra.mxu0 0.0
      %1057 = vmatprep.subr.mxu0 0.0
      %1058 = vmatpush2.msra.mxu0 0.0
      %1059 = vmatprep.mubr.f32.mxu0 0.0
      %1060 = vmatmul.mubr.f32.gmra.mxu0 %v990
      %v1061 = vpop.f32.mrf.mxu0
      %v1062 = vadd.f32 0.0, %v1061
      %v1063 = vpop.f32.mrf.mxu0
      %1064 = vmatprep.mubr.f32.mxu0 0.0
      %1065 = vmatmul.mubr.f32.gmra.mxu0 %v993
      %v1066 = vpop.f32.mrf.mxu0
      %v1067 = vadd.f32 0.0, %v1066
      %v1068 = vpop.f32.mrf.mxu0
      %1069 = vdwg.mxu0
      %1070 = vxpose.xlu0.b32.start [1/16] %v1062, 128
      %1071 = vxpose.xlu0.b32.cont [2/16] %v1067, 128
      %1072 = vxpose.xlu0.b32.cont [3/16] 0.0, 128
      %1073 = vxpose.xlu0.b32.cont [4/16] 0.0, 128
      %1074 = vxpose.xlu0.b32.cont [5/16] 0.0, 128
      %1075 = vxpose.xlu0.b32.cont [6/16] 0.0, 128
      %1076 = vxpose.xlu0.b32.cont [7/16] 0.0, 128
      %1077 = vxpose.xlu0.b32.cont [8/16] 0.0, 128
      %1078 = vxpose.xlu0.b32.cont [9/16] 0.0, 128
      %1079 = vxpose.xlu0.b32.cont [10/16] 0.0, 128
      %1080 = vxpose.xlu0.b32.cont [11/16] 0.0, 128
      %1081 = vxpose.xlu0.b32.cont [12/16] 0.0, 128
      %1082 = vxpose.xlu0.b32.cont [13/16] 0.0, 128
      %1083 = vxpose.xlu0.b32.cont [14/16] 0.0, 128
      %1084 = vxpose.xlu0.b32.cont [15/16] 0.0, 128
      %1085 = vxpose.xlu0.b32.end [16/16] 0.0, 128
      %v1086 = vpop.trf.xlu0
      %v1087 = vpop.trf.xlu0
      %v1088 = vpop.trf.xlu0
      %v1089 = vpop.trf.xlu0
      %v1090 = vpop.trf.xlu0
      %v1091 = vpop.trf.xlu0
      %v1092 = vpop.trf.xlu0
      %v1093 = vpop.trf.xlu0
      %v1094 = vpop.trf.xlu0
      %v1095 = vpop.trf.xlu0
      %v1096 = vpop.trf.xlu0
      %v1097 = vpop.trf.xlu0
      %v1098 = vpop.trf.xlu0
      %v1099 = vpop.trf.xlu0
      %v1100 = vpop.trf.xlu0
      %v1101 = vpop.trf.xlu0
      %1103 = vset.pattern.permute.xlu0 2
      %1104 = vperm.xlu0 %1103, %v1062
      %v1105 = vpop.permute.xlu0 %1104
      %1108 = vset.pattern.permute.xlu0 2
      %1109 = vperm.xlu0 %1108, %v1067
      %v1110 = vpop.permute.xlu0 %1109
      %v1112 = vlaneseq
      %v1113 = vshrl.u32 %v1112, 7
      %v1114 = vsub.s32 0, %v1113
      %v1115 = vrot.slane %v1086, %v1114
      %v1116 = vadd.f32 %v1105, %v1115
      %v1117 = vadd.f32 %v1110, %v1115
      %vm1118 = vcmp.gt.f32.partialorder %v1116, 0.0
      %vm1119 = vcmp.gt.f32.partialorder %v1117, 0.0
      %v1120 = vmul.f32 %v1116, 0.2
      %v1121 = vmul.f32 %v1117, 0.2
      %v1122 = vsel %vm1118, %v1116, %v1120
      %v1123 = vsel %vm1119, %v1117, %v1121
      %vm1124 = vcmp.gt.f32.partialorder %v514, 0.0
      %vm1125 = vcmp.gt.f32.partialorder %v515, 0.0
      %v1126 = vsel %vm1124, %v1122, -1e+30
      %v1127 = vsel %vm1125, %v1123, -1e+30
      %v1128 = vsel %vm516, %v1126, -inf
      %1129 = vmax.xlane.f32.xlu0 %v1128
      %v1130 = vpop.xlane.xlu0 %1129
      %v1131 = vsel %vm516, %v1127, -inf
      %1132 = vmax.xlane.f32.xlu0 %v1131
      %v1133 = vpop.xlane.xlu0 %1132
      %v1134 = vsub.f32 %v1126, %v1130
      %v1135 = vsub.f32 %v1127, %v1133
      %v1136 = vmul.f32 %v1134, 1.442695
      %v1137 = vpow.pop %v1136
      %v1138 = vmul.f32 %v1135, 1.442695
      %v1139 = vpow.pop %v1138
      %v1140 = vsel %vm516, %v1137, 0.0
      %1141 = vadd.xlane.f32.xlu0 %v1140
      %v1142 = vpop.xlane.xlu0 %1141
      %v1143 = vsel %vm516, %v1139, 0.0
      %1144 = vadd.xlane.f32.xlu0 %v1143
      %v1145 = vpop.xlane.xlu0 %1144
      %v1146 = vrcp.pop %v1142
      %v1147 = vrcp.pop %v1145
      %v1148 = vmul.f32 %v1137, %v1146
      %v1149 = vmul.f32 %v1139, %v1147
      %v1151 = vsel %vm516, %v1148, 0
      %v1154 = vsel %vm516, %v1149, 0
      %1156 = vmatprep.subr.mxu0 0.0
      %1157 = vmatpush1.msra.mxu0 0.0
      %1158 = vmatprep.subr.mxu0 0.0
      %1159 = vmatpush1.msra.mxu0 0.0
      %1160 = vmatprep.subr.mxu0 0.0
      %1161 = vmatpush1.msra.mxu0 0.0
      %1162 = vmatprep.subr.mxu0 0.0
      %1163 = vmatpush1.msra.mxu0 0.0
      %1164 = vmatprep.subr.mxu0 0.0
      %1165 = vmatpush1.msra.mxu0 0.0
      %1166 = vmatprep.subr.mxu0 0.0
      %1167 = vmatpush1.msra.mxu0 0.0
      %1168 = vmatprep.subr.mxu0 0.0
      %1169 = vmatpush1.msra.mxu0 0.0
      %1170 = vmatprep.subr.mxu0 0.0
      %1171 = vmatpush1.msra.mxu0 0.0
      %1172 = vmatprep.subr.mxu0 0.0
      %1173 = vmatpush1.msra.mxu0 0.0
      %1174 = vmatprep.subr.mxu0 0.0
      %1175 = vmatpush1.msra.mxu0 0.0
      %1176 = vmatprep.subr.mxu0 0.0
      %1177 = vmatpush1.msra.mxu0 0.0
      %1178 = vmatprep.subr.mxu0 0.0
      %1179 = vmatpush1.msra.mxu0 0.0
      %1180 = vmatprep.subr.mxu0 0.0
      %1181 = vmatpush1.msra.mxu0 0.0
      %1182 = vmatprep.subr.mxu0 0.0
      %1183 = vmatpush1.msra.mxu0 0.0
      %1184 = vmatprep.subr.mxu0 0.0
      %1185 = vmatpush1.msra.mxu0 %v985
      %1186 = vmatprep.subr.mxu0 0.0
      %1187 = vmatpush1.msra.mxu0 %v980
      %1188 = vmatprep.subr.mxu0 0.0
      %1189 = vmatpush2.msra.mxu0 0.0
      %1190 = vmatprep.subr.mxu0 0.0
      %1191 = vmatpush2.msra.mxu0 0.0
      %1192 = vmatprep.subr.mxu0 0.0
      %1193 = vmatpush2.msra.mxu0 0.0
      %1194 = vmatprep.subr.mxu0 0.0
      %1195 = vmatpush2.msra.mxu0 0.0
      %1196 = vmatprep.subr.mxu0 0.0
      %1197 = vmatpush2.msra.mxu0 0.0
      %1198 = vmatprep.subr.mxu0 0.0
      %1199 = vmatpush2.msra.mxu0 0.0
      %1200 = vmatprep.subr.mxu0 0.0
      %1201 = vmatpush2.msra.mxu0 0.0
      %1202 = vmatprep.subr.mxu0 0.0
      %1203 = vmatpush2.msra.mxu0 0.0
      %1204 = vmatprep.subr.mxu0 0.0
      %1205 = vmatpush2.msra.mxu0 0.0
      %1206 = vmatprep.subr.mxu0 0.0
      %1207 = vmatpush2.msra.mxu0 0.0
      %1208 = vmatprep.subr.mxu0 0.0
      %1209 = vmatpush2.msra.mxu0 0.0
      %1210 = vmatprep.subr.mxu0 0.0
      %1211 = vmatpush2.msra.mxu0 0.0
      %1212 = vmatprep.subr.mxu0 0.0
      %1213 = vmatpush2.msra.mxu0 0.0
      %1214 = vmatprep.subr.mxu0 0.0
      %1215 = vmatpush2.msra.mxu0 0.0
      %1216 = vmatprep.subr.mxu0 0.0
      %1217 = vmatpush2.msra.mxu0 0.0
      %1218 = vmatprep.subr.mxu0 0.0
      %1219 = vmatpush2.msra.mxu0 0.0
      %1220 = vmatprep.mubr.f32.mxu0 0.0
      %1221 = vmatmul.mubr.f32.gmra.mxu0 %v1151
      %v1222 = vpop.f32.mrf.mxu0
      %v1223 = vadd.f32 0.0, %v1222
      %v1224 = vpop.f32.mrf.mxu0
      %1225 = vmatprep.mubr.f32.mxu0 0.0
      %1226 = vmatmul.mubr.f32.gmra.mxu0 %v1154
      %v1227 = vpop.f32.mrf.mxu0
      %v1228 = vadd.f32 0.0, %v1227
      %v1229 = vpop.f32.mrf.mxu0
      %1230 = vdwg.mxu0
      %1231 = vrot.lane.b32.xlu0 %v1062, 127
      %v1232 = vpop.permute.xlu0 %1231
      %1233 = vrot.lane.b32.xlu0 %v1067, 127
      %v1234 = vpop.permute.xlu0 %1233
      %1237 = vxpose.xlu0.b32.start [1/16] %v1232, 128
      %1238 = vxpose.xlu0.b32.cont [2/16] %v1234, 128
      %1239 = vxpose.xlu0.b32.cont [3/16] 0.0, 128
      %1240 = vxpose.xlu0.b32.cont [4/16] 0.0, 128
      %1241 = vxpose.xlu0.b32.cont [5/16] 0.0, 128
      %1242 = vxpose.xlu0.b32.cont [6/16] 0.0, 128
      %1243 = vxpose.xlu0.b32.cont [7/16] 0.0, 128
      %1244 = vxpose.xlu0.b32.cont [8/16] 0.0, 128
      %1245 = vxpose.xlu0.b32.cont [9/16] 0.0, 128
      %1246 = vxpose.xlu0.b32.cont [10/16] 0.0, 128
      %1247 = vxpose.xlu0.b32.cont [11/16] 0.0, 128
      %1248 = vxpose.xlu0.b32.cont [12/16] 0.0, 128
      %1249 = vxpose.xlu0.b32.cont [13/16] 0.0, 128
      %1250 = vxpose.xlu0.b32.cont [14/16] 0.0, 128
      %1251 = vxpose.xlu0.b32.cont [15/16] 0.0, 128
      %1252 = vxpose.xlu0.b32.end [16/16] 0.0, 128
      %v1253 = vpop.trf.xlu0
      %v1254 = vpop.trf.xlu0
      %v1255 = vpop.trf.xlu0
      %v1256 = vpop.trf.xlu0
      %v1257 = vpop.trf.xlu0
      %v1258 = vpop.trf.xlu0
      %v1259 = vpop.trf.xlu0
      %v1260 = vpop.trf.xlu0
      %v1261 = vpop.trf.xlu0
      %v1262 = vpop.trf.xlu0
      %v1263 = vpop.trf.xlu0
      %v1264 = vpop.trf.xlu0
      %v1265 = vpop.trf.xlu0
      %v1266 = vpop.trf.xlu0
      %v1267 = vpop.trf.xlu0
      %v1268 = vpop.trf.xlu0
      %1269 = vset.pattern.permute.xlu0 3
      %1270 = vperm.xlu0 %1269, %v1062
      %v1271 = vpop.permute.xlu0 %1270
      %1273 = vset.pattern.permute.xlu0 3
      %1274 = vperm.xlu0 %1273, %v1067
      %v1275 = vpop.permute.xlu0 %1274
      %v1277 = vlaneseq
      %v1278 = vshrl.u32 %v1277, 7
      %v1279 = vsub.s32 0, %v1278
      %v1280 = vrot.slane %v1253, %v1279
      %v1281 = vadd.f32 %v1271, %v1280
      %v1282 = vadd.f32 %v1275, %v1280
      %vm1283 = vcmp.gt.f32.partialorder %v1281, 0.0
      %vm1284 = vcmp.gt.f32.partialorder %v1282, 0.0
      %v1285 = vmul.f32 %v1281, 0.2
      %v1286 = vmul.f32 %v1282, 0.2
      %v1287 = vsel %vm1283, %v1281, %v1285
      %v1288 = vsel %vm1284, %v1282, %v1286
      %v1289 = vsel %vm1124, %v1287, -1e+30
      %v1290 = vsel %vm1125, %v1288, -1e+30
      %v1291 = vsel %vm516, %v1289, -inf
      %1292 = vmax.xlane.f32.xlu0 %v1291
      %v1293 = vpop.xlane.xlu0 %1292
      %v1294 = vsel %vm516, %v1290, -inf
      %1295 = vmax.xlane.f32.xlu0 %v1294
      %v1296 = vpop.xlane.xlu0 %1295
      %v1297 = vsub.f32 %v1289, %v1293
      %v1298 = vsub.f32 %v1290, %v1296
      %v1299 = vmul.f32 %v1297, 1.442695
      %v1300 = vpow.pop %v1299
      %v1301 = vmul.f32 %v1298, 1.442695
      %v1302 = vpow.pop %v1301
      %v1303 = vsel %vm516, %v1300, 0.0
      %1304 = vadd.xlane.f32.xlu0 %v1303
      %v1305 = vpop.xlane.xlu0 %1304
      %v1306 = vsel %vm516, %v1302, 0.0
      %1307 = vadd.xlane.f32.xlu0 %v1306
      %v1308 = vpop.xlane.xlu0 %1307
      %v1309 = vrcp.pop %v1305
      %v1310 = vrcp.pop %v1308
      %v1311 = vmul.f32 %v1300, %v1309
      %v1312 = vmul.f32 %v1302, %v1310
      %1313 = vrot.lane.b32.xlu0 %v980, 124
      %v1314 = vpop.permute.xlu0 %1313
      %1315 = vrot.lane.b32.xlu0 %v985, 124
      %v1316 = vpop.permute.xlu0 %1315
      %v1320 = vsel %vm516, %v1311, 0
      %v1323 = vsel %vm516, %v1312, 0
      %1325 = vmatprep.subr.mxu0 0.0
      %1326 = vmatpush1.msra.mxu0 0.0
      %1327 = vmatprep.subr.mxu0 0.0
      %1328 = vmatpush1.msra.mxu0 0.0
      %1329 = vmatprep.subr.mxu0 0.0
      %1330 = vmatpush1.msra.mxu0 0.0
      %1331 = vmatprep.subr.mxu0 0.0
      %1332 = vmatpush1.msra.mxu0 0.0
      %1333 = vmatprep.subr.mxu0 0.0
      %1334 = vmatpush1.msra.mxu0 0.0
      %1335 = vmatprep.subr.mxu0 0.0
      %1336 = vmatpush1.msra.mxu0 0.0
      %1337 = vmatprep.subr.mxu0 0.0
      %1338 = vmatpush1.msra.mxu0 0.0
      %1339 = vmatprep.subr.mxu0 0.0
      %1340 = vmatpush1.msra.mxu0 0.0
      %1341 = vmatprep.subr.mxu0 0.0
      %1342 = vmatpush1.msra.mxu0 0.0
      %1343 = vmatprep.subr.mxu0 0.0
      %1344 = vmatpush1.msra.mxu0 0.0
      %1345 = vmatprep.subr.mxu0 0.0
      %1346 = vmatpush1.msra.mxu0 0.0
      %1347 = vmatprep.subr.mxu0 0.0
      %1348 = vmatpush1.msra.mxu0 0.0
      %1349 = vmatprep.subr.mxu0 0.0
      %1350 = vmatpush1.msra.mxu0 0.0
      %1351 = vmatprep.subr.mxu0 0.0
      %1352 = vmatpush1.msra.mxu0 0.0
      %1353 = vmatprep.subr.mxu0 0.0
      %1354 = vmatpush1.msra.mxu0 %v1316
      %1355 = vmatprep.subr.mxu0 0.0
      %1356 = vmatpush1.msra.mxu0 %v1314
      %1357 = vmatprep.subr.mxu0 0.0
      %1358 = vmatpush2.msra.mxu0 0.0
      %1359 = vmatprep.subr.mxu0 0.0
      %1360 = vmatpush2.msra.mxu0 0.0
      %1361 = vmatprep.subr.mxu0 0.0
      %1362 = vmatpush2.msra.mxu0 0.0
      %1363 = vmatprep.subr.mxu0 0.0
      %1364 = vmatpush2.msra.mxu0 0.0
      %1365 = vmatprep.subr.mxu0 0.0
      %1366 = vmatpush2.msra.mxu0 0.0
      %1367 = vmatprep.subr.mxu0 0.0
      %1368 = vmatpush2.msra.mxu0 0.0
      %1369 = vmatprep.subr.mxu0 0.0
      %1370 = vmatpush2.msra.mxu0 0.0
      %1371 = vmatprep.subr.mxu0 0.0
      %1372 = vmatpush2.msra.mxu0 0.0
      %1373 = vmatprep.subr.mxu0 0.0
      %1374 = vmatpush2.msra.mxu0 0.0
      %1375 = vmatprep.subr.mxu0 0.0
      %1376 = vmatpush2.msra.mxu0 0.0
      %1377 = vmatprep.subr.mxu0 0.0
      %1378 = vmatpush2.msra.mxu0 0.0
      %1379 = vmatprep.subr.mxu0 0.0
      %1380 = vmatpush2.msra.mxu0 0.0
      %1381 = vmatprep.subr.mxu0 0.0
      %1382 = vmatpush2.msra.mxu0 0.0
      %1383 = vmatprep.subr.mxu0 0.0
      %1384 = vmatpush2.msra.mxu0 0.0
      %1385 = vmatprep.subr.mxu0 0.0
      %1386 = vmatpush2.msra.mxu0 0.0
      %1387 = vmatprep.subr.mxu0 0.0
      %1388 = vmatpush2.msra.mxu0 0.0
      %1389 = vmatprep.mubr.f32.mxu0 0.0
      %1390 = vmatmul.mubr.f32.gmra.mxu0 %v1320
      %v1391 = vpop.f32.mrf.mxu0
      %v1392 = vadd.f32 0.0, %v1391
      %v1393 = vpop.f32.mrf.mxu0
      %1394 = vmatprep.mubr.f32.mxu0 0.0
      %1395 = vmatmul.mubr.f32.gmra.mxu0 %v1323
      %v1396 = vpop.f32.mrf.mxu0
      %v1397 = vadd.f32 0.0, %v1396
      %v1398 = vpop.f32.mrf.mxu0
      %1399 = vdwg.mxu0
      %1402 = vrot.lane.b32.xlu0 %v1392, 4
      %v1403 = vpop.permute.xlu0 %1402
      %1404 = vrot.lane.b32.xlu0 %v1397, 4
      %v1405 = vpop.permute.xlu0 %1404
      %v1408 = vsel %vm772, %v1223, %v1403
      %v1409 = vsel %vm772, %v1228, %v1405
      %v1410 = vld [vmem:[%s7] sm:$0x1]
      %v1412 = vlaneseq
      %v1413 = vshrl.u32 %v1412, 7
      %v1414 = vsub.s32 0, %v1413
      %v1415 = vrot.slane %v1410, %v1414
      %v1417 = vadd.f32 %v1408, %v1415
      %v1418 = vadd.f32 %v1409, %v1415
      %1419 = vmatprep.subr.mxu0 0.0
      %1420 = vmatpush1.msra.mxu0 0.0
      %1421 = vmatprep.subr.mxu0 0.0
      %1422 = vmatpush1.msra.mxu0 0.0
      %1423 = vmatprep.subr.mxu0 0.0
      %1424 = vmatpush1.msra.mxu0 0.0
      %1425 = vmatprep.subr.mxu0 0.0
      %1426 = vmatpush1.msra.mxu0 0.0
      %1427 = vmatprep.subr.mxu0 0.0
      %1428 = vmatpush1.msra.mxu0 0.0
      %1429 = vmatprep.subr.mxu0 0.0
      %1430 = vmatpush1.msra.mxu0 0.0
      %1431 = vmatprep.subr.mxu0 0.0
      %1432 = vmatpush1.msra.mxu0 0.0
      %1433 = vmatprep.subr.mxu0 0.0
      %1434 = vmatpush1.msra.mxu0 0.0
      %1435 = vmatprep.subr.mxu0 0.0
      %1436 = vmatpush1.msra.mxu0 0.0
      %1437 = vmatprep.subr.mxu0 0.0
      %1438 = vmatpush1.msra.mxu0 0.0
      %1439 = vmatprep.subr.mxu0 0.0
      %1440 = vmatpush1.msra.mxu0 0.0
      %1441 = vmatprep.subr.mxu0 0.0
      %1442 = vmatpush1.msra.mxu0 0.0
      %1443 = vmatprep.subr.mxu0 0.0
      %1444 = vmatpush1.msra.mxu0 0.0
      %1445 = vmatprep.subr.mxu0 0.0
      %1446 = vmatpush1.msra.mxu0 0.0
      %1447 = vmatprep.subr.mxu0 0.0
      %1448 = vmatpush1.msra.mxu0 %v901
      %1449 = vmatprep.subr.mxu0 0.0
      %1450 = vmatpush1.msra.mxu0 %v900
      %1451 = vmatprep.subr.mxu0 0.0
      %1452 = vmatpush2.msra.mxu0 0.0
      %1453 = vmatprep.subr.mxu0 0.0
      %1454 = vmatpush2.msra.mxu0 0.0
      %1455 = vmatprep.subr.mxu0 0.0
      %1456 = vmatpush2.msra.mxu0 0.0
      %1457 = vmatprep.subr.mxu0 0.0
      %1458 = vmatpush2.msra.mxu0 0.0
      %1459 = vmatprep.subr.mxu0 0.0
      %1460 = vmatpush2.msra.mxu0 0.0
      %1461 = vmatprep.subr.mxu0 0.0
      %1462 = vmatpush2.msra.mxu0 0.0
      %1463 = vmatprep.subr.mxu0 0.0
      %1464 = vmatpush2.msra.mxu0 0.0
      %1465 = vmatprep.subr.mxu0 0.0
      %1466 = vmatpush2.msra.mxu0 0.0
      %1467 = vmatprep.subr.mxu0 0.0
      %1468 = vmatpush2.msra.mxu0 0.0
      %1469 = vmatprep.subr.mxu0 0.0
      %1470 = vmatpush2.msra.mxu0 0.0
      %1471 = vmatprep.subr.mxu0 0.0
      %1472 = vmatpush2.msra.mxu0 0.0
      %1473 = vmatprep.subr.mxu0 0.0
      %1474 = vmatpush2.msra.mxu0 0.0
      %1475 = vmatprep.subr.mxu0 0.0
      %1476 = vmatpush2.msra.mxu0 0.0
      %1477 = vmatprep.subr.mxu0 0.0
      %1478 = vmatpush2.msra.mxu0 0.0
      %1479 = vmatprep.subr.mxu0 0.0
      %1480 = vmatpush2.msra.mxu0 0.0
      %1481 = vmatprep.subr.mxu0 0.0
      %1482 = vmatpush2.msra.mxu0 0.0
      %1483 = vmatprep.mubr.f32.mxu0 0.0
      %1484 = vmatmul.mubr.f32.gmra.mxu0 %v518
      %v1485 = vpop.f32.mrf.mxu0
      %v1486 = vadd.f32 0.0, %v1485
      %v1487 = vpop.f32.mrf.mxu0
      %1488 = vmatprep.mubr.f32.mxu0 0.0
      %1489 = vmatmul.mubr.f32.gmra.mxu0 %v521
      %v1490 = vpop.f32.mrf.mxu0
      %v1491 = vadd.f32 0.0, %v1490
      %v1492 = vpop.f32.mrf.mxu0
      %1493 = vdwg.mxu0
      %1494 = vmatprep.subr.mxu0 0.0
      %1495 = vmatpush1.msra.mxu0 0.0
      %1496 = vmatprep.subr.mxu0 0.0
      %1497 = vmatpush1.msra.mxu0 0.0
      %1498 = vmatprep.subr.mxu0 0.0
      %1499 = vmatpush1.msra.mxu0 0.0
      %1500 = vmatprep.subr.mxu0 0.0
      %1501 = vmatpush1.msra.mxu0 0.0
      %1502 = vmatprep.subr.mxu0 0.0
      %1503 = vmatpush1.msra.mxu0 0.0
      %1504 = vmatprep.subr.mxu0 0.0
      %1505 = vmatpush1.msra.mxu0 0.0
      %1506 = vmatprep.subr.mxu0 0.0
      %1507 = vmatpush1.msra.mxu0 0.0
      %1508 = vmatprep.subr.mxu0 0.0
      %1509 = vmatpush1.msra.mxu0 0.0
      %1510 = vmatprep.subr.mxu0 0.0
      %1511 = vmatpush1.msra.mxu0 0.0
      %1512 = vmatprep.subr.mxu0 0.0
      %1513 = vmatpush1.msra.mxu0 0.0
      %1514 = vmatprep.subr.mxu0 0.0
      %1515 = vmatpush1.msra.mxu0 0.0
      %1516 = vmatprep.subr.mxu0 0.0
      %1517 = vmatpush1.msra.mxu0 0.0
      %1518 = vmatprep.subr.mxu0 0.0
      %1519 = vmatpush1.msra.mxu0 0.0
      %1520 = vmatprep.subr.mxu0 0.0
      %1521 = vmatpush1.msra.mxu0 0.0
      %1522 = vmatprep.subr.mxu0 0.0
      %1523 = vmatpush1.msra.mxu0 %v1491
      %1524 = vmatprep.subr.mxu0 0.0
      %1525 = vmatpush1.msra.mxu0 %v1486
      %1526 = vmatprep.subr.mxu0 0.0
      %1527 = vmatpush2.msra.mxu0 0.0
      %1528 = vmatprep.subr.mxu0 0.0
      %1529 = vmatpush2.msra.mxu0 0.0
      %1530 = vmatprep.subr.mxu0 0.0
      %1531 = vmatpush2.msra.mxu0 0.0
      %1532 = vmatprep.subr.mxu0 0.0
      %1533 = vmatpush2.msra.mxu0 0.0
      %1534 = vmatprep.subr.mxu0 0.0
      %1535 = vmatpush2.msra.mxu0 0.0
      %1536 = vmatprep.subr.mxu0 0.0
      %1537 = vmatpush2.msra.mxu0 0.0
      %1538 = vmatprep.subr.mxu0 0.0
      %1539 = vmatpush2.msra.mxu0 0.0
      %1540 = vmatprep.subr.mxu0 0.0
      %1541 = vmatpush2.msra.mxu0 0.0
      %1542 = vmatprep.subr.mxu0 0.0
      %1543 = vmatpush2.msra.mxu0 0.0
      %1544 = vmatprep.subr.mxu0 0.0
      %1545 = vmatpush2.msra.mxu0 0.0
      %1546 = vmatprep.subr.mxu0 0.0
      %1547 = vmatpush2.msra.mxu0 0.0
      %1548 = vmatprep.subr.mxu0 0.0
      %1549 = vmatpush2.msra.mxu0 0.0
      %1550 = vmatprep.subr.mxu0 0.0
      %1551 = vmatpush2.msra.mxu0 0.0
      %1552 = vmatprep.subr.mxu0 0.0
      %1553 = vmatpush2.msra.mxu0 0.0
      %1554 = vmatprep.subr.mxu0 0.0
      %1555 = vmatpush2.msra.mxu0 0.0
      %1556 = vmatprep.subr.mxu0 0.0
      %1557 = vmatpush2.msra.mxu0 0.0
      %1558 = vmatprep.mubr.f32.mxu0 0.0
      %1559 = vmatmul.mubr.f32.gmra.mxu0 %v518
      %v1560 = vpop.f32.mrf.mxu0
      %v1561 = vadd.f32 0.0, %v1560
      %v1562 = vpop.f32.mrf.mxu0
      %1563 = vmatprep.mubr.f32.mxu0 0.0
      %1564 = vmatmul.mubr.f32.gmra.mxu0 %v521
      %v1565 = vpop.f32.mrf.mxu0
      %v1566 = vadd.f32 0.0, %v1565
      %v1567 = vpop.f32.mrf.mxu0
      %1568 = vdwg.mxu0
      %1569 = vmatprep.subr.mxu0 0.0
      %1570 = vmatpush1.msra.mxu0 0.0
      %1571 = vmatprep.subr.mxu0 0.0
      %1572 = vmatpush1.msra.mxu0 0.0
      %1573 = vmatprep.subr.mxu0 0.0
      %1574 = vmatpush1.msra.mxu0 0.0
      %1575 = vmatprep.subr.mxu0 0.0
      %1576 = vmatpush1.msra.mxu0 0.0
      %1577 = vmatprep.subr.mxu0 0.0
      %1578 = vmatpush1.msra.mxu0 0.0
      %1579 = vmatprep.subr.mxu0 0.0
      %1580 = vmatpush1.msra.mxu0 0.0
      %1581 = vmatprep.subr.mxu0 0.0
      %1582 = vmatpush1.msra.mxu0 0.0
      %1583 = vmatprep.subr.mxu0 0.0
      %1584 = vmatpush1.msra.mxu0 0.0
      %1585 = vmatprep.subr.mxu0 0.0
      %1586 = vmatpush1.msra.mxu0 0.0
      %1587 = vmatprep.subr.mxu0 0.0
      %1588 = vmatpush1.msra.mxu0 0.0
      %1589 = vmatprep.subr.mxu0 0.0
      %1590 = vmatpush1.msra.mxu0 0.0
      %1591 = vmatprep.subr.mxu0 0.0
      %1592 = vmatpush1.msra.mxu0 0.0
      %1593 = vmatprep.subr.mxu0 0.0
      %1594 = vmatpush1.msra.mxu0 0.0
      %1595 = vmatprep.subr.mxu0 0.0
      %1596 = vmatpush1.msra.mxu0 0.0
      %1597 = vmatprep.subr.mxu0 0.0
      %1598 = vmatpush1.msra.mxu0 %v1566
      %1599 = vmatprep.subr.mxu0 0.0
      %1600 = vmatpush1.msra.mxu0 %v1561
      %1601 = vmatprep.subr.mxu0 0.0
      %1602 = vmatpush2.msra.mxu0 0.0
      %1603 = vmatprep.subr.mxu0 0.0
      %1604 = vmatpush2.msra.mxu0 0.0
      %1605 = vmatprep.subr.mxu0 0.0
      %1606 = vmatpush2.msra.mxu0 0.0
      %1607 = vmatprep.subr.mxu0 0.0
      %1608 = vmatpush2.msra.mxu0 0.0
      %1609 = vmatprep.subr.mxu0 0.0
      %1610 = vmatpush2.msra.mxu0 0.0
      %1611 = vmatprep.subr.mxu0 0.0
      %1612 = vmatpush2.msra.mxu0 0.0
      %1613 = vmatprep.subr.mxu0 0.0
      %1614 = vmatpush2.msra.mxu0 0.0
      %1615 = vmatprep.subr.mxu0 0.0
      %1616 = vmatpush2.msra.mxu0 0.0
      %1617 = vmatprep.subr.mxu0 0.0
      %1618 = vmatpush2.msra.mxu0 0.0
      %1619 = vmatprep.subr.mxu0 0.0
      %1620 = vmatpush2.msra.mxu0 0.0
      %1621 = vmatprep.subr.mxu0 0.0
      %1622 = vmatpush2.msra.mxu0 0.0
      %1623 = vmatprep.subr.mxu0 0.0
      %1624 = vmatpush2.msra.mxu0 0.0
      %1625 = vmatprep.subr.mxu0 0.0
      %1626 = vmatpush2.msra.mxu0 0.0
      %1627 = vmatprep.subr.mxu0 0.0
      %1628 = vmatpush2.msra.mxu0 0.0
      %1629 = vmatprep.subr.mxu0 0.0
      %1630 = vmatpush2.msra.mxu0 0.0
      %1631 = vmatprep.subr.mxu0 0.0
      %1632 = vmatpush2.msra.mxu0 0.0
      %1633 = vmatprep.mubr.f32.mxu0 0.0
      %1634 = vmatmul.mubr.f32.gmra.mxu0 %v518
      %v1635 = vpop.f32.mrf.mxu0
      %v1636 = vadd.f32 0.0, %v1635
      %v1637 = vpop.f32.mrf.mxu0
      %1638 = vmatprep.mubr.f32.mxu0 0.0
      %1639 = vmatmul.mubr.f32.gmra.mxu0 %v521
      %v1640 = vpop.f32.mrf.mxu0
      %v1641 = vadd.f32 0.0, %v1640
      %v1642 = vpop.f32.mrf.mxu0
      %1643 = vdwg.mxu0
      %1646 = vrot.lane.b32.xlu0 %v1486, 4
      %v1647 = vpop.permute.xlu0 %1646
      %1648 = vrot.lane.b32.xlu0 %v1491, 4
      %v1649 = vpop.permute.xlu0 %1648
      %1654 = vrot.lane.b32.xlu0 %v1561, 8
      %v1655 = vpop.permute.xlu0 %1654
      %1656 = vrot.lane.b32.xlu0 %v1566, 8
      %v1657 = vpop.permute.xlu0 %1656
      %1662 = vrot.lane.b32.xlu0 %v1636, 12
      %v1663 = vpop.permute.xlu0 %1662
      %1664 = vrot.lane.b32.xlu0 %v1641, 12
      %v1665 = vpop.permute.xlu0 %1664
      %v1668 = vsel %vm772, %v900, %v1647
      %v1669 = vsel %vm772, %v901, %v1649
      %v1670 = vsel %vm775, %v1668, %v1655
      %v1671 = vsel %vm775, %v1669, %v1657
      %v1672 = vsel %vm778, %v1670, %v1663
      %v1673 = vsel %vm778, %v1671, %v1665
      %s1674 = scalar_lea.vmem %s3, 16
      %v1675 = vld [vmem:[%s1674] sm:$0xff]
      %v1676 = vld [vmem:[%s1674 + $0x8] sm:$0xff]
      %s1677 = scalar_lea.vmem %s4, 1
      %v1678 = vld [vmem:[%s1677] sm:$0x1]
      %v1680 = vlaneseq
      %v1681 = vshrl.u32 %v1680, 7
      %v1682 = vsub.s32 0, %v1681
      %v1683 = vrot.slane %v1678, %v1682
      %v1686 = vsel %vm516, %v1672, 0
      %v1689 = vsel %vm516, %v1673, 0
      %1691 = vmatprep.subr.mxu0 0.0
      %1692 = vmatpush1.msra.mxu0 0.0
      %1693 = vmatprep.subr.mxu0 0.0
      %1694 = vmatpush1.msra.mxu0 0.0
      %1695 = vmatprep.subr.mxu0 0.0
      %1696 = vmatpush1.msra.mxu0 0.0
      %1697 = vmatprep.subr.mxu0 0.0
      %1698 = vmatpush1.msra.mxu0 0.0
      %1699 = vmatprep.subr.mxu0 0.0
      %1700 = vmatpush1.msra.mxu0 0.0
      %1701 = vmatprep.subr.mxu0 0.0
      %1702 = vmatpush1.msra.mxu0 0.0
      %1703 = vmatprep.subr.mxu0 0.0
      %1704 = vmatpush1.msra.mxu0 0.0
      %1705 = vmatprep.subr.mxu0 0.0
      %1706 = vmatpush1.msra.mxu0 0.0
      %1707 = vmatprep.subr.mxu0 0.0
      %1708 = vmatpush1.msra.mxu0 0.0
      %1709 = vmatprep.subr.mxu0 0.0
      %1710 = vmatpush1.msra.mxu0 0.0
      %1711 = vmatprep.subr.mxu0 0.0
      %1712 = vmatpush1.msra.mxu0 0.0
      %1713 = vmatprep.subr.mxu0 0.0
      %1714 = vmatpush1.msra.mxu0 0.0
      %1715 = vmatprep.subr.mxu0 0.0
      %1716 = vmatpush1.msra.mxu0 0.0
      %1717 = vmatprep.subr.mxu0 0.0
      %1718 = vmatpush1.msra.mxu0 0.0
      %1719 = vmatprep.subr.mxu0 0.0
      %1720 = vmatpush1.msra.mxu0 %v1676
      %1721 = vmatprep.subr.mxu0 0.0
      %1722 = vmatpush1.msra.mxu0 %v1675
      %1723 = vmatprep.subr.mxu0 0.0
      %1724 = vmatpush2.msra.mxu0 0.0
      %1725 = vmatprep.subr.mxu0 0.0
      %1726 = vmatpush2.msra.mxu0 0.0
      %1727 = vmatprep.subr.mxu0 0.0
      %1728 = vmatpush2.msra.mxu0 0.0
      %1729 = vmatprep.subr.mxu0 0.0
      %1730 = vmatpush2.msra.mxu0 0.0
      %1731 = vmatprep.subr.mxu0 0.0
      %1732 = vmatpush2.msra.mxu0 0.0
      %1733 = vmatprep.subr.mxu0 0.0
      %1734 = vmatpush2.msra.mxu0 0.0
      %1735 = vmatprep.subr.mxu0 0.0
      %1736 = vmatpush2.msra.mxu0 0.0
      %1737 = vmatprep.subr.mxu0 0.0
      %1738 = vmatpush2.msra.mxu0 0.0
      %1739 = vmatprep.subr.mxu0 0.0
      %1740 = vmatpush2.msra.mxu0 0.0
      %1741 = vmatprep.subr.mxu0 0.0
      %1742 = vmatpush2.msra.mxu0 0.0
      %1743 = vmatprep.subr.mxu0 0.0
      %1744 = vmatpush2.msra.mxu0 0.0
      %1745 = vmatprep.subr.mxu0 0.0
      %1746 = vmatpush2.msra.mxu0 0.0
      %1747 = vmatprep.subr.mxu0 0.0
      %1748 = vmatpush2.msra.mxu0 0.0
      %1749 = vmatprep.subr.mxu0 0.0
      %1750 = vmatpush2.msra.mxu0 0.0
      %1751 = vmatprep.subr.mxu0 0.0
      %1752 = vmatpush2.msra.mxu0 0.0
      %1753 = vmatprep.subr.mxu0 0.0
      %1754 = vmatpush2.msra.mxu0 0.0
      %1755 = vmatprep.mubr.f32.mxu0 0.0
      %1756 = vmatmul.mubr.f32.gmra.mxu0 %v1686
      %v1757 = vpop.f32.mrf.mxu0
      %v1758 = vadd.f32 %v1683, %v1757
      %v1759 = vpop.f32.mrf.mxu0
      %1760 = vmatprep.mubr.f32.mxu0 0.0
      %1761 = vmatmul.mubr.f32.gmra.mxu0 %v1689
      %v1762 = vpop.f32.mrf.mxu0
      %v1763 = vadd.f32 %v1683, %v1762
      %v1764 = vpop.f32.mrf.mxu0
      %1765 = vdwg.mxu0
      %v1766 = vadd.f32 %v900, %v1758
      %v1767 = vadd.f32 %v901, %v1763
      %v1768 = vsel %vm772, %v1766, 0.0
      %v1769 = vsel %vm772, %v1767, 0.0
      %v1770 = vadd.f32 %v1768, %v1769
      %v1771 = vrot.slane %v1770, 4
      %v1772 = vadd.f32 %v1770, %v1771
      %v1773 = vrot.slane %v1772, 2
      %v1774 = vadd.f32 %v1772, %v1773
      %v1775 = vrot.slane %v1774, 1
      %v1776 = vadd.f32 %v1774, %v1775
      %v1777 = vmul.f32 %v1776, %v882
      %v1778 = vsub.f32 %v1766, %v1777
      %v1779 = vsub.f32 %v1767, %v1777
      %v1780 = vmul.f32 %v1778, %v1778
      %v1781 = vmul.f32 %v1779, %v1779
      %v1782 = vsel %vm772, %v1780, 0.0
      %v1783 = vsel %vm772, %v1781, 0.0
      %v1784 = vadd.f32 %v1782, %v1783
      %v1785 = vrot.slane %v1784, 4
      %v1786 = vadd.f32 %v1784, %v1785
      %v1787 = vrot.slane %v1786, 2
      %v1788 = vadd.f32 %v1786, %v1787
      %v1789 = vrot.slane %v1788, 1
      %v1790 = vadd.f32 %v1788, %v1789
      %v1791 = vmul.f32 %v1790, %v882
      %v1792 = vadd.f32 %v1791, 1e-05
      %v1793 = vrsqrt.pop %v1792
      %v1794 = vmul.f32 %v1778, %v1793
      %v1795 = vmul.f32 %v1779, %v1793
      %s1796 = scalar_lea.vmem %s5, 4
      %v1797 = vld [vmem:[%s1796] sm:$0xf]
      %v1799 = vsel %vm772, %v1794, 0
      %v1802 = vsel %vm772, %v1795, 0
      %v1805 = vsel %vm909, %v1797, 0
      %1807 = vmatprep.subr.mxu0 0.0
      %1808 = vmatpush1.msra.mxu0 0.0
      %1809 = vmatprep.subr.mxu0 0.0
      %1810 = vmatpush1.msra.mxu0 0.0
      %1811 = vmatprep.subr.mxu0 0.0
      %1812 = vmatpush1.msra.mxu0 0.0
      %1813 = vmatprep.subr.mxu0 0.0
      %1814 = vmatpush1.msra.mxu0 0.0
      %1815 = vmatprep.subr.mxu0 0.0
      %1816 = vmatpush1.msra.mxu0 0.0
      %1817 = vmatprep.subr.mxu0 0.0
      %1818 = vmatpush1.msra.mxu0 0.0
      %1819 = vmatprep.subr.mxu0 0.0
      %1820 = vmatpush1.msra.mxu0 0.0
      %1821 = vmatprep.subr.mxu0 0.0
      %1822 = vmatpush1.msra.mxu0 0.0
      %1823 = vmatprep.subr.mxu0 0.0
      %1824 = vmatpush1.msra.mxu0 0.0
      %1825 = vmatprep.subr.mxu0 0.0
      %1826 = vmatpush1.msra.mxu0 0.0
      %1827 = vmatprep.subr.mxu0 0.0
      %1828 = vmatpush1.msra.mxu0 0.0
      %1829 = vmatprep.subr.mxu0 0.0
      %1830 = vmatpush1.msra.mxu0 0.0
      %1831 = vmatprep.subr.mxu0 0.0
      %1832 = vmatpush1.msra.mxu0 0.0
      %1833 = vmatprep.subr.mxu0 0.0
      %1834 = vmatpush1.msra.mxu0 0.0
      %1835 = vmatprep.subr.mxu0 0.0
      %1836 = vmatpush1.msra.mxu0 0.0
      %1837 = vmatprep.subr.mxu0 0.0
      %1838 = vmatpush1.msra.mxu0 %v1805
      %1839 = vmatprep.subr.mxu0 0.0
      %1840 = vmatpush2.msra.mxu0 0.0
      %1841 = vmatprep.subr.mxu0 0.0
      %1842 = vmatpush2.msra.mxu0 0.0
      %1843 = vmatprep.subr.mxu0 0.0
      %1844 = vmatpush2.msra.mxu0 0.0
      %1845 = vmatprep.subr.mxu0 0.0
      %1846 = vmatpush2.msra.mxu0 0.0
      %1847 = vmatprep.subr.mxu0 0.0
      %1848 = vmatpush2.msra.mxu0 0.0
      %1849 = vmatprep.subr.mxu0 0.0
      %1850 = vmatpush2.msra.mxu0 0.0
      %1851 = vmatprep.subr.mxu0 0.0
      %1852 = vmatpush2.msra.mxu0 0.0
      %1853 = vmatprep.subr.mxu0 0.0
      %1854 = vmatpush2.msra.mxu0 0.0
      %1855 = vmatprep.subr.mxu0 0.0
      %1856 = vmatpush2.msra.mxu0 0.0
      %1857 = vmatprep.subr.mxu0 0.0
      %1858 = vmatpush2.msra.mxu0 0.0
      %1859 = vmatprep.subr.mxu0 0.0
      %1860 = vmatpush2.msra.mxu0 0.0
      %1861 = vmatprep.subr.mxu0 0.0
      %1862 = vmatpush2.msra.mxu0 0.0
      %1863 = vmatprep.subr.mxu0 0.0
      %1864 = vmatpush2.msra.mxu0 0.0
      %1865 = vmatprep.subr.mxu0 0.0
      %1866 = vmatpush2.msra.mxu0 0.0
      %1867 = vmatprep.subr.mxu0 0.0
      %1868 = vmatpush2.msra.mxu0 0.0
      %1869 = vmatprep.subr.mxu0 0.0
      %1870 = vmatpush2.msra.mxu0 0.0
      %1871 = vmatprep.mubr.f32.mxu0 0.0
      %1872 = vmatmul.mubr.f32.gmra.mxu0 %v1799
      %v1873 = vpop.f32.mrf.mxu0
      %v1874 = vadd.f32 0.0, %v1873
      %v1875 = vpop.f32.mrf.mxu0
      %1876 = vmatprep.mubr.f32.mxu0 0.0
      %1877 = vmatmul.mubr.f32.gmra.mxu0 %v1802
      %v1878 = vpop.f32.mrf.mxu0
      %v1879 = vadd.f32 0.0, %v1878
      %v1880 = vpop.f32.mrf.mxu0
      %1881 = vdwg.mxu0
      %s1882 = scalar_lea.vmem %s6, 8
      %v1883 = vld [vmem:[%s1882] sm:$0xff]
      %v1885 = vsel %vm775, %v1874, 0
      %v1888 = vsel %vm775, %v1879, 0
      %1890 = vmatprep.subr.mxu0 0.0
      %1891 = vmatpush1.msra.mxu0 0.0
      %1892 = vmatprep.subr.mxu0 0.0
      %1893 = vmatpush1.msra.mxu0 0.0
      %1894 = vmatprep.subr.mxu0 0.0
      %1895 = vmatpush1.msra.mxu0 0.0
      %1896 = vmatprep.subr.mxu0 0.0
      %1897 = vmatpush1.msra.mxu0 0.0
      %1898 = vmatprep.subr.mxu0 0.0
      %1899 = vmatpush1.msra.mxu0 0.0
      %1900 = vmatprep.subr.mxu0 0.0
      %1901 = vmatpush1.msra.mxu0 0.0
      %1902 = vmatprep.subr.mxu0 0.0
      %1903 = vmatpush1.msra.mxu0 0.0
      %1904 = vmatprep.subr.mxu0 0.0
      %1905 = vmatpush1.msra.mxu0 0.0
      %1906 = vmatprep.subr.mxu0 0.0
      %1907 = vmatpush1.msra.mxu0 0.0
      %1908 = vmatprep.subr.mxu0 0.0
      %1909 = vmatpush1.msra.mxu0 0.0
      %1910 = vmatprep.subr.mxu0 0.0
      %1911 = vmatpush1.msra.mxu0 0.0
      %1912 = vmatprep.subr.mxu0 0.0
      %1913 = vmatpush1.msra.mxu0 0.0
      %1914 = vmatprep.subr.mxu0 0.0
      %1915 = vmatpush1.msra.mxu0 0.0
      %1916 = vmatprep.subr.mxu0 0.0
      %1917 = vmatpush1.msra.mxu0 0.0
      %1918 = vmatprep.subr.mxu0 0.0
      %1919 = vmatpush1.msra.mxu0 0.0
      %1920 = vmatprep.subr.mxu0 0.0
      %1921 = vmatpush1.msra.mxu0 %v1883
      %1922 = vmatprep.subr.mxu0 0.0
      %1923 = vmatpush2.msra.mxu0 0.0
      %1924 = vmatprep.subr.mxu0 0.0
      %1925 = vmatpush2.msra.mxu0 0.0
      %1926 = vmatprep.subr.mxu0 0.0
      %1927 = vmatpush2.msra.mxu0 0.0
      %1928 = vmatprep.subr.mxu0 0.0
      %1929 = vmatpush2.msra.mxu0 0.0
      %1930 = vmatprep.subr.mxu0 0.0
      %1931 = vmatpush2.msra.mxu0 0.0
      %1932 = vmatprep.subr.mxu0 0.0
      %1933 = vmatpush2.msra.mxu0 0.0
      %1934 = vmatprep.subr.mxu0 0.0
      %1935 = vmatpush2.msra.mxu0 0.0
      %1936 = vmatprep.subr.mxu0 0.0
      %1937 = vmatpush2.msra.mxu0 0.0
      %1938 = vmatprep.subr.mxu0 0.0
      %1939 = vmatpush2.msra.mxu0 0.0
      %1940 = vmatprep.subr.mxu0 0.0
      %1941 = vmatpush2.msra.mxu0 0.0
      %1942 = vmatprep.subr.mxu0 0.0
      %1943 = vmatpush2.msra.mxu0 0.0
      %1944 = vmatprep.subr.mxu0 0.0
      %1945 = vmatpush2.msra.mxu0 0.0
      %1946 = vmatprep.subr.mxu0 0.0
      %1947 = vmatpush2.msra.mxu0 0.0
      %1948 = vmatprep.subr.mxu0 0.0
      %1949 = vmatpush2.msra.mxu0 0.0
      %1950 = vmatprep.subr.mxu0 0.0
      %1951 = vmatpush2.msra.mxu0 0.0
      %1952 = vmatprep.subr.mxu0 0.0
      %1953 = vmatpush2.msra.mxu0 0.0
      %1954 = vmatprep.mubr.f32.mxu0 0.0
      %1955 = vmatmul.mubr.f32.gmra.mxu0 %v1885
      %v1956 = vpop.f32.mrf.mxu0
      %v1957 = vadd.f32 0.0, %v1956
      %v1958 = vpop.f32.mrf.mxu0
      %1959 = vmatprep.mubr.f32.mxu0 0.0
      %1960 = vmatmul.mubr.f32.gmra.mxu0 %v1888
      %v1961 = vpop.f32.mrf.mxu0
      %v1962 = vadd.f32 0.0, %v1961
      %v1963 = vpop.f32.mrf.mxu0
      %1964 = vdwg.mxu0
      %1965 = vxpose.xlu0.b32.start [1/16] %v1957, 128
      %1966 = vxpose.xlu0.b32.cont [2/16] %v1962, 128
      %1967 = vxpose.xlu0.b32.cont [3/16] 0.0, 128
      %1968 = vxpose.xlu0.b32.cont [4/16] 0.0, 128
      %1969 = vxpose.xlu0.b32.cont [5/16] 0.0, 128
      %1970 = vxpose.xlu0.b32.cont [6/16] 0.0, 128
      %1971 = vxpose.xlu0.b32.cont [7/16] 0.0, 128
      %1972 = vxpose.xlu0.b32.cont [8/16] 0.0, 128
      %1973 = vxpose.xlu0.b32.cont [9/16] 0.0, 128
      %1974 = vxpose.xlu0.b32.cont [10/16] 0.0, 128
      %1975 = vxpose.xlu0.b32.cont [11/16] 0.0, 128
      %1976 = vxpose.xlu0.b32.cont [12/16] 0.0, 128
      %1977 = vxpose.xlu0.b32.cont [13/16] 0.0, 128
      %1978 = vxpose.xlu0.b32.cont [14/16] 0.0, 128
      %1979 = vxpose.xlu0.b32.cont [15/16] 0.0, 128
      %1980 = vxpose.xlu0.b32.end [16/16] 0.0, 128
      %v1981 = vpop.trf.xlu0
      %v1982 = vpop.trf.xlu0
      %v1983 = vpop.trf.xlu0
      %v1984 = vpop.trf.xlu0
      %v1985 = vpop.trf.xlu0
      %v1986 = vpop.trf.xlu0
      %v1987 = vpop.trf.xlu0
      %v1988 = vpop.trf.xlu0
      %v1989 = vpop.trf.xlu0
      %v1990 = vpop.trf.xlu0
      %v1991 = vpop.trf.xlu0
      %v1992 = vpop.trf.xlu0
      %v1993 = vpop.trf.xlu0
      %v1994 = vpop.trf.xlu0
      %v1995 = vpop.trf.xlu0
      %v1996 = vpop.trf.xlu0
      %1998 = vset.pattern.permute.xlu0 2
      %1999 = vperm.xlu0 %1998, %v1957
      %v2000 = vpop.permute.xlu0 %1999
      %2003 = vset.pattern.permute.xlu0 2
      %2004 = vperm.xlu0 %2003, %v1962
      %v2005 = vpop.permute.xlu0 %2004
      %v2007 = vlaneseq
      %v2008 = vshrl.u32 %v2007, 7
      %v2009 = vsub.s32 0, %v2008
      %v2010 = vrot.slane %v1981, %v2009
      %v2011 = vadd.f32 %v2000, %v2010
      %v2012 = vadd.f32 %v2005, %v2010
      %vm2013 = vcmp.gt.f32.partialorder %v2011, 0.0
      %vm2014 = vcmp.gt.f32.partialorder %v2012, 0.0
      %v2015 = vmul.f32 %v2011, 0.2
      %v2016 = vmul.f32 %v2012, 0.2
      %v2017 = vsel %vm2013, %v2011, %v2015
      %v2018 = vsel %vm2014, %v2012, %v2016
      %v2019 = vsel %vm1124, %v2017, -1e+30
      %v2020 = vsel %vm1125, %v2018, -1e+30
      %v2021 = vsel %vm516, %v2019, -inf
      %2022 = vmax.xlane.f32.xlu0 %v2021
      %v2023 = vpop.xlane.xlu0 %2022
      %v2024 = vsel %vm516, %v2020, -inf
      %2025 = vmax.xlane.f32.xlu0 %v2024
      %v2026 = vpop.xlane.xlu0 %2025
      %v2027 = vsub.f32 %v2019, %v2023
      %v2028 = vsub.f32 %v2020, %v2026
      %v2029 = vmul.f32 %v2027, 1.442695
      %v2030 = vpow.pop %v2029
      %v2031 = vmul.f32 %v2028, 1.442695
      %v2032 = vpow.pop %v2031
      %v2033 = vsel %vm516, %v2030, 0.0
      %2034 = vadd.xlane.f32.xlu0 %v2033
      %v2035 = vpop.xlane.xlu0 %2034
      %v2036 = vsel %vm516, %v2032, 0.0
      %2037 = vadd.xlane.f32.xlu0 %v2036
      %v2038 = vpop.xlane.xlu0 %2037
      %v2039 = vrcp.pop %v2035
      %v2040 = vrcp.pop %v2038
      %v2041 = vmul.f32 %v2030, %v2039
      %v2042 = vmul.f32 %v2032, %v2040
      %v2044 = vsel %vm516, %v2041, 0
      %v2047 = vsel %vm516, %v2042, 0
      %2049 = vmatprep.subr.mxu0 0.0
      %2050 = vmatpush1.msra.mxu0 0.0
      %2051 = vmatprep.subr.mxu0 0.0
      %2052 = vmatpush1.msra.mxu0 0.0
      %2053 = vmatprep.subr.mxu0 0.0
      %2054 = vmatpush1.msra.mxu0 0.0
      %2055 = vmatprep.subr.mxu0 0.0
      %2056 = vmatpush1.msra.mxu0 0.0
      %2057 = vmatprep.subr.mxu0 0.0
      %2058 = vmatpush1.msra.mxu0 0.0
      %2059 = vmatprep.subr.mxu0 0.0
      %2060 = vmatpush1.msra.mxu0 0.0
      %2061 = vmatprep.subr.mxu0 0.0
      %2062 = vmatpush1.msra.mxu0 0.0
      %2063 = vmatprep.subr.mxu0 0.0
      %2064 = vmatpush1.msra.mxu0 0.0
      %2065 = vmatprep.subr.mxu0 0.0
      %2066 = vmatpush1.msra.mxu0 0.0
      %2067 = vmatprep.subr.mxu0 0.0
      %2068 = vmatpush1.msra.mxu0 0.0
      %2069 = vmatprep.subr.mxu0 0.0
      %2070 = vmatpush1.msra.mxu0 0.0
      %2071 = vmatprep.subr.mxu0 0.0
      %2072 = vmatpush1.msra.mxu0 0.0
      %2073 = vmatprep.subr.mxu0 0.0
      %2074 = vmatpush1.msra.mxu0 0.0
      %2075 = vmatprep.subr.mxu0 0.0
      %2076 = vmatpush1.msra.mxu0 0.0
      %2077 = vmatprep.subr.mxu0 0.0
      %2078 = vmatpush1.msra.mxu0 %v1879
      %2079 = vmatprep.subr.mxu0 0.0
      %2080 = vmatpush1.msra.mxu0 %v1874
      %2081 = vmatprep.subr.mxu0 0.0
      %2082 = vmatpush2.msra.mxu0 0.0
      %2083 = vmatprep.subr.mxu0 0.0
      %2084 = vmatpush2.msra.mxu0 0.0
      %2085 = vmatprep.subr.mxu0 0.0
      %2086 = vmatpush2.msra.mxu0 0.0
      %2087 = vmatprep.subr.mxu0 0.0
      %2088 = vmatpush2.msra.mxu0 0.0
      %2089 = vmatprep.subr.mxu0 0.0
      %2090 = vmatpush2.msra.mxu0 0.0
      %2091 = vmatprep.subr.mxu0 0.0
      %2092 = vmatpush2.msra.mxu0 0.0
      %2093 = vmatprep.subr.mxu0 0.0
      %2094 = vmatpush2.msra.mxu0 0.0
      %2095 = vmatprep.subr.mxu0 0.0
      %2096 = vmatpush2.msra.mxu0 0.0
      %2097 = vmatprep.subr.mxu0 0.0
      %2098 = vmatpush2.msra.mxu0 0.0
      %2099 = vmatprep.subr.mxu0 0.0
      %2100 = vmatpush2.msra.mxu0 0.0
      %2101 = vmatprep.subr.mxu0 0.0
      %2102 = vmatpush2.msra.mxu0 0.0
      %2103 = vmatprep.subr.mxu0 0.0
      %2104 = vmatpush2.msra.mxu0 0.0
      %2105 = vmatprep.subr.mxu0 0.0
      %2106 = vmatpush2.msra.mxu0 0.0
      %2107 = vmatprep.subr.mxu0 0.0
      %2108 = vmatpush2.msra.mxu0 0.0
      %2109 = vmatprep.subr.mxu0 0.0
      %2110 = vmatpush2.msra.mxu0 0.0
      %2111 = vmatprep.subr.mxu0 0.0
      %2112 = vmatpush2.msra.mxu0 0.0
      %2113 = vmatprep.mubr.f32.mxu0 0.0
      %2114 = vmatmul.mubr.f32.gmra.mxu0 %v2044
      %v2115 = vpop.f32.mrf.mxu0
      %v2116 = vadd.f32 0.0, %v2115
      %v2117 = vpop.f32.mrf.mxu0
      %2118 = vmatprep.mubr.f32.mxu0 0.0
      %2119 = vmatmul.mubr.f32.gmra.mxu0 %v2047
      %v2120 = vpop.f32.mrf.mxu0
      %v2121 = vadd.f32 0.0, %v2120
      %v2122 = vpop.f32.mrf.mxu0
      %2123 = vdwg.mxu0
      %2124 = vrot.lane.b32.xlu0 %v1957, 127
      %v2125 = vpop.permute.xlu0 %2124
      %2126 = vrot.lane.b32.xlu0 %v1962, 127
      %v2127 = vpop.permute.xlu0 %2126
      %2130 = vxpose.xlu0.b32.start [1/16] %v2125, 128
      %2131 = vxpose.xlu0.b32.cont [2/16] %v2127, 128
      %2132 = vxpose.xlu0.b32.cont [3/16] 0.0, 128
      %2133 = vxpose.xlu0.b32.cont [4/16] 0.0, 128
      %2134 = vxpose.xlu0.b32.cont [5/16] 0.0, 128
      %2135 = vxpose.xlu0.b32.cont [6/16] 0.0, 128
      %2136 = vxpose.xlu0.b32.cont [7/16] 0.0, 128
      %2137 = vxpose.xlu0.b32.cont [8/16] 0.0, 128
      %2138 = vxpose.xlu0.b32.cont [9/16] 0.0, 128
      %2139 = vxpose.xlu0.b32.cont [10/16] 0.0, 128
      %2140 = vxpose.xlu0.b32.cont [11/16] 0.0, 128
      %2141 = vxpose.xlu0.b32.cont [12/16] 0.0, 128
      %2142 = vxpose.xlu0.b32.cont [13/16] 0.0, 128
      %2143 = vxpose.xlu0.b32.cont [14/16] 0.0, 128
      %2144 = vxpose.xlu0.b32.cont [15/16] 0.0, 128
      %2145 = vxpose.xlu0.b32.end [16/16] 0.0, 128
      %v2146 = vpop.trf.xlu0
      %v2147 = vpop.trf.xlu0
      %v2148 = vpop.trf.xlu0
      %v2149 = vpop.trf.xlu0
      %v2150 = vpop.trf.xlu0
      %v2151 = vpop.trf.xlu0
      %v2152 = vpop.trf.xlu0
      %v2153 = vpop.trf.xlu0
      %v2154 = vpop.trf.xlu0
      %v2155 = vpop.trf.xlu0
      %v2156 = vpop.trf.xlu0
      %v2157 = vpop.trf.xlu0
      %v2158 = vpop.trf.xlu0
      %v2159 = vpop.trf.xlu0
      %v2160 = vpop.trf.xlu0
      %v2161 = vpop.trf.xlu0
      %2162 = vset.pattern.permute.xlu0 3
      %2163 = vperm.xlu0 %2162, %v1957
      %v2164 = vpop.permute.xlu0 %2163
      %2166 = vset.pattern.permute.xlu0 3
      %2167 = vperm.xlu0 %2166, %v1962
      %v2168 = vpop.permute.xlu0 %2167
      %v2170 = vlaneseq
      %v2171 = vshrl.u32 %v2170, 7
      %v2172 = vsub.s32 0, %v2171
      %v2173 = vrot.slane %v2146, %v2172
      %v2174 = vadd.f32 %v2164, %v2173
      %v2175 = vadd.f32 %v2168, %v2173
      %vm2176 = vcmp.gt.f32.partialorder %v2174, 0.0
      %vm2177 = vcmp.gt.f32.partialorder %v2175, 0.0
      %v2178 = vmul.f32 %v2174, 0.2
      %v2179 = vmul.f32 %v2175, 0.2
      %v2180 = vsel %vm2176, %v2174, %v2178
      %v2181 = vsel %vm2177, %v2175, %v2179
      %v2182 = vsel %vm1124, %v2180, -1e+30
      %v2183 = vsel %vm1125, %v2181, -1e+30
      %v2184 = vsel %vm516, %v2182, -inf
      %2185 = vmax.xlane.f32.xlu0 %v2184
      %v2186 = vpop.xlane.xlu0 %2185
      %v2187 = vsel %vm516, %v2183, -inf
      %2188 = vmax.xlane.f32.xlu0 %v2187
      %v2189 = vpop.xlane.xlu0 %2188
      %v2190 = vsub.f32 %v2182, %v2186
      %v2191 = vsub.f32 %v2183, %v2189
      %v2192 = vmul.f32 %v2190, 1.442695
      %v2193 = vpow.pop %v2192
      %v2194 = vmul.f32 %v2191, 1.442695
      %v2195 = vpow.pop %v2194
      %v2196 = vsel %vm516, %v2193, 0.0
      %2197 = vadd.xlane.f32.xlu0 %v2196
      %v2198 = vpop.xlane.xlu0 %2197
      %v2199 = vsel %vm516, %v2195, 0.0
      %2200 = vadd.xlane.f32.xlu0 %v2199
      %v2201 = vpop.xlane.xlu0 %2200
      %v2202 = vrcp.pop %v2198
      %v2203 = vrcp.pop %v2201
      %v2204 = vmul.f32 %v2193, %v2202
      %v2205 = vmul.f32 %v2195, %v2203
      %2206 = vrot.lane.b32.xlu0 %v1874, 124
      %v2207 = vpop.permute.xlu0 %2206
      %2208 = vrot.lane.b32.xlu0 %v1879, 124
      %v2209 = vpop.permute.xlu0 %2208
      %v2213 = vsel %vm516, %v2204, 0
      %v2216 = vsel %vm516, %v2205, 0
      %2218 = vmatprep.subr.mxu0 0.0
      %2219 = vmatpush1.msra.mxu0 0.0
      %2220 = vmatprep.subr.mxu0 0.0
      %2221 = vmatpush1.msra.mxu0 0.0
      %2222 = vmatprep.subr.mxu0 0.0
      %2223 = vmatpush1.msra.mxu0 0.0
      %2224 = vmatprep.subr.mxu0 0.0
      %2225 = vmatpush1.msra.mxu0 0.0
      %2226 = vmatprep.subr.mxu0 0.0
      %2227 = vmatpush1.msra.mxu0 0.0
      %2228 = vmatprep.subr.mxu0 0.0
      %2229 = vmatpush1.msra.mxu0 0.0
      %2230 = vmatprep.subr.mxu0 0.0
      %2231 = vmatpush1.msra.mxu0 0.0
      %2232 = vmatprep.subr.mxu0 0.0
      %2233 = vmatpush1.msra.mxu0 0.0
      %2234 = vmatprep.subr.mxu0 0.0
      %2235 = vmatpush1.msra.mxu0 0.0
      %2236 = vmatprep.subr.mxu0 0.0
      %2237 = vmatpush1.msra.mxu0 0.0
      %2238 = vmatprep.subr.mxu0 0.0
      %2239 = vmatpush1.msra.mxu0 0.0
      %2240 = vmatprep.subr.mxu0 0.0
      %2241 = vmatpush1.msra.mxu0 0.0
      %2242 = vmatprep.subr.mxu0 0.0
      %2243 = vmatpush1.msra.mxu0 0.0
      %2244 = vmatprep.subr.mxu0 0.0
      %2245 = vmatpush1.msra.mxu0 0.0
      %2246 = vmatprep.subr.mxu0 0.0
      %2247 = vmatpush1.msra.mxu0 %v2209
      %2248 = vmatprep.subr.mxu0 0.0
      %2249 = vmatpush1.msra.mxu0 %v2207
      %2250 = vmatprep.subr.mxu0 0.0
      %2251 = vmatpush2.msra.mxu0 0.0
      %2252 = vmatprep.subr.mxu0 0.0
      %2253 = vmatpush2.msra.mxu0 0.0
      %2254 = vmatprep.subr.mxu0 0.0
      %2255 = vmatpush2.msra.mxu0 0.0
      %2256 = vmatprep.subr.mxu0 0.0
      %2257 = vmatpush2.msra.mxu0 0.0
      %2258 = vmatprep.subr.mxu0 0.0
      %2259 = vmatpush2.msra.mxu0 0.0
      %2260 = vmatprep.subr.mxu0 0.0
      %2261 = vmatpush2.msra.mxu0 0.0
      %2262 = vmatprep.subr.mxu0 0.0
      %2263 = vmatpush2.msra.mxu0 0.0
      %2264 = vmatprep.subr.mxu0 0.0
      %2265 = vmatpush2.msra.mxu0 0.0
      %2266 = vmatprep.subr.mxu0 0.0
      %2267 = vmatpush2.msra.mxu0 0.0
      %2268 = vmatprep.subr.mxu0 0.0
      %2269 = vmatpush2.msra.mxu0 0.0
      %2270 = vmatprep.subr.mxu0 0.0
      %2271 = vmatpush2.msra.mxu0 0.0
      %2272 = vmatprep.subr.mxu0 0.0
      %2273 = vmatpush2.msra.mxu0 0.0
      %2274 = vmatprep.subr.mxu0 0.0
      %2275 = vmatpush2.msra.mxu0 0.0
      %2276 = vmatprep.subr.mxu0 0.0
      %2277 = vmatpush2.msra.mxu0 0.0
      %2278 = vmatprep.subr.mxu0 0.0
      %2279 = vmatpush2.msra.mxu0 0.0
      %2280 = vmatprep.subr.mxu0 0.0
      %2281 = vmatpush2.msra.mxu0 0.0
      %2282 = vmatprep.mubr.f32.mxu0 0.0
      %2283 = vmatmul.mubr.f32.gmra.mxu0 %v2213
      %v2284 = vpop.f32.mrf.mxu0
      %v2285 = vadd.f32 0.0, %v2284
      %v2286 = vpop.f32.mrf.mxu0
      %2287 = vmatprep.mubr.f32.mxu0 0.0
      %2288 = vmatmul.mubr.f32.gmra.mxu0 %v2216
      %v2289 = vpop.f32.mrf.mxu0
      %v2290 = vadd.f32 0.0, %v2289
      %v2291 = vpop.f32.mrf.mxu0
      %2292 = vdwg.mxu0
      %2295 = vrot.lane.b32.xlu0 %v2285, 4
      %v2296 = vpop.permute.xlu0 %2295
      %2297 = vrot.lane.b32.xlu0 %v2290, 4
      %v2298 = vpop.permute.xlu0 %2297
      %v2301 = vsel %vm772, %v2116, %v2296
      %v2302 = vsel %vm772, %v2121, %v2298
      %s2303 = scalar_lea.vmem %s7, 1
      %v2304 = vld [vmem:[%s2303] sm:$0x1]
      %v2306 = vlaneseq
      %v2307 = vshrl.u32 %v2306, 7
      %v2308 = vsub.s32 0, %v2307
      %v2309 = vrot.slane %v2304, %v2308
      %v2311 = vadd.f32 %v2301, %v2309
      %v2312 = vadd.f32 %v2302, %v2309
      %2313 = vmatprep.subr.mxu0 0.0
      %2314 = vmatpush1.msra.mxu0 0.0
      %2315 = vmatprep.subr.mxu0 0.0
      %2316 = vmatpush1.msra.mxu0 0.0
      %2317 = vmatprep.subr.mxu0 0.0
      %2318 = vmatpush1.msra.mxu0 0.0
      %2319 = vmatprep.subr.mxu0 0.0
      %2320 = vmatpush1.msra.mxu0 0.0
      %2321 = vmatprep.subr.mxu0 0.0
      %2322 = vmatpush1.msra.mxu0 0.0
      %2323 = vmatprep.subr.mxu0 0.0
      %2324 = vmatpush1.msra.mxu0 0.0
      %2325 = vmatprep.subr.mxu0 0.0
      %2326 = vmatpush1.msra.mxu0 0.0
      %2327 = vmatprep.subr.mxu0 0.0
      %2328 = vmatpush1.msra.mxu0 0.0
      %2329 = vmatprep.subr.mxu0 0.0
      %2330 = vmatpush1.msra.mxu0 0.0
      %2331 = vmatprep.subr.mxu0 0.0
      %2332 = vmatpush1.msra.mxu0 0.0
      %2333 = vmatprep.subr.mxu0 0.0
      %2334 = vmatpush1.msra.mxu0 0.0
      %2335 = vmatprep.subr.mxu0 0.0
      %2336 = vmatpush1.msra.mxu0 0.0
      %2337 = vmatprep.subr.mxu0 0.0
      %2338 = vmatpush1.msra.mxu0 0.0
      %2339 = vmatprep.subr.mxu0 0.0
      %2340 = vmatpush1.msra.mxu0 0.0
      %2341 = vmatprep.subr.mxu0 0.0
      %2342 = vmatpush1.msra.mxu0 %v1795
      %2343 = vmatprep.subr.mxu0 0.0
      %2344 = vmatpush1.msra.mxu0 %v1794
      %2345 = vmatprep.subr.mxu0 0.0
      %2346 = vmatpush2.msra.mxu0 0.0
      %2347 = vmatprep.subr.mxu0 0.0
      %2348 = vmatpush2.msra.mxu0 0.0
      %2349 = vmatprep.subr.mxu0 0.0
      %2350 = vmatpush2.msra.mxu0 0.0
      %2351 = vmatprep.subr.mxu0 0.0
      %2352 = vmatpush2.msra.mxu0 0.0
      %2353 = vmatprep.subr.mxu0 0.0
      %2354 = vmatpush2.msra.mxu0 0.0
      %2355 = vmatprep.subr.mxu0 0.0
      %2356 = vmatpush2.msra.mxu0 0.0
      %2357 = vmatprep.subr.mxu0 0.0
      %2358 = vmatpush2.msra.mxu0 0.0
      %2359 = vmatprep.subr.mxu0 0.0
      %2360 = vmatpush2.msra.mxu0 0.0
      %2361 = vmatprep.subr.mxu0 0.0
      %2362 = vmatpush2.msra.mxu0 0.0
      %2363 = vmatprep.subr.mxu0 0.0
      %2364 = vmatpush2.msra.mxu0 0.0
      %2365 = vmatprep.subr.mxu0 0.0
      %2366 = vmatpush2.msra.mxu0 0.0
      %2367 = vmatprep.subr.mxu0 0.0
      %2368 = vmatpush2.msra.mxu0 0.0
      %2369 = vmatprep.subr.mxu0 0.0
      %2370 = vmatpush2.msra.mxu0 0.0
      %2371 = vmatprep.subr.mxu0 0.0
      %2372 = vmatpush2.msra.mxu0 0.0
      %2373 = vmatprep.subr.mxu0 0.0
      %2374 = vmatpush2.msra.mxu0 0.0
      %2375 = vmatprep.subr.mxu0 0.0
      %2376 = vmatpush2.msra.mxu0 0.0
      %2377 = vmatprep.mubr.f32.mxu0 0.0
      %2378 = vmatmul.mubr.f32.gmra.mxu0 %v518
      %v2379 = vpop.f32.mrf.mxu0
      %v2380 = vadd.f32 0.0, %v2379
      %v2381 = vpop.f32.mrf.mxu0
      %2382 = vmatprep.mubr.f32.mxu0 0.0
      %2383 = vmatmul.mubr.f32.gmra.mxu0 %v521
      %v2384 = vpop.f32.mrf.mxu0
      %v2385 = vadd.f32 0.0, %v2384
      %v2386 = vpop.f32.mrf.mxu0
      %2387 = vdwg.mxu0
      %2388 = vmatprep.subr.mxu0 0.0
      %2389 = vmatpush1.msra.mxu0 0.0
      %2390 = vmatprep.subr.mxu0 0.0
      %2391 = vmatpush1.msra.mxu0 0.0
      %2392 = vmatprep.subr.mxu0 0.0
      %2393 = vmatpush1.msra.mxu0 0.0
      %2394 = vmatprep.subr.mxu0 0.0
      %2395 = vmatpush1.msra.mxu0 0.0
      %2396 = vmatprep.subr.mxu0 0.0
      %2397 = vmatpush1.msra.mxu0 0.0
      %2398 = vmatprep.subr.mxu0 0.0
      %2399 = vmatpush1.msra.mxu0 0.0
      %2400 = vmatprep.subr.mxu0 0.0
      %2401 = vmatpush1.msra.mxu0 0.0
      %2402 = vmatprep.subr.mxu0 0.0
      %2403 = vmatpush1.msra.mxu0 0.0
      %2404 = vmatprep.subr.mxu0 0.0
      %2405 = vmatpush1.msra.mxu0 0.0
      %2406 = vmatprep.subr.mxu0 0.0
      %2407 = vmatpush1.msra.mxu0 0.0
      %2408 = vmatprep.subr.mxu0 0.0
      %2409 = vmatpush1.msra.mxu0 0.0
      %2410 = vmatprep.subr.mxu0 0.0
      %2411 = vmatpush1.msra.mxu0 0.0
      %2412 = vmatprep.subr.mxu0 0.0
      %2413 = vmatpush1.msra.mxu0 0.0
      %2414 = vmatprep.subr.mxu0 0.0
      %2415 = vmatpush1.msra.mxu0 0.0
      %2416 = vmatprep.subr.mxu0 0.0
      %2417 = vmatpush1.msra.mxu0 %v2385
      %2418 = vmatprep.subr.mxu0 0.0
      %2419 = vmatpush1.msra.mxu0 %v2380
      %2420 = vmatprep.subr.mxu0 0.0
      %2421 = vmatpush2.msra.mxu0 0.0
      %2422 = vmatprep.subr.mxu0 0.0
      %2423 = vmatpush2.msra.mxu0 0.0
      %2424 = vmatprep.subr.mxu0 0.0
      %2425 = vmatpush2.msra.mxu0 0.0
      %2426 = vmatprep.subr.mxu0 0.0
      %2427 = vmatpush2.msra.mxu0 0.0
      %2428 = vmatprep.subr.mxu0 0.0
      %2429 = vmatpush2.msra.mxu0 0.0
      %2430 = vmatprep.subr.mxu0 0.0
      %2431 = vmatpush2.msra.mxu0 0.0
      %2432 = vmatprep.subr.mxu0 0.0
      %2433 = vmatpush2.msra.mxu0 0.0
      %2434 = vmatprep.subr.mxu0 0.0
      %2435 = vmatpush2.msra.mxu0 0.0
      %2436 = vmatprep.subr.mxu0 0.0
      %2437 = vmatpush2.msra.mxu0 0.0
      %2438 = vmatprep.subr.mxu0 0.0
      %2439 = vmatpush2.msra.mxu0 0.0
      %2440 = vmatprep.subr.mxu0 0.0
      %2441 = vmatpush2.msra.mxu0 0.0
      %2442 = vmatprep.subr.mxu0 0.0
      %2443 = vmatpush2.msra.mxu0 0.0
      %2444 = vmatprep.subr.mxu0 0.0
      %2445 = vmatpush2.msra.mxu0 0.0
      %2446 = vmatprep.subr.mxu0 0.0
      %2447 = vmatpush2.msra.mxu0 0.0
      %2448 = vmatprep.subr.mxu0 0.0
      %2449 = vmatpush2.msra.mxu0 0.0
      %2450 = vmatprep.subr.mxu0 0.0
      %2451 = vmatpush2.msra.mxu0 0.0
      %2452 = vmatprep.mubr.f32.mxu0 0.0
      %2453 = vmatmul.mubr.f32.gmra.mxu0 %v518
      %v2454 = vpop.f32.mrf.mxu0
      %v2455 = vadd.f32 0.0, %v2454
      %v2456 = vpop.f32.mrf.mxu0
      %2457 = vmatprep.mubr.f32.mxu0 0.0
      %2458 = vmatmul.mubr.f32.gmra.mxu0 %v521
      %v2459 = vpop.f32.mrf.mxu0
      %v2460 = vadd.f32 0.0, %v2459
      %v2461 = vpop.f32.mrf.mxu0
      %2462 = vdwg.mxu0
      %2463 = vmatprep.subr.mxu0 0.0
      %2464 = vmatpush1.msra.mxu0 0.0
      %2465 = vmatprep.subr.mxu0 0.0
      %2466 = vmatpush1.msra.mxu0 0.0
      %2467 = vmatprep.subr.mxu0 0.0
      %2468 = vmatpush1.msra.mxu0 0.0
      %2469 = vmatprep.subr.mxu0 0.0
      %2470 = vmatpush1.msra.mxu0 0.0
      %2471 = vmatprep.subr.mxu0 0.0
      %2472 = vmatpush1.msra.mxu0 0.0
      %2473 = vmatprep.subr.mxu0 0.0
      %2474 = vmatpush1.msra.mxu0 0.0
      %2475 = vmatprep.subr.mxu0 0.0
      %2476 = vmatpush1.msra.mxu0 0.0
      %2477 = vmatprep.subr.mxu0 0.0
      %2478 = vmatpush1.msra.mxu0 0.0
      %2479 = vmatprep.subr.mxu0 0.0
      %2480 = vmatpush1.msra.mxu0 0.0
      %2481 = vmatprep.subr.mxu0 0.0
      %2482 = vmatpush1.msra.mxu0 0.0
      %2483 = vmatprep.subr.mxu0 0.0
      %2484 = vmatpush1.msra.mxu0 0.0
      %2485 = vmatprep.subr.mxu0 0.0
      %2486 = vmatpush1.msra.mxu0 0.0
      %2487 = vmatprep.subr.mxu0 0.0
      %2488 = vmatpush1.msra.mxu0 0.0
      %2489 = vmatprep.subr.mxu0 0.0
      %2490 = vmatpush1.msra.mxu0 0.0
      %2491 = vmatprep.subr.mxu0 0.0
      %2492 = vmatpush1.msra.mxu0 %v2460
      %2493 = vmatprep.subr.mxu0 0.0
      %2494 = vmatpush1.msra.mxu0 %v2455
      %2495 = vmatprep.subr.mxu0 0.0
      %2496 = vmatpush2.msra.mxu0 0.0
      %2497 = vmatprep.subr.mxu0 0.0
      %2498 = vmatpush2.msra.mxu0 0.0
      %2499 = vmatprep.subr.mxu0 0.0
      %2500 = vmatpush2.msra.mxu0 0.0
      %2501 = vmatprep.subr.mxu0 0.0
      %2502 = vmatpush2.msra.mxu0 0.0
      %2503 = vmatprep.subr.mxu0 0.0
      %2504 = vmatpush2.msra.mxu0 0.0
      %2505 = vmatprep.subr.mxu0 0.0
      %2506 = vmatpush2.msra.mxu0 0.0
      %2507 = vmatprep.subr.mxu0 0.0
      %2508 = vmatpush2.msra.mxu0 0.0
      %2509 = vmatprep.subr.mxu0 0.0
      %2510 = vmatpush2.msra.mxu0 0.0
      %2511 = vmatprep.subr.mxu0 0.0
      %2512 = vmatpush2.msra.mxu0 0.0
      %2513 = vmatprep.subr.mxu0 0.0
      %2514 = vmatpush2.msra.mxu0 0.0
      %2515 = vmatprep.subr.mxu0 0.0
      %2516 = vmatpush2.msra.mxu0 0.0
      %2517 = vmatprep.subr.mxu0 0.0
      %2518 = vmatpush2.msra.mxu0 0.0
      %2519 = vmatprep.subr.mxu0 0.0
      %2520 = vmatpush2.msra.mxu0 0.0
      %2521 = vmatprep.subr.mxu0 0.0
      %2522 = vmatpush2.msra.mxu0 0.0
      %2523 = vmatprep.subr.mxu0 0.0
      %2524 = vmatpush2.msra.mxu0 0.0
      %2525 = vmatprep.subr.mxu0 0.0
      %2526 = vmatpush2.msra.mxu0 0.0
      %2527 = vmatprep.mubr.f32.mxu0 0.0
      %2528 = vmatmul.mubr.f32.gmra.mxu0 %v518
      %v2529 = vpop.f32.mrf.mxu0
      %v2530 = vadd.f32 0.0, %v2529
      %v2531 = vpop.f32.mrf.mxu0
      %2532 = vmatprep.mubr.f32.mxu0 0.0
      %2533 = vmatmul.mubr.f32.gmra.mxu0 %v521
      %v2534 = vpop.f32.mrf.mxu0
      %v2535 = vadd.f32 0.0, %v2534
      %v2536 = vpop.f32.mrf.mxu0
      %2537 = vdwg.mxu0
      %2540 = vrot.lane.b32.xlu0 %v2380, 4
      %v2541 = vpop.permute.xlu0 %2540
      %2542 = vrot.lane.b32.xlu0 %v2385, 4
      %v2543 = vpop.permute.xlu0 %2542
      %2548 = vrot.lane.b32.xlu0 %v2455, 8
      %v2549 = vpop.permute.xlu0 %2548
      %2550 = vrot.lane.b32.xlu0 %v2460, 8
      %v2551 = vpop.permute.xlu0 %2550
      %2556 = vrot.lane.b32.xlu0 %v2530, 12
      %v2557 = vpop.permute.xlu0 %2556
      %2558 = vrot.lane.b32.xlu0 %v2535, 12
      %v2559 = vpop.permute.xlu0 %2558
      %v2562 = vsel %vm772, %v1794, %v2541
      %v2563 = vsel %vm772, %v1795, %v2543
      %v2564 = vsel %vm775, %v2562, %v2549
      %v2565 = vsel %vm775, %v2563, %v2551
      %v2566 = vsel %vm778, %v2564, %v2557
      %v2567 = vsel %vm778, %v2565, %v2559
      %s2568 = scalar_lea.vmem %s3, 32
      %v2569 = vld [vmem:[%s2568] sm:$0xff]
      %v2570 = vld [vmem:[%s2568 + $0x8] sm:$0xff]
      %s2571 = scalar_lea.vmem %s4, 2
      %v2572 = vld [vmem:[%s2571] sm:$0x1]
      %v2574 = vlaneseq
      %v2575 = vshrl.u32 %v2574, 7
      %v2576 = vsub.s32 0, %v2575
      %v2577 = vrot.slane %v2572, %v2576
      %v2580 = vsel %vm516, %v2566, 0
      %v2583 = vsel %vm516, %v2567, 0
      %2585 = vmatprep.subr.mxu0 0.0
      %2586 = vmatpush1.msra.mxu0 0.0
      %2587 = vmatprep.subr.mxu0 0.0
      %2588 = vmatpush1.msra.mxu0 0.0
      %2589 = vmatprep.subr.mxu0 0.0
      %2590 = vmatpush1.msra.mxu0 0.0
      %2591 = vmatprep.subr.mxu0 0.0
      %2592 = vmatpush1.msra.mxu0 0.0
      %2593 = vmatprep.subr.mxu0 0.0
      %2594 = vmatpush1.msra.mxu0 0.0
      %2595 = vmatprep.subr.mxu0 0.0
      %2596 = vmatpush1.msra.mxu0 0.0
      %2597 = vmatprep.subr.mxu0 0.0
      %2598 = vmatpush1.msra.mxu0 0.0
      %2599 = vmatprep.subr.mxu0 0.0
      %2600 = vmatpush1.msra.mxu0 0.0
      %2601 = vmatprep.subr.mxu0 0.0
      %2602 = vmatpush1.msra.mxu0 0.0
      %2603 = vmatprep.subr.mxu0 0.0
      %2604 = vmatpush1.msra.mxu0 0.0
      %2605 = vmatprep.subr.mxu0 0.0
      %2606 = vmatpush1.msra.mxu0 0.0
      %2607 = vmatprep.subr.mxu0 0.0
      %2608 = vmatpush1.msra.mxu0 0.0
      %2609 = vmatprep.subr.mxu0 0.0
      %2610 = vmatpush1.msra.mxu0 0.0
      %2611 = vmatprep.subr.mxu0 0.0
      %2612 = vmatpush1.msra.mxu0 0.0
      %2613 = vmatprep.subr.mxu0 0.0
      %2614 = vmatpush1.msra.mxu0 %v2570
      %2615 = vmatprep.subr.mxu0 0.0
      %2616 = vmatpush1.msra.mxu0 %v2569
      %2617 = vmatprep.subr.mxu0 0.0
      %2618 = vmatpush2.msra.mxu0 0.0
      %2619 = vmatprep.subr.mxu0 0.0
      %2620 = vmatpush2.msra.mxu0 0.0
      %2621 = vmatprep.subr.mxu0 0.0
      %2622 = vmatpush2.msra.mxu0 0.0
      %2623 = vmatprep.subr.mxu0 0.0
      %2624 = vmatpush2.msra.mxu0 0.0
      %2625 = vmatprep.subr.mxu0 0.0
      %2626 = vmatpush2.msra.mxu0 0.0
      %2627 = vmatprep.subr.mxu0 0.0
      %2628 = vmatpush2.msra.mxu0 0.0
      %2629 = vmatprep.subr.mxu0 0.0
      %2630 = vmatpush2.msra.mxu0 0.0
      %2631 = vmatprep.subr.mxu0 0.0
      %2632 = vmatpush2.msra.mxu0 0.0
      %2633 = vmatprep.subr.mxu0 0.0
      %2634 = vmatpush2.msra.mxu0 0.0
      %2635 = vmatprep.subr.mxu0 0.0
      %2636 = vmatpush2.msra.mxu0 0.0
      %2637 = vmatprep.subr.mxu0 0.0
      %2638 = vmatpush2.msra.mxu0 0.0
      %2639 = vmatprep.subr.mxu0 0.0
      %2640 = vmatpush2.msra.mxu0 0.0
      %2641 = vmatprep.subr.mxu0 0.0
      %2642 = vmatpush2.msra.mxu0 0.0
      %2643 = vmatprep.subr.mxu0 0.0
      %2644 = vmatpush2.msra.mxu0 0.0
      %2645 = vmatprep.subr.mxu0 0.0
      %2646 = vmatpush2.msra.mxu0 0.0
      %2647 = vmatprep.subr.mxu0 0.0
      %2648 = vmatpush2.msra.mxu0 0.0
      %2649 = vmatprep.mubr.f32.mxu0 0.0
      %2650 = vmatmul.mubr.f32.gmra.mxu0 %v2580
      %v2651 = vpop.f32.mrf.mxu0
      %v2652 = vadd.f32 %v2577, %v2651
      %v2653 = vpop.f32.mrf.mxu0
      %2654 = vmatprep.mubr.f32.mxu0 0.0
      %2655 = vmatmul.mubr.f32.gmra.mxu0 %v2583
      %v2656 = vpop.f32.mrf.mxu0
      %v2657 = vadd.f32 %v2577, %v2656
      %v2658 = vpop.f32.mrf.mxu0
      %2659 = vdwg.mxu0
      %v2660 = vadd.f32 %v1794, %v2652
      %v2661 = vadd.f32 %v1795, %v2657
      %v2662 = vsel %vm772, %v2660, 0.0
      %v2663 = vsel %vm772, %v2661, 0.0
      %v2664 = vadd.f32 %v2662, %v2663
      %v2665 = vrot.slane %v2664, 4
      %v2666 = vadd.f32 %v2664, %v2665
      %v2667 = vrot.slane %v2666, 2
      %v2668 = vadd.f32 %v2666, %v2667
      %v2669 = vrot.slane %v2668, 1
      %v2670 = vadd.f32 %v2668, %v2669
      %v2671 = vmul.f32 %v2670, %v882
      %v2672 = vsub.f32 %v2660, %v2671
      %v2673 = vsub.f32 %v2661, %v2671
      %v2674 = vmul.f32 %v2672, %v2672
      %v2675 = vmul.f32 %v2673, %v2673
      %v2676 = vsel %vm772, %v2674, 0.0
      %v2677 = vsel %vm772, %v2675, 0.0
      %v2678 = vadd.f32 %v2676, %v2677
      %v2679 = vrot.slane %v2678, 4
      %v2680 = vadd.f32 %v2678, %v2679
      %v2681 = vrot.slane %v2680, 2
      %v2682 = vadd.f32 %v2680, %v2681
      %v2683 = vrot.slane %v2682, 1
      %v2684 = vadd.f32 %v2682, %v2683
      %v2685 = vmul.f32 %v2684, %v882
      %v2686 = vadd.f32 %v2685, 1e-05
      %v2687 = vrsqrt.pop %v2686
      %v2688 = vmul.f32 %v2672, %v2687
      %v2689 = vmul.f32 %v2673, %v2687
      %s2690 = scalar_lea.vmem %s5, 8
      %v2691 = vld [vmem:[%s2690] sm:$0xf]
      %v2693 = vsel %vm772, %v2688, 0
      %v2696 = vsel %vm772, %v2689, 0
      %v2699 = vsel %vm909, %v2691, 0
      %2701 = vmatprep.subr.mxu0 0.0
      %2702 = vmatpush1.msra.mxu0 0.0
      %2703 = vmatprep.subr.mxu0 0.0
      %2704 = vmatpush1.msra.mxu0 0.0
      %2705 = vmatprep.subr.mxu0 0.0
      %2706 = vmatpush1.msra.mxu0 0.0
      %2707 = vmatprep.subr.mxu0 0.0
      %2708 = vmatpush1.msra.mxu0 0.0
      %2709 = vmatprep.subr.mxu0 0.0
      %2710 = vmatpush1.msra.mxu0 0.0
      %2711 = vmatprep.subr.mxu0 0.0
      %2712 = vmatpush1.msra.mxu0 0.0
      %2713 = vmatprep.subr.mxu0 0.0
      %2714 = vmatpush1.msra.mxu0 0.0
      %2715 = vmatprep.subr.mxu0 0.0
      %2716 = vmatpush1.msra.mxu0 0.0
      %2717 = vmatprep.subr.mxu0 0.0
      %2718 = vmatpush1.msra.mxu0 0.0
      %2719 = vmatprep.subr.mxu0 0.0
      %2720 = vmatpush1.msra.mxu0 0.0
      %2721 = vmatprep.subr.mxu0 0.0
      %2722 = vmatpush1.msra.mxu0 0.0
      %2723 = vmatprep.subr.mxu0 0.0
      %2724 = vmatpush1.msra.mxu0 0.0
      %2725 = vmatprep.subr.mxu0 0.0
      %2726 = vmatpush1.msra.mxu0 0.0
      %2727 = vmatprep.subr.mxu0 0.0
      %2728 = vmatpush1.msra.mxu0 0.0
      %2729 = vmatprep.subr.mxu0 0.0
      %2730 = vmatpush1.msra.mxu0 0.0
      %2731 = vmatprep.subr.mxu0 0.0
      %2732 = vmatpush1.msra.mxu0 %v2699
      %2733 = vmatprep.subr.mxu0 0.0
      %2734 = vmatpush2.msra.mxu0 0.0
      %2735 = vmatprep.subr.mxu0 0.0
      %2736 = vmatpush2.msra.mxu0 0.0
      %2737 = vmatprep.subr.mxu0 0.0
      %2738 = vmatpush2.msra.mxu0 0.0
      %2739 = vmatprep.subr.mxu0 0.0
      %2740 = vmatpush2.msra.mxu0 0.0
      %2741 = vmatprep.subr.mxu0 0.0
      %2742 = vmatpush2.msra.mxu0 0.0
      %2743 = vmatprep.subr.mxu0 0.0
      %2744 = vmatpush2.msra.mxu0 0.0
      %2745 = vmatprep.subr.mxu0 0.0
      %2746 = vmatpush2.msra.mxu0 0.0
      %2747 = vmatprep.subr.mxu0 0.0
      %2748 = vmatpush2.msra.mxu0 0.0
      %2749 = vmatprep.subr.mxu0 0.0
      %2750 = vmatpush2.msra.mxu0 0.0
      %2751 = vmatprep.subr.mxu0 0.0
      %2752 = vmatpush2.msra.mxu0 0.0
      %2753 = vmatprep.subr.mxu0 0.0
      %2754 = vmatpush2.msra.mxu0 0.0
      %2755 = vmatprep.subr.mxu0 0.0
      %2756 = vmatpush2.msra.mxu0 0.0
      %2757 = vmatprep.subr.mxu0 0.0
      %2758 = vmatpush2.msra.mxu0 0.0
      %2759 = vmatprep.subr.mxu0 0.0
      %2760 = vmatpush2.msra.mxu0 0.0
      %2761 = vmatprep.subr.mxu0 0.0
      %2762 = vmatpush2.msra.mxu0 0.0
      %2763 = vmatprep.subr.mxu0 0.0
      %2764 = vmatpush2.msra.mxu0 0.0
      %2765 = vmatprep.mubr.f32.mxu0 0.0
      %2766 = vmatmul.mubr.f32.gmra.mxu0 %v2693
      %v2767 = vpop.f32.mrf.mxu0
      %v2768 = vadd.f32 0.0, %v2767
      %v2769 = vpop.f32.mrf.mxu0
      %2770 = vmatprep.mubr.f32.mxu0 0.0
      %2771 = vmatmul.mubr.f32.gmra.mxu0 %v2696
      %v2772 = vpop.f32.mrf.mxu0
      %v2773 = vadd.f32 0.0, %v2772
      %v2774 = vpop.f32.mrf.mxu0
      %2775 = vdwg.mxu0
      %s2776 = scalar_lea.vmem %s6, 16
      %v2777 = vld [vmem:[%s2776] sm:$0xff]
      %v2779 = vsel %vm775, %v2768, 0
      %v2782 = vsel %vm775, %v2773, 0
      %2784 = vmatprep.subr.mxu0 0.0
      %2785 = vmatpush1.msra.mxu0 0.0
      %2786 = vmatprep.subr.mxu0 0.0
      %2787 = vmatpush1.msra.mxu0 0.0
      %2788 = vmatprep.subr.mxu0 0.0
      %2789 = vmatpush1.msra.mxu0 0.0
      %2790 = vmatprep.subr.mxu0 0.0
      %2791 = vmatpush1.msra.mxu0 0.0
      %2792 = vmatprep.subr.mxu0 0.0
      %2793 = vmatpush1.msra.mxu0 0.0
      %2794 = vmatprep.subr.mxu0 0.0
      %2795 = vmatpush1.msra.mxu0 0.0
      %2796 = vmatprep.subr.mxu0 0.0
      %2797 = vmatpush1.msra.mxu0 0.0
      %2798 = vmatprep.subr.mxu0 0.0
      %2799 = vmatpush1.msra.mxu0 0.0
      %2800 = vmatprep.subr.mxu0 0.0
      %2801 = vmatpush1.msra.mxu0 0.0
      %2802 = vmatprep.subr.mxu0 0.0
      %2803 = vmatpush1.msra.mxu0 0.0
      %2804 = vmatprep.subr.mxu0 0.0
      %2805 = vmatpush1.msra.mxu0 0.0
      %2806 = vmatprep.subr.mxu0 0.0
      %2807 = vmatpush1.msra.mxu0 0.0
      %2808 = vmatprep.subr.mxu0 0.0
      %2809 = vmatpush1.msra.mxu0 0.0
      %2810 = vmatprep.subr.mxu0 0.0
      %2811 = vmatpush1.msra.mxu0 0.0
      %2812 = vmatprep.subr.mxu0 0.0
      %2813 = vmatpush1.msra.mxu0 0.0
      %2814 = vmatprep.subr.mxu0 0.0
      %2815 = vmatpush1.msra.mxu0 %v2777
      %2816 = vmatprep.subr.mxu0 0.0
      %2817 = vmatpush2.msra.mxu0 0.0
      %2818 = vmatprep.subr.mxu0 0.0
      %2819 = vmatpush2.msra.mxu0 0.0
      %2820 = vmatprep.subr.mxu0 0.0
      %2821 = vmatpush2.msra.mxu0 0.0
      %2822 = vmatprep.subr.mxu0 0.0
      %2823 = vmatpush2.msra.mxu0 0.0
      %2824 = vmatprep.subr.mxu0 0.0
      %2825 = vmatpush2.msra.mxu0 0.0
      %2826 = vmatprep.subr.mxu0 0.0
      %2827 = vmatpush2.msra.mxu0 0.0
      %2828 = vmatprep.subr.mxu0 0.0
      %2829 = vmatpush2.msra.mxu0 0.0
      %2830 = vmatprep.subr.mxu0 0.0
      %2831 = vmatpush2.msra.mxu0 0.0
      %2832 = vmatprep.subr.mxu0 0.0
      %2833 = vmatpush2.msra.mxu0 0.0
      %2834 = vmatprep.subr.mxu0 0.0
      %2835 = vmatpush2.msra.mxu0 0.0
      %2836 = vmatprep.subr.mxu0 0.0
      %2837 = vmatpush2.msra.mxu0 0.0
      %2838 = vmatprep.subr.mxu0 0.0
      %2839 = vmatpush2.msra.mxu0 0.0
      %2840 = vmatprep.subr.mxu0 0.0
      %2841 = vmatpush2.msra.mxu0 0.0
      %2842 = vmatprep.subr.mxu0 0.0
      %2843 = vmatpush2.msra.mxu0 0.0
      %2844 = vmatprep.subr.mxu0 0.0
      %2845 = vmatpush2.msra.mxu0 0.0
      %2846 = vmatprep.subr.mxu0 0.0
      %2847 = vmatpush2.msra.mxu0 0.0
      %2848 = vmatprep.mubr.f32.mxu0 0.0
      %2849 = vmatmul.mubr.f32.gmra.mxu0 %v2779
      %v2850 = vpop.f32.mrf.mxu0
      %v2851 = vadd.f32 0.0, %v2850
      %v2852 = vpop.f32.mrf.mxu0
      %2853 = vmatprep.mubr.f32.mxu0 0.0
      %2854 = vmatmul.mubr.f32.gmra.mxu0 %v2782
      %v2855 = vpop.f32.mrf.mxu0
      %v2856 = vadd.f32 0.0, %v2855
      %v2857 = vpop.f32.mrf.mxu0
      %2858 = vdwg.mxu0
      %2859 = vxpose.xlu0.b32.start [1/16] %v2851, 128
      %2860 = vxpose.xlu0.b32.cont [2/16] %v2856, 128
      %2861 = vxpose.xlu0.b32.cont [3/16] 0.0, 128
      %2862 = vxpose.xlu0.b32.cont [4/16] 0.0, 128
      %2863 = vxpose.xlu0.b32.cont [5/16] 0.0, 128
      %2864 = vxpose.xlu0.b32.cont [6/16] 0.0, 128
      %2865 = vxpose.xlu0.b32.cont [7/16] 0.0, 128
      %2866 = vxpose.xlu0.b32.cont [8/16] 0.0, 128
      %2867 = vxpose.xlu0.b32.cont [9/16] 0.0, 128
      %2868 = vxpose.xlu0.b32.cont [10/16] 0.0, 128
      %2869 = vxpose.xlu0.b32.cont [11/16] 0.0, 128
      %2870 = vxpose.xlu0.b32.cont [12/16] 0.0, 128
      %2871 = vxpose.xlu0.b32.cont [13/16] 0.0, 128
      %2872 = vxpose.xlu0.b32.cont [14/16] 0.0, 128
      %2873 = vxpose.xlu0.b32.cont [15/16] 0.0, 128
      %2874 = vxpose.xlu0.b32.end [16/16] 0.0, 128
      %v2875 = vpop.trf.xlu0
      %v2876 = vpop.trf.xlu0
      %v2877 = vpop.trf.xlu0
      %v2878 = vpop.trf.xlu0
      %v2879 = vpop.trf.xlu0
      %v2880 = vpop.trf.xlu0
      %v2881 = vpop.trf.xlu0
      %v2882 = vpop.trf.xlu0
      %v2883 = vpop.trf.xlu0
      %v2884 = vpop.trf.xlu0
      %v2885 = vpop.trf.xlu0
      %v2886 = vpop.trf.xlu0
      %v2887 = vpop.trf.xlu0
      %v2888 = vpop.trf.xlu0
      %v2889 = vpop.trf.xlu0
      %v2890 = vpop.trf.xlu0
      %2892 = vset.pattern.permute.xlu0 2
      %2893 = vperm.xlu0 %2892, %v2851
      %v2894 = vpop.permute.xlu0 %2893
      %2897 = vset.pattern.permute.xlu0 2
      %2898 = vperm.xlu0 %2897, %v2856
      %v2899 = vpop.permute.xlu0 %2898
      %v2901 = vlaneseq
      %v2902 = vshrl.u32 %v2901, 7
      %v2903 = vsub.s32 0, %v2902
      %v2904 = vrot.slane %v2875, %v2903
      %v2905 = vadd.f32 %v2894, %v2904
      %v2906 = vadd.f32 %v2899, %v2904
      %vm2907 = vcmp.gt.f32.partialorder %v2905, 0.0
      %vm2908 = vcmp.gt.f32.partialorder %v2906, 0.0
      %v2909 = vmul.f32 %v2905, 0.2
      %v2910 = vmul.f32 %v2906, 0.2
      %v2911 = vsel %vm2907, %v2905, %v2909
      %v2912 = vsel %vm2908, %v2906, %v2910
      %v2913 = vsel %vm1124, %v2911, -1e+30
      %v2914 = vsel %vm1125, %v2912, -1e+30
      %v2915 = vsel %vm516, %v2913, -inf
      %2916 = vmax.xlane.f32.xlu0 %v2915
      %v2917 = vpop.xlane.xlu0 %2916
      %v2918 = vsel %vm516, %v2914, -inf
      %2919 = vmax.xlane.f32.xlu0 %v2918
      %v2920 = vpop.xlane.xlu0 %2919
      %v2921 = vsub.f32 %v2913, %v2917
      %v2922 = vsub.f32 %v2914, %v2920
      %v2923 = vmul.f32 %v2921, 1.442695
      %v2924 = vpow.pop %v2923
      %v2925 = vmul.f32 %v2922, 1.442695
      %v2926 = vpow.pop %v2925
      %v2927 = vsel %vm516, %v2924, 0.0
      %2928 = vadd.xlane.f32.xlu0 %v2927
      %v2929 = vpop.xlane.xlu0 %2928
      %v2930 = vsel %vm516, %v2926, 0.0
      %2931 = vadd.xlane.f32.xlu0 %v2930
      %v2932 = vpop.xlane.xlu0 %2931
      %v2933 = vrcp.pop %v2929
      %v2934 = vrcp.pop %v2932
      %v2935 = vmul.f32 %v2924, %v2933
      %v2936 = vmul.f32 %v2926, %v2934
      %v2938 = vsel %vm516, %v2935, 0
      %v2941 = vsel %vm516, %v2936, 0
      %2943 = vmatprep.subr.mxu0 0.0
      %2944 = vmatpush1.msra.mxu0 0.0
      %2945 = vmatprep.subr.mxu0 0.0
      %2946 = vmatpush1.msra.mxu0 0.0
      %2947 = vmatprep.subr.mxu0 0.0
      %2948 = vmatpush1.msra.mxu0 0.0
      %2949 = vmatprep.subr.mxu0 0.0
      %2950 = vmatpush1.msra.mxu0 0.0
      %2951 = vmatprep.subr.mxu0 0.0
      %2952 = vmatpush1.msra.mxu0 0.0
      %2953 = vmatprep.subr.mxu0 0.0
      %2954 = vmatpush1.msra.mxu0 0.0
      %2955 = vmatprep.subr.mxu0 0.0
      %2956 = vmatpush1.msra.mxu0 0.0
      %2957 = vmatprep.subr.mxu0 0.0
      %2958 = vmatpush1.msra.mxu0 0.0
      %2959 = vmatprep.subr.mxu0 0.0
      %2960 = vmatpush1.msra.mxu0 0.0
      %2961 = vmatprep.subr.mxu0 0.0
      %2962 = vmatpush1.msra.mxu0 0.0
      %2963 = vmatprep.subr.mxu0 0.0
      %2964 = vmatpush1.msra.mxu0 0.0
      %2965 = vmatprep.subr.mxu0 0.0
      %2966 = vmatpush1.msra.mxu0 0.0
      %2967 = vmatprep.subr.mxu0 0.0
      %2968 = vmatpush1.msra.mxu0 0.0
      %2969 = vmatprep.subr.mxu0 0.0
      %2970 = vmatpush1.msra.mxu0 0.0
      %2971 = vmatprep.subr.mxu0 0.0
      %2972 = vmatpush1.msra.mxu0 %v2773
      %2973 = vmatprep.subr.mxu0 0.0
      %2974 = vmatpush1.msra.mxu0 %v2768
      %2975 = vmatprep.subr.mxu0 0.0
      %2976 = vmatpush2.msra.mxu0 0.0
      %2977 = vmatprep.subr.mxu0 0.0
      %2978 = vmatpush2.msra.mxu0 0.0
      %2979 = vmatprep.subr.mxu0 0.0
      %2980 = vmatpush2.msra.mxu0 0.0
      %2981 = vmatprep.subr.mxu0 0.0
      %2982 = vmatpush2.msra.mxu0 0.0
      %2983 = vmatprep.subr.mxu0 0.0
      %2984 = vmatpush2.msra.mxu0 0.0
      %2985 = vmatprep.subr.mxu0 0.0
      %2986 = vmatpush2.msra.mxu0 0.0
      %2987 = vmatprep.subr.mxu0 0.0
      %2988 = vmatpush2.msra.mxu0 0.0
      %2989 = vmatprep.subr.mxu0 0.0
      %2990 = vmatpush2.msra.mxu0 0.0
      %2991 = vmatprep.subr.mxu0 0.0
      %2992 = vmatpush2.msra.mxu0 0.0
      %2993 = vmatprep.subr.mxu0 0.0
      %2994 = vmatpush2.msra.mxu0 0.0
      %2995 = vmatprep.subr.mxu0 0.0
      %2996 = vmatpush2.msra.mxu0 0.0
      %2997 = vmatprep.subr.mxu0 0.0
      %2998 = vmatpush2.msra.mxu0 0.0
      %2999 = vmatprep.subr.mxu0 0.0
      %3000 = vmatpush2.msra.mxu0 0.0
      %3001 = vmatprep.subr.mxu0 0.0
      %3002 = vmatpush2.msra.mxu0 0.0
      %3003 = vmatprep.subr.mxu0 0.0
      %3004 = vmatpush2.msra.mxu0 0.0
      %3005 = vmatprep.subr.mxu0 0.0
      %3006 = vmatpush2.msra.mxu0 0.0
      %3007 = vmatprep.mubr.f32.mxu0 0.0
      %3008 = vmatmul.mubr.f32.gmra.mxu0 %v2938
      %v3009 = vpop.f32.mrf.mxu0
      %v3010 = vadd.f32 0.0, %v3009
      %v3011 = vpop.f32.mrf.mxu0
      %3012 = vmatprep.mubr.f32.mxu0 0.0
      %3013 = vmatmul.mubr.f32.gmra.mxu0 %v2941
      %v3014 = vpop.f32.mrf.mxu0
      %v3015 = vadd.f32 0.0, %v3014
      %v3016 = vpop.f32.mrf.mxu0
      %3017 = vdwg.mxu0
      %3018 = vrot.lane.b32.xlu0 %v2851, 127
      %v3019 = vpop.permute.xlu0 %3018
      %3020 = vrot.lane.b32.xlu0 %v2856, 127
      %v3021 = vpop.permute.xlu0 %3020
      %3024 = vxpose.xlu0.b32.start [1/16] %v3019, 128
      %3025 = vxpose.xlu0.b32.cont [2/16] %v3021, 128
      %3026 = vxpose.xlu0.b32.cont [3/16] 0.0, 128
      %3027 = vxpose.xlu0.b32.cont [4/16] 0.0, 128
      %3028 = vxpose.xlu0.b32.cont [5/16] 0.0, 128
      %3029 = vxpose.xlu0.b32.cont [6/16] 0.0, 128
      %3030 = vxpose.xlu0.b32.cont [7/16] 0.0, 128
      %3031 = vxpose.xlu0.b32.cont [8/16] 0.0, 128
      %3032 = vxpose.xlu0.b32.cont [9/16] 0.0, 128
      %3033 = vxpose.xlu0.b32.cont [10/16] 0.0, 128
      %3034 = vxpose.xlu0.b32.cont [11/16] 0.0, 128
      %3035 = vxpose.xlu0.b32.cont [12/16] 0.0, 128
      %3036 = vxpose.xlu0.b32.cont [13/16] 0.0, 128
      %3037 = vxpose.xlu0.b32.cont [14/16] 0.0, 128
      %3038 = vxpose.xlu0.b32.cont [15/16] 0.0, 128
      %3039 = vxpose.xlu0.b32.end [16/16] 0.0, 128
      %v3040 = vpop.trf.xlu0
      %v3041 = vpop.trf.xlu0
      %v3042 = vpop.trf.xlu0
      %v3043 = vpop.trf.xlu0
      %v3044 = vpop.trf.xlu0
      %v3045 = vpop.trf.xlu0
      %v3046 = vpop.trf.xlu0
      %v3047 = vpop.trf.xlu0
      %v3048 = vpop.trf.xlu0
      %v3049 = vpop.trf.xlu0
      %v3050 = vpop.trf.xlu0
      %v3051 = vpop.trf.xlu0
      %v3052 = vpop.trf.xlu0
      %v3053 = vpop.trf.xlu0
      %v3054 = vpop.trf.xlu0
      %v3055 = vpop.trf.xlu0
      %3056 = vset.pattern.permute.xlu0 3
      %3057 = vperm.xlu0 %3056, %v2851
      %v3058 = vpop.permute.xlu0 %3057
      %3060 = vset.pattern.permute.xlu0 3
      %3061 = vperm.xlu0 %3060, %v2856
      %v3062 = vpop.permute.xlu0 %3061
      %v3064 = vlaneseq
      %v3065 = vshrl.u32 %v3064, 7
      %v3066 = vsub.s32 0, %v3065
      %v3067 = vrot.slane %v3040, %v3066
      %v3068 = vadd.f32 %v3058, %v3067
      %v3069 = vadd.f32 %v3062, %v3067
      %vm3070 = vcmp.gt.f32.partialorder %v3068, 0.0
      %vm3071 = vcmp.gt.f32.partialorder %v3069, 0.0
      %v3072 = vmul.f32 %v3068, 0.2
      %v3073 = vmul.f32 %v3069, 0.2
      %v3074 = vsel %vm3070, %v3068, %v3072
      %v3075 = vsel %vm3071, %v3069, %v3073
      %v3076 = vsel %vm1124, %v3074, -1e+30
      %v3077 = vsel %vm1125, %v3075, -1e+30
      %v3078 = vsel %vm516, %v3076, -inf
      %3079 = vmax.xlane.f32.xlu0 %v3078
      %v3080 = vpop.xlane.xlu0 %3079
      %v3081 = vsel %vm516, %v3077, -inf
      %3082 = vmax.xlane.f32.xlu0 %v3081
      %v3083 = vpop.xlane.xlu0 %3082
      %v3084 = vsub.f32 %v3076, %v3080
      %v3085 = vsub.f32 %v3077, %v3083
      %v3086 = vmul.f32 %v3084, 1.442695
      %v3087 = vpow.pop %v3086
      %v3088 = vmul.f32 %v3085, 1.442695
      %v3089 = vpow.pop %v3088
      %v3090 = vsel %vm516, %v3087, 0.0
      %3091 = vadd.xlane.f32.xlu0 %v3090
      %v3092 = vpop.xlane.xlu0 %3091
      %v3093 = vsel %vm516, %v3089, 0.0
      %3094 = vadd.xlane.f32.xlu0 %v3093
      %v3095 = vpop.xlane.xlu0 %3094
      %v3096 = vrcp.pop %v3092
      %v3097 = vrcp.pop %v3095
      %v3098 = vmul.f32 %v3087, %v3096
      %v3099 = vmul.f32 %v3089, %v3097
      %3100 = vrot.lane.b32.xlu0 %v2768, 124
      %v3101 = vpop.permute.xlu0 %3100
      %3102 = vrot.lane.b32.xlu0 %v2773, 124
      %v3103 = vpop.permute.xlu0 %3102
      %v3107 = vsel %vm516, %v3098, 0
      %v3110 = vsel %vm516, %v3099, 0
      %3112 = vmatprep.subr.mxu0 0.0
      %3113 = vmatpush1.msra.mxu0 0.0
      %3114 = vmatprep.subr.mxu0 0.0
      %3115 = vmatpush1.msra.mxu0 0.0
      %3116 = vmatprep.subr.mxu0 0.0
      %3117 = vmatpush1.msra.mxu0 0.0
      %3118 = vmatprep.subr.mxu0 0.0
      %3119 = vmatpush1.msra.mxu0 0.0
      %3120 = vmatprep.subr.mxu0 0.0
      %3121 = vmatpush1.msra.mxu0 0.0
      %3122 = vmatprep.subr.mxu0 0.0
      %3123 = vmatpush1.msra.mxu0 0.0
      %3124 = vmatprep.subr.mxu0 0.0
      %3125 = vmatpush1.msra.mxu0 0.0
      %3126 = vmatprep.subr.mxu0 0.0
      %3127 = vmatpush1.msra.mxu0 0.0
      %3128 = vmatprep.subr.mxu0 0.0
      %3129 = vmatpush1.msra.mxu0 0.0
      %3130 = vmatprep.subr.mxu0 0.0
      %3131 = vmatpush1.msra.mxu0 0.0
      %3132 = vmatprep.subr.mxu0 0.0
      %3133 = vmatpush1.msra.mxu0 0.0
      %3134 = vmatprep.subr.mxu0 0.0
      %3135 = vmatpush1.msra.mxu0 0.0
      %3136 = vmatprep.subr.mxu0 0.0
      %3137 = vmatpush1.msra.mxu0 0.0
      %3138 = vmatprep.subr.mxu0 0.0
      %3139 = vmatpush1.msra.mxu0 0.0
      %3140 = vmatprep.subr.mxu0 0.0
      %3141 = vmatpush1.msra.mxu0 %v3103
      %3142 = vmatprep.subr.mxu0 0.0
      %3143 = vmatpush1.msra.mxu0 %v3101
      %3144 = vmatprep.subr.mxu0 0.0
      %3145 = vmatpush2.msra.mxu0 0.0
      %3146 = vmatprep.subr.mxu0 0.0
      %3147 = vmatpush2.msra.mxu0 0.0
      %3148 = vmatprep.subr.mxu0 0.0
      %3149 = vmatpush2.msra.mxu0 0.0
      %3150 = vmatprep.subr.mxu0 0.0
      %3151 = vmatpush2.msra.mxu0 0.0
      %3152 = vmatprep.subr.mxu0 0.0
      %3153 = vmatpush2.msra.mxu0 0.0
      %3154 = vmatprep.subr.mxu0 0.0
      %3155 = vmatpush2.msra.mxu0 0.0
      %3156 = vmatprep.subr.mxu0 0.0
      %3157 = vmatpush2.msra.mxu0 0.0
      %3158 = vmatprep.subr.mxu0 0.0
      %3159 = vmatpush2.msra.mxu0 0.0
      %3160 = vmatprep.subr.mxu0 0.0
      %3161 = vmatpush2.msra.mxu0 0.0
      %3162 = vmatprep.subr.mxu0 0.0
      %3163 = vmatpush2.msra.mxu0 0.0
      %3164 = vmatprep.subr.mxu0 0.0
      %3165 = vmatpush2.msra.mxu0 0.0
      %3166 = vmatprep.subr.mxu0 0.0
      %3167 = vmatpush2.msra.mxu0 0.0
      %3168 = vmatprep.subr.mxu0 0.0
      %3169 = vmatpush2.msra.mxu0 0.0
      %3170 = vmatprep.subr.mxu0 0.0
      %3171 = vmatpush2.msra.mxu0 0.0
      %3172 = vmatprep.subr.mxu0 0.0
      %3173 = vmatpush2.msra.mxu0 0.0
      %3174 = vmatprep.subr.mxu0 0.0
      %3175 = vmatpush2.msra.mxu0 0.0
      %3176 = vmatprep.mubr.f32.mxu0 0.0
      %3177 = vmatmul.mubr.f32.gmra.mxu0 %v3107
      %v3178 = vpop.f32.mrf.mxu0
      %v3179 = vadd.f32 0.0, %v3178
      %v3180 = vpop.f32.mrf.mxu0
      %3181 = vmatprep.mubr.f32.mxu0 0.0
      %3182 = vmatmul.mubr.f32.gmra.mxu0 %v3110
      %v3183 = vpop.f32.mrf.mxu0
      %v3184 = vadd.f32 0.0, %v3183
      %v3185 = vpop.f32.mrf.mxu0
      %3186 = vdwg.mxu0
      %3189 = vrot.lane.b32.xlu0 %v3179, 4
      %v3190 = vpop.permute.xlu0 %3189
      %3191 = vrot.lane.b32.xlu0 %v3184, 4
      %v3192 = vpop.permute.xlu0 %3191
      %v3195 = vsel %vm772, %v3010, %v3190
      %v3196 = vsel %vm772, %v3015, %v3192
      %s3197 = scalar_lea.vmem %s7, 2
      %v3198 = vld [vmem:[%s3197] sm:$0x1]
      %v3200 = vlaneseq
      %v3201 = vshrl.u32 %v3200, 7
      %v3202 = vsub.s32 0, %v3201
      %v3203 = vrot.slane %v3198, %v3202
      %v3205 = vadd.f32 %v3195, %v3203
      %v3206 = vadd.f32 %v3196, %v3203
      %v3207 = vld [vmem:[%s8] sm:$0xff]
      %v3208 = vld [vmem:[%s10] sm:$0x1]
      %v3210 = vlaneseq
      %v3211 = vshrl.u32 %v3210, 7
      %v3212 = vsub.s32 0, %v3211
      %v3213 = vrot.slane %v3208, %v3212
      %v3216 = vsel %vm775, %v1417, 0
      %v3219 = vsel %vm775, %v1418, 0
      %v3222 = vsel %vm775, %v2311, 0
      %v3225 = vsel %vm775, %v2312, 0
      %v3228 = vsel %vm775, %v3205, 0
      %v3231 = vsel %vm775, %v3206, 0
      %3233 = vmatprep.subr.mxu0 0.0
      %3234 = vmatpush1.msra.mxu0 0.0
      %3235 = vmatprep.subr.mxu0 0.0
      %3236 = vmatpush1.msra.mxu0 0.0
      %3237 = vmatprep.subr.mxu0 0.0
      %3238 = vmatpush1.msra.mxu0 0.0
      %3239 = vmatprep.subr.mxu0 0.0
      %3240 = vmatpush1.msra.mxu0 0.0
      %3241 = vmatprep.subr.mxu0 0.0
      %3242 = vmatpush1.msra.mxu0 0.0
      %3243 = vmatprep.subr.mxu0 0.0
      %3244 = vmatpush1.msra.mxu0 0.0
      %3245 = vmatprep.subr.mxu0 0.0
      %3246 = vmatpush1.msra.mxu0 0.0
      %3247 = vmatprep.subr.mxu0 0.0
      %3248 = vmatpush1.msra.mxu0 0.0
      %3249 = vmatprep.subr.mxu0 0.0
      %3250 = vmatpush1.msra.mxu0 0.0
      %3251 = vmatprep.subr.mxu0 0.0
      %3252 = vmatpush1.msra.mxu0 0.0
      %3253 = vmatprep.subr.mxu0 0.0
      %3254 = vmatpush1.msra.mxu0 0.0
      %3255 = vmatprep.subr.mxu0 0.0
      %3256 = vmatpush1.msra.mxu0 0.0
      %3257 = vmatprep.subr.mxu0 0.0
      %3258 = vmatpush1.msra.mxu0 0.0
      %3259 = vmatprep.subr.mxu0 0.0
      %3260 = vmatpush1.msra.mxu0 0.0
      %3261 = vmatprep.subr.mxu0 0.0
      %3262 = vmatpush1.msra.mxu0 0.0
      %3263 = vmatprep.subr.mxu0 0.0
      %3264 = vmatpush1.msra.mxu0 %v3207
      %3265 = vmatprep.subr.mxu0 0.0
      %3266 = vmatpush2.msra.mxu0 0.0
      %3267 = vmatprep.subr.mxu0 0.0
      %3268 = vmatpush2.msra.mxu0 0.0
      %3269 = vmatprep.subr.mxu0 0.0
      %3270 = vmatpush2.msra.mxu0 0.0
      %3271 = vmatprep.subr.mxu0 0.0
      %3272 = vmatpush2.msra.mxu0 0.0
      %3273 = vmatprep.subr.mxu0 0.0
      %3274 = vmatpush2.msra.mxu0 0.0
      %3275 = vmatprep.subr.mxu0 0.0
      %3276 = vmatpush2.msra.mxu0 0.0
      %3277 = vmatprep.subr.mxu0 0.0
      %3278 = vmatpush2.msra.mxu0 0.0
      %3279 = vmatprep.subr.mxu0 0.0
      %3280 = vmatpush2.msra.mxu0 0.0
      %3281 = vmatprep.subr.mxu0 0.0
      %3282 = vmatpush2.msra.mxu0 0.0
      %3283 = vmatprep.subr.mxu0 0.0
      %3284 = vmatpush2.msra.mxu0 0.0
      %3285 = vmatprep.subr.mxu0 0.0
      %3286 = vmatpush2.msra.mxu0 0.0
      %3287 = vmatprep.subr.mxu0 0.0
      %3288 = vmatpush2.msra.mxu0 0.0
      %3289 = vmatprep.subr.mxu0 0.0
      %3290 = vmatpush2.msra.mxu0 0.0
      %3291 = vmatprep.subr.mxu0 0.0
      %3292 = vmatpush2.msra.mxu0 0.0
      %3293 = vmatprep.subr.mxu0 0.0
      %3294 = vmatpush2.msra.mxu0 0.0
      %3295 = vmatprep.subr.mxu0 0.0
      %3296 = vmatpush2.msra.mxu0 0.0
      %3297 = vmatprep.mubr.f32.mxu0 0.0
      %3298 = vmatmul.mubr.f32.gmra.mxu0 %v3216
      %v3299 = vpop.f32.mrf.mxu0
      %v3300 = vadd.f32 %v3213, %v3299
      %v3301 = vpop.f32.mrf.mxu0
      %3302 = vmatprep.mubr.f32.mxu0 0.0
      %3303 = vmatmul.mubr.f32.gmra.mxu0 %v3219
      %v3304 = vpop.f32.mrf.mxu0
      %v3305 = vadd.f32 %v3213, %v3304
      %v3306 = vpop.f32.mrf.mxu0
      %3307 = vmatprep.mubr.f32.mxu0 0.0
      %3308 = vmatmul.mubr.f32.gmra.mxu0 %v3222
      %v3309 = vpop.f32.mrf.mxu0
      %v3310 = vadd.f32 %v3213, %v3309
      %v3311 = vpop.f32.mrf.mxu0
      %3312 = vmatprep.mubr.f32.mxu0 0.0
      %3313 = vmatmul.mubr.f32.gmra.mxu0 %v3225
      %v3314 = vpop.f32.mrf.mxu0
      %v3315 = vadd.f32 %v3213, %v3314
      %v3316 = vpop.f32.mrf.mxu0
      %3317 = vmatprep.mubr.f32.mxu0 0.0
      %3318 = vmatmul.mubr.f32.gmra.mxu0 %v3228
      %v3319 = vpop.f32.mrf.mxu0
      %v3320 = vadd.f32 %v3213, %v3319
      %v3321 = vpop.f32.mrf.mxu0
      %3322 = vmatprep.mubr.f32.mxu0 0.0
      %3323 = vmatmul.mubr.f32.gmra.mxu0 %v3231
      %v3324 = vpop.f32.mrf.mxu0
      %v3325 = vadd.f32 %v3213, %v3324
      %v3326 = vpop.f32.mrf.mxu0
      %3327 = vdwg.mxu0
      %v3328 = vld [vmem:[%s9] sm:$0xff]
      %v3329 = vld [vmem:[%s9 + $0x8] sm:$0xff]
      %v3330 = vld [vmem:[%s9 + $0x10] sm:$0xff]
      %v3331 = vld [vmem:[%s9 + $0x18] sm:$0xf]
      %vm3332 = vcmask 228352
      %v3334 = vsel %vm3332, 0.0, 0
      %v3337 = vsel %vm909, %v3331, 0
      %3339 = vmatprep.subr.mxu0 0.0
      %3340 = vmatpush1.msra.mxu0 0.0
      %3341 = vmatprep.subr.mxu0 0.0
      %3342 = vmatpush1.msra.mxu0 0.0
      %3343 = vmatprep.subr.mxu0 0.0
      %3344 = vmatpush1.msra.mxu0 0.0
      %3345 = vmatprep.subr.mxu0 0.0
      %3346 = vmatpush1.msra.mxu0 0.0
      %3347 = vmatprep.subr.mxu0 0.0
      %3348 = vmatpush1.msra.mxu0 0.0
      %3349 = vmatprep.subr.mxu0 0.0
      %3350 = vmatpush1.msra.mxu0 0.0
      %3351 = vmatprep.subr.mxu0 0.0
      %3352 = vmatpush1.msra.mxu0 0.0
      %3353 = vmatprep.subr.mxu0 0.0
      %3354 = vmatpush1.msra.mxu0 0.0
      %3355 = vmatprep.subr.mxu0 0.0
      %3356 = vmatpush1.msra.mxu0 0.0
      %3357 = vmatprep.subr.mxu0 0.0
      %3358 = vmatpush1.msra.mxu0 0.0
      %3359 = vmatprep.subr.mxu0 0.0
      %3360 = vmatpush1.msra.mxu0 0.0
      %3361 = vmatprep.subr.mxu0 0.0
      %3362 = vmatpush1.msra.mxu0 0.0
      %3363 = vmatprep.subr.mxu0 0.0
      %3364 = vmatpush1.msra.mxu0 %v3337
      %3365 = vmatprep.subr.mxu0 0.0
      %3366 = vmatpush1.msra.mxu0 %v3330
      %3367 = vmatprep.subr.mxu0 0.0
      %3368 = vmatpush1.msra.mxu0 %v3329
      %3369 = vmatprep.subr.mxu0 0.0
      %3370 = vmatpush1.msra.mxu0 %v3328
      %3371 = vmatprep.subr.mxu0 0.0
      %3372 = vmatpush2.msra.mxu0 0.0
      %3373 = vmatprep.subr.mxu0 0.0
      %3374 = vmatpush2.msra.mxu0 0.0
      %3375 = vmatprep.subr.mxu0 0.0
      %3376 = vmatpush2.msra.mxu0 0.0
      %3377 = vmatprep.subr.mxu0 0.0
      %3378 = vmatpush2.msra.mxu0 0.0
      %3379 = vmatprep.subr.mxu0 0.0
      %3380 = vmatpush2.msra.mxu0 0.0
      %3381 = vmatprep.subr.mxu0 0.0
      %3382 = vmatpush2.msra.mxu0 0.0
      %3383 = vmatprep.subr.mxu0 0.0
      %3384 = vmatpush2.msra.mxu0 0.0
      %3385 = vmatprep.subr.mxu0 0.0
      %3386 = vmatpush2.msra.mxu0 0.0
      %3387 = vmatprep.subr.mxu0 0.0
      %3388 = vmatpush2.msra.mxu0 0.0
      %3389 = vmatprep.subr.mxu0 0.0
      %3390 = vmatpush2.msra.mxu0 0.0
      %3391 = vmatprep.subr.mxu0 0.0
      %3392 = vmatpush2.msra.mxu0 0.0
      %3393 = vmatprep.subr.mxu0 0.0
      %3394 = vmatpush2.msra.mxu0 0.0
      %3395 = vmatprep.subr.mxu0 0.0
      %3396 = vmatpush2.msra.mxu0 0.0
      %3397 = vmatprep.subr.mxu0 0.0
      %3398 = vmatpush2.msra.mxu0 0.0
      %3399 = vmatprep.subr.mxu0 0.0
      %3400 = vmatpush2.msra.mxu0 0.0
      %3401 = vmatprep.subr.mxu0 0.0
      %3402 = vmatpush2.msra.mxu0 0.0
      %3403 = vmatprep.mubr.f32.mxu0 0.0
      %3404 = vmatmul.mubr.f32.gmra.mxu0 %v3334
      %v3405 = vpop.f32.mrf.mxu0
      %v3406 = vadd.f32 0.0, %v3405
      %v3407 = vpop.f32.mrf.mxu0
      %3408 = vmatprep.mubr.f32.mxu0 0.0
      %3409 = vmatmul.mubr.f32.gmra.mxu0 %v3334
      %v3410 = vpop.f32.mrf.mxu0
      %v3411 = vadd.f32 0.0, %v3410
      %v3412 = vpop.f32.mrf.mxu0
      %3413 = vdwg.mxu0
      %v3414 = vadd.f32 %v3300, %v3406
      %v3415 = vadd.f32 %v3305, %v3411
      %v3416 = vmul.f32 %v3414, 0.5
      %v3417 = vmul.f32 %v3415, 0.5
      %v3418 = vtanh.pop %v3416
      %v3419 = vtanh.pop %v3417
      %v3420 = vmul.f32 %v3418, 0.5
      %v3421 = vmul.f32 %v3419, 0.5
      %v3422 = vadd.f32 %v3420, 0.5
      %v3423 = vadd.f32 %v3421, 0.5
      %v3424 = vtanh.pop %v3414
      %v3425 = vtanh.pop %v3415
      %v3426 = vmul.f32 %v3422, 0.0
      %v3427 = vmul.f32 %v3423, 0.0
      %3430 = vrot.lane.b32.xlu0 %v3424, 72
      %v3431 = vpop.permute.xlu0 %3430
      %3432 = vrot.lane.b32.xlu0 %v3425, 72
      %v3433 = vpop.permute.xlu0 %3432
      %v3436 = vmul.f32 %v3422, %v3431
      %v3437 = vmul.f32 %v3423, %v3433
      %3440 = vrot.lane.b32.xlu0 %v3436, 28
      %v3441 = vpop.permute.xlu0 %3440
      %3442 = vrot.lane.b32.xlu0 %v3437, 28
      %v3443 = vpop.permute.xlu0 %3442
      %v3446 = vadd.f32 %v3426, %v3441
      %v3447 = vadd.f32 %v3427, %v3443
      %v3448 = vtanh.pop %v3446
      %v3449 = vtanh.pop %v3447
      %3452 = vrot.lane.b32.xlu0 %v3448, 56
      %v3453 = vpop.permute.xlu0 %3452
      %3454 = vrot.lane.b32.xlu0 %v3449, 56
      %v3455 = vpop.permute.xlu0 %3454
      %v3458 = vmul.f32 %v3422, %v3453
      %v3459 = vmul.f32 %v3423, %v3455
      %3462 = vrot.lane.b32.xlu0 %v3458, 44
      %v3463 = vpop.permute.xlu0 %3462
      %3464 = vrot.lane.b32.xlu0 %v3459, 44
      %v3465 = vpop.permute.xlu0 %3464
      %v3466 = vsel %vm3332, %v3463, 0
      %v3468 = vsel %vm3332, %v3465, 0
      %3470 = vmatprep.subr.mxu0 0.0
      %3471 = vmatpush1.msra.mxu0 0.0
      %3472 = vmatprep.subr.mxu0 0.0
      %3473 = vmatpush1.msra.mxu0 0.0
      %3474 = vmatprep.subr.mxu0 0.0
      %3475 = vmatpush1.msra.mxu0 0.0
      %3476 = vmatprep.subr.mxu0 0.0
      %3477 = vmatpush1.msra.mxu0 0.0
      %3478 = vmatprep.subr.mxu0 0.0
      %3479 = vmatpush1.msra.mxu0 0.0
      %3480 = vmatprep.subr.mxu0 0.0
      %3481 = vmatpush1.msra.mxu0 0.0
      %3482 = vmatprep.subr.mxu0 0.0
      %3483 = vmatpush1.msra.mxu0 0.0
      %3484 = vmatprep.subr.mxu0 0.0
      %3485 = vmatpush1.msra.mxu0 0.0
      %3486 = vmatprep.subr.mxu0 0.0
      %3487 = vmatpush1.msra.mxu0 0.0
      %3488 = vmatprep.subr.mxu0 0.0
      %3489 = vmatpush1.msra.mxu0 0.0
      %3490 = vmatprep.subr.mxu0 0.0
      %3491 = vmatpush1.msra.mxu0 0.0
      %3492 = vmatprep.subr.mxu0 0.0
      %3493 = vmatpush1.msra.mxu0 0.0
      %3494 = vmatprep.subr.mxu0 0.0
      %3495 = vmatpush1.msra.mxu0 %v3337
      %3496 = vmatprep.subr.mxu0 0.0
      %3497 = vmatpush1.msra.mxu0 %v3330
      %3498 = vmatprep.subr.mxu0 0.0
      %3499 = vmatpush1.msra.mxu0 %v3329
      %3500 = vmatprep.subr.mxu0 0.0
      %3501 = vmatpush1.msra.mxu0 %v3328
      %3502 = vmatprep.subr.mxu0 0.0
      %3503 = vmatpush2.msra.mxu0 0.0
      %3504 = vmatprep.subr.mxu0 0.0
      %3505 = vmatpush2.msra.mxu0 0.0
      %3506 = vmatprep.subr.mxu0 0.0
      %3507 = vmatpush2.msra.mxu0 0.0
      %3508 = vmatprep.subr.mxu0 0.0
      %3509 = vmatpush2.msra.mxu0 0.0
      %3510 = vmatprep.subr.mxu0 0.0
      %3511 = vmatpush2.msra.mxu0 0.0
      %3512 = vmatprep.subr.mxu0 0.0
      %3513 = vmatpush2.msra.mxu0 0.0
      %3514 = vmatprep.subr.mxu0 0.0
      %3515 = vmatpush2.msra.mxu0 0.0
      %3516 = vmatprep.subr.mxu0 0.0
      %3517 = vmatpush2.msra.mxu0 0.0
      %3518 = vmatprep.subr.mxu0 0.0
      %3519 = vmatpush2.msra.mxu0 0.0
      %3520 = vmatprep.subr.mxu0 0.0
      %3521 = vmatpush2.msra.mxu0 0.0
      %3522 = vmatprep.subr.mxu0 0.0
      %3523 = vmatpush2.msra.mxu0 0.0
      %3524 = vmatprep.subr.mxu0 0.0
      %3525 = vmatpush2.msra.mxu0 0.0
      %3526 = vmatprep.subr.mxu0 0.0
      %3527 = vmatpush2.msra.mxu0 0.0
      %3528 = vmatprep.subr.mxu0 0.0
      %3529 = vmatpush2.msra.mxu0 0.0
      %3530 = vmatprep.subr.mxu0 0.0
      %3531 = vmatpush2.msra.mxu0 0.0
      %3532 = vmatprep.subr.mxu0 0.0
      %3533 = vmatpush2.msra.mxu0 0.0
      %3534 = vmatprep.mubr.f32.mxu0 0.0
      %3535 = vmatmul.mubr.f32.gmra.mxu0 %v3466
      %v3536 = vpop.f32.mrf.mxu0
      %v3537 = vadd.f32 0.0, %v3536
      %v3538 = vpop.f32.mrf.mxu0
      %3539 = vmatprep.mubr.f32.mxu0 0.0
      %3540 = vmatmul.mubr.f32.gmra.mxu0 %v3468
      %v3541 = vpop.f32.mrf.mxu0
      %v3542 = vadd.f32 0.0, %v3541
      %v3543 = vpop.f32.mrf.mxu0
      %3544 = vdwg.mxu0
      %v3545 = vadd.f32 %v3310, %v3537
      %v3546 = vadd.f32 %v3315, %v3542
      %v3547 = vmul.f32 %v3545, 0.5
      %v3548 = vmul.f32 %v3546, 0.5
      %v3549 = vtanh.pop %v3547
      %v3550 = vtanh.pop %v3548
      %v3551 = vmul.f32 %v3549, 0.5
      %v3552 = vmul.f32 %v3550, 0.5
      %v3553 = vadd.f32 %v3551, 0.5
      %v3554 = vadd.f32 %v3552, 0.5
      %v3555 = vtanh.pop %v3545
      %v3556 = vtanh.pop %v3546
      %v3557 = vmul.f32 %v3553, %v3446
      %v3558 = vmul.f32 %v3554, %v3447
      %3561 = vrot.lane.b32.xlu0 %v3555, 72
      %v3562 = vpop.permute.xlu0 %3561
      %3563 = vrot.lane.b32.xlu0 %v3556, 72
      %v3564 = vpop.permute.xlu0 %3563
      %v3567 = vmul.f32 %v3553, %v3562
      %v3568 = vmul.f32 %v3554, %v3564
      %3571 = vrot.lane.b32.xlu0 %v3567, 28
      %v3572 = vpop.permute.xlu0 %3571
      %3573 = vrot.lane.b32.xlu0 %v3568, 28
      %v3574 = vpop.permute.xlu0 %3573
      %v3577 = vadd.f32 %v3557, %v3572
      %v3578 = vadd.f32 %v3558, %v3574
      %v3579 = vtanh.pop %v3577
      %v3580 = vtanh.pop %v3578
      %3583 = vrot.lane.b32.xlu0 %v3579, 56
      %v3584 = vpop.permute.xlu0 %3583
      %3585 = vrot.lane.b32.xlu0 %v3580, 56
      %v3586 = vpop.permute.xlu0 %3585
      %v3589 = vmul.f32 %v3553, %v3584
      %v3590 = vmul.f32 %v3554, %v3586
      %3593 = vrot.lane.b32.xlu0 %v3589, 44
      %v3594 = vpop.permute.xlu0 %3593
      %3595 = vrot.lane.b32.xlu0 %v3590, 44
      %v3596 = vpop.permute.xlu0 %3595
      %v3597 = vsel %vm3332, %v3594, 0
      %v3599 = vsel %vm3332, %v3596, 0
      %3601 = vmatprep.subr.mxu0 0.0
      %3602 = vmatpush1.msra.mxu0 0.0
      %3603 = vmatprep.subr.mxu0 0.0
      %3604 = vmatpush1.msra.mxu0 0.0
      %3605 = vmatprep.subr.mxu0 0.0
      %3606 = vmatpush1.msra.mxu0 0.0
      %3607 = vmatprep.subr.mxu0 0.0
      %3608 = vmatpush1.msra.mxu0 0.0
      %3609 = vmatprep.subr.mxu0 0.0
      %3610 = vmatpush1.msra.mxu0 0.0
      %3611 = vmatprep.subr.mxu0 0.0
      %3612 = vmatpush1.msra.mxu0 0.0
      %3613 = vmatprep.subr.mxu0 0.0
      %3614 = vmatpush1.msra.mxu0 0.0
      %3615 = vmatprep.subr.mxu0 0.0
      %3616 = vmatpush1.msra.mxu0 0.0
      %3617 = vmatprep.subr.mxu0 0.0
      %3618 = vmatpush1.msra.mxu0 0.0
      %3619 = vmatprep.subr.mxu0 0.0
      %3620 = vmatpush1.msra.mxu0 0.0
      %3621 = vmatprep.subr.mxu0 0.0
      %3622 = vmatpush1.msra.mxu0 0.0
      %3623 = vmatprep.subr.mxu0 0.0
      %3624 = vmatpush1.msra.mxu0 0.0
      %3625 = vmatprep.subr.mxu0 0.0
      %3626 = vmatpush1.msra.mxu0 %v3337
      %3627 = vmatprep.subr.mxu0 0.0
      %3628 = vmatpush1.msra.mxu0 %v3330
      %3629 = vmatprep.subr.mxu0 0.0
      %3630 = vmatpush1.msra.mxu0 %v3329
      %3631 = vmatprep.subr.mxu0 0.0
      %3632 = vmatpush1.msra.mxu0 %v3328
      %3633 = vmatprep.subr.mxu0 0.0
      %3634 = vmatpush2.msra.mxu0 0.0
      %3635 = vmatprep.subr.mxu0 0.0
      %3636 = vmatpush2.msra.mxu0 0.0
      %3637 = vmatprep.subr.mxu0 0.0
      %3638 = vmatpush2.msra.mxu0 0.0
      %3639 = vmatprep.subr.mxu0 0.0
      %3640 = vmatpush2.msra.mxu0 0.0
      %3641 = vmatprep.subr.mxu0 0.0
      %3642 = vmatpush2.msra.mxu0 0.0
      %3643 = vmatprep.subr.mxu0 0.0
      %3644 = vmatpush2.msra.mxu0 0.0
      %3645 = vmatprep.subr.mxu0 0.0
      %3646 = vmatpush2.msra.mxu0 0.0
      %3647 = vmatprep.subr.mxu0 0.0
      %3648 = vmatpush2.msra.mxu0 0.0
      %3649 = vmatprep.subr.mxu0 0.0
      %3650 = vmatpush2.msra.mxu0 0.0
      %3651 = vmatprep.subr.mxu0 0.0
      %3652 = vmatpush2.msra.mxu0 0.0
      %3653 = vmatprep.subr.mxu0 0.0
      %3654 = vmatpush2.msra.mxu0 0.0
      %3655 = vmatprep.subr.mxu0 0.0
      %3656 = vmatpush2.msra.mxu0 0.0
      %3657 = vmatprep.subr.mxu0 0.0
      %3658 = vmatpush2.msra.mxu0 0.0
      %3659 = vmatprep.subr.mxu0 0.0
      %3660 = vmatpush2.msra.mxu0 0.0
      %3661 = vmatprep.subr.mxu0 0.0
      %3662 = vmatpush2.msra.mxu0 0.0
      %3663 = vmatprep.subr.mxu0 0.0
      %3664 = vmatpush2.msra.mxu0 0.0
      %3665 = vmatprep.mubr.f32.mxu0 0.0
      %3666 = vmatmul.mubr.f32.gmra.mxu0 %v3597
      %v3667 = vpop.f32.mrf.mxu0
      %v3668 = vadd.f32 0.0, %v3667
      %v3669 = vpop.f32.mrf.mxu0
      %3670 = vmatprep.mubr.f32.mxu0 0.0
      %3671 = vmatmul.mubr.f32.gmra.mxu0 %v3599
      %v3672 = vpop.f32.mrf.mxu0
      %v3673 = vadd.f32 0.0, %v3672
      %v3674 = vpop.f32.mrf.mxu0
      %3675 = vdwg.mxu0
      %v3676 = vadd.f32 %v3320, %v3668
      %v3677 = vadd.f32 %v3325, %v3673
      %v3678 = vmul.f32 %v3676, 0.5
      %v3679 = vmul.f32 %v3677, 0.5
      %v3680 = vtanh.pop %v3678
      %v3681 = vtanh.pop %v3679
      %v3682 = vmul.f32 %v3680, 0.5
      %v3683 = vmul.f32 %v3681, 0.5
      %v3684 = vadd.f32 %v3682, 0.5
      %v3685 = vadd.f32 %v3683, 0.5
      %v3686 = vtanh.pop %v3676
      %v3687 = vtanh.pop %v3677
      %v3688 = vmul.f32 %v3684, %v3577
      %v3689 = vmul.f32 %v3685, %v3578
      %3692 = vrot.lane.b32.xlu0 %v3686, 72
      %v3693 = vpop.permute.xlu0 %3692
      %3694 = vrot.lane.b32.xlu0 %v3687, 72
      %v3695 = vpop.permute.xlu0 %3694
      %v3698 = vmul.f32 %v3684, %v3693
      %v3699 = vmul.f32 %v3685, %v3695
      %3702 = vrot.lane.b32.xlu0 %v3698, 28
      %v3703 = vpop.permute.xlu0 %3702
      %3704 = vrot.lane.b32.xlu0 %v3699, 28
      %v3705 = vpop.permute.xlu0 %3704
      %v3708 = vadd.f32 %v3688, %v3703
      %v3709 = vadd.f32 %v3689, %v3705
      %v3710 = vtanh.pop %v3708
      %v3711 = vtanh.pop %v3709
      %3714 = vrot.lane.b32.xlu0 %v3710, 56
      %v3715 = vpop.permute.xlu0 %3714
      %3716 = vrot.lane.b32.xlu0 %v3711, 56
      %v3717 = vpop.permute.xlu0 %3716
      %v3720 = vmul.f32 %v3684, %v3715
      %v3721 = vmul.f32 %v3685, %v3717
      %s3722 = scalar_lea.vmem %s8, 8
      %v3723 = vld [vmem:[%s3722] sm:$0xff]
      %s3724 = scalar_lea.vmem %s10, 1
      %v3725 = vld [vmem:[%s3724] sm:$0x1]
      %v3727 = vlaneseq
      %v3728 = vshrl.u32 %v3727, 7
      %v3729 = vsub.s32 0, %v3728
      %v3730 = vrot.slane %v3725, %v3729
      %3732 = vmatprep.subr.mxu0 0.0
      %3733 = vmatpush1.msra.mxu0 0.0
      %3734 = vmatprep.subr.mxu0 0.0
      %3735 = vmatpush1.msra.mxu0 0.0
      %3736 = vmatprep.subr.mxu0 0.0
      %3737 = vmatpush1.msra.mxu0 0.0
      %3738 = vmatprep.subr.mxu0 0.0
      %3739 = vmatpush1.msra.mxu0 0.0
      %3740 = vmatprep.subr.mxu0 0.0
      %3741 = vmatpush1.msra.mxu0 0.0
      %3742 = vmatprep.subr.mxu0 0.0
      %3743 = vmatpush1.msra.mxu0 0.0
      %3744 = vmatprep.subr.mxu0 0.0
      %3745 = vmatpush1.msra.mxu0 0.0
      %3746 = vmatprep.subr.mxu0 0.0
      %3747 = vmatpush1.msra.mxu0 0.0
      %3748 = vmatprep.subr.mxu0 0.0
      %3749 = vmatpush1.msra.mxu0 0.0
      %3750 = vmatprep.subr.mxu0 0.0
      %3751 = vmatpush1.msra.mxu0 0.0
      %3752 = vmatprep.subr.mxu0 0.0
      %3753 = vmatpush1.msra.mxu0 0.0
      %3754 = vmatprep.subr.mxu0 0.0
      %3755 = vmatpush1.msra.mxu0 0.0
      %3756 = vmatprep.subr.mxu0 0.0
      %3757 = vmatpush1.msra.mxu0 0.0
      %3758 = vmatprep.subr.mxu0 0.0
      %3759 = vmatpush1.msra.mxu0 0.0
      %3760 = vmatprep.subr.mxu0 0.0
      %3761 = vmatpush1.msra.mxu0 0.0
      %3762 = vmatprep.subr.mxu0 0.0
      %3763 = vmatpush1.msra.mxu0 %v3723
      %3764 = vmatprep.subr.mxu0 0.0
      %3765 = vmatpush2.msra.mxu0 0.0
      %3766 = vmatprep.subr.mxu0 0.0
      %3767 = vmatpush2.msra.mxu0 0.0
      %3768 = vmatprep.subr.mxu0 0.0
      %3769 = vmatpush2.msra.mxu0 0.0
      %3770 = vmatprep.subr.mxu0 0.0
      %3771 = vmatpush2.msra.mxu0 0.0
      %3772 = vmatprep.subr.mxu0 0.0
      %3773 = vmatpush2.msra.mxu0 0.0
      %3774 = vmatprep.subr.mxu0 0.0
      %3775 = vmatpush2.msra.mxu0 0.0
      %3776 = vmatprep.subr.mxu0 0.0
      %3777 = vmatpush2.msra.mxu0 0.0
      %3778 = vmatprep.subr.mxu0 0.0
      %3779 = vmatpush2.msra.mxu0 0.0
      %3780 = vmatprep.subr.mxu0 0.0
      %3781 = vmatpush2.msra.mxu0 0.0
      %3782 = vmatprep.subr.mxu0 0.0
      %3783 = vmatpush2.msra.mxu0 0.0
      %3784 = vmatprep.subr.mxu0 0.0
      %3785 = vmatpush2.msra.mxu0 0.0
      %3786 = vmatprep.subr.mxu0 0.0
      %3787 = vmatpush2.msra.mxu0 0.0
      %3788 = vmatprep.subr.mxu0 0.0
      %3789 = vmatpush2.msra.mxu0 0.0
      %3790 = vmatprep.subr.mxu0 0.0
      %3791 = vmatpush2.msra.mxu0 0.0
      %3792 = vmatprep.subr.mxu0 0.0
      %3793 = vmatpush2.msra.mxu0 0.0
      %3794 = vmatprep.subr.mxu0 0.0
      %3795 = vmatpush2.msra.mxu0 0.0
      %3796 = vmatprep.mubr.f32.mxu0 0.0
      %3797 = vmatmul.mubr.f32.gmra.mxu0 %v3216
      %v3798 = vpop.f32.mrf.mxu0
      %v3799 = vadd.f32 %v3730, %v3798
      %v3800 = vpop.f32.mrf.mxu0
      %3801 = vmatprep.mubr.f32.mxu0 0.0
      %3802 = vmatmul.mubr.f32.gmra.mxu0 %v3219
      %v3803 = vpop.f32.mrf.mxu0
      %v3804 = vadd.f32 %v3730, %v3803
      %v3805 = vpop.f32.mrf.mxu0
      %3806 = vmatprep.mubr.f32.mxu0 0.0
      %3807 = vmatmul.mubr.f32.gmra.mxu0 %v3222
      %v3808 = vpop.f32.mrf.mxu0
      %v3809 = vadd.f32 %v3730, %v3808
      %v3810 = vpop.f32.mrf.mxu0
      %3811 = vmatprep.mubr.f32.mxu0 0.0
      %3812 = vmatmul.mubr.f32.gmra.mxu0 %v3225
      %v3813 = vpop.f32.mrf.mxu0
      %v3814 = vadd.f32 %v3730, %v3813
      %v3815 = vpop.f32.mrf.mxu0
      %3816 = vmatprep.mubr.f32.mxu0 0.0
      %3817 = vmatmul.mubr.f32.gmra.mxu0 %v3228
      %v3818 = vpop.f32.mrf.mxu0
      %v3819 = vadd.f32 %v3730, %v3818
      %v3820 = vpop.f32.mrf.mxu0
      %3821 = vmatprep.mubr.f32.mxu0 0.0
      %3822 = vmatmul.mubr.f32.gmra.mxu0 %v3231
      %v3823 = vpop.f32.mrf.mxu0
      %v3824 = vadd.f32 %v3730, %v3823
      %v3825 = vpop.f32.mrf.mxu0
      %3826 = vdwg.mxu0
      %s3827 = scalar_lea.vmem %s9, 32
      %v3828 = vld [vmem:[%s3827] sm:$0xff]
      %v3829 = vld [vmem:[%s3827 + $0x8] sm:$0xff]
      %v3830 = vld [vmem:[%s3827 + $0x10] sm:$0xff]
      %v3831 = vld [vmem:[%s3827 + $0x18] sm:$0xf]
      %v3833 = vsel %vm909, %v3831, 0
      %3835 = vmatprep.subr.mxu0 0.0
      %3836 = vmatpush1.msra.mxu0 0.0
      %3837 = vmatprep.subr.mxu0 0.0
      %3838 = vmatpush1.msra.mxu0 0.0
      %3839 = vmatprep.subr.mxu0 0.0
      %3840 = vmatpush1.msra.mxu0 0.0
      %3841 = vmatprep.subr.mxu0 0.0
      %3842 = vmatpush1.msra.mxu0 0.0
      %3843 = vmatprep.subr.mxu0 0.0
      %3844 = vmatpush1.msra.mxu0 0.0
      %3845 = vmatprep.subr.mxu0 0.0
      %3846 = vmatpush1.msra.mxu0 0.0
      %3847 = vmatprep.subr.mxu0 0.0
      %3848 = vmatpush1.msra.mxu0 0.0
      %3849 = vmatprep.subr.mxu0 0.0
      %3850 = vmatpush1.msra.mxu0 0.0
      %3851 = vmatprep.subr.mxu0 0.0
      %3852 = vmatpush1.msra.mxu0 0.0
      %3853 = vmatprep.subr.mxu0 0.0
      %3854 = vmatpush1.msra.mxu0 0.0
      %3855 = vmatprep.subr.mxu0 0.0
      %3856 = vmatpush1.msra.mxu0 0.0
      %3857 = vmatprep.subr.mxu0 0.0
      %3858 = vmatpush1.msra.mxu0 0.0
      %3859 = vmatprep.subr.mxu0 0.0
      %3860 = vmatpush1.msra.mxu0 %v3833
      %3861 = vmatprep.subr.mxu0 0.0
      %3862 = vmatpush1.msra.mxu0 %v3830
      %3863 = vmatprep.subr.mxu0 0.0
      %3864 = vmatpush1.msra.mxu0 %v3829
      %3865 = vmatprep.subr.mxu0 0.0
      %3866 = vmatpush1.msra.mxu0 %v3828
      %3867 = vmatprep.subr.mxu0 0.0
      %3868 = vmatpush2.msra.mxu0 0.0
      %3869 = vmatprep.subr.mxu0 0.0
      %3870 = vmatpush2.msra.mxu0 0.0
      %3871 = vmatprep.subr.mxu0 0.0
      %3872 = vmatpush2.msra.mxu0 0.0
      %3873 = vmatprep.subr.mxu0 0.0
      %3874 = vmatpush2.msra.mxu0 0.0
      %3875 = vmatprep.subr.mxu0 0.0
      %3876 = vmatpush2.msra.mxu0 0.0
      %3877 = vmatprep.subr.mxu0 0.0
      %3878 = vmatpush2.msra.mxu0 0.0
      %3879 = vmatprep.subr.mxu0 0.0
      %3880 = vmatpush2.msra.mxu0 0.0
      %3881 = vmatprep.subr.mxu0 0.0
      %3882 = vmatpush2.msra.mxu0 0.0
      %3883 = vmatprep.subr.mxu0 0.0
      %3884 = vmatpush2.msra.mxu0 0.0
      %3885 = vmatprep.subr.mxu0 0.0
      %3886 = vmatpush2.msra.mxu0 0.0
      %3887 = vmatprep.subr.mxu0 0.0
      %3888 = vmatpush2.msra.mxu0 0.0
      %3889 = vmatprep.subr.mxu0 0.0
      %3890 = vmatpush2.msra.mxu0 0.0
      %3891 = vmatprep.subr.mxu0 0.0
      %3892 = vmatpush2.msra.mxu0 0.0
      %3893 = vmatprep.subr.mxu0 0.0
      %3894 = vmatpush2.msra.mxu0 0.0
      %3895 = vmatprep.subr.mxu0 0.0
      %3896 = vmatpush2.msra.mxu0 0.0
      %3897 = vmatprep.subr.mxu0 0.0
      %3898 = vmatpush2.msra.mxu0 0.0
      %3899 = vmatprep.mubr.f32.mxu0 0.0
      %3900 = vmatmul.mubr.f32.gmra.mxu0 %v3334
      %v3901 = vpop.f32.mrf.mxu0
      %v3902 = vadd.f32 0.0, %v3901
      %v3903 = vpop.f32.mrf.mxu0
      %3904 = vmatprep.mubr.f32.mxu0 0.0
      %3905 = vmatmul.mubr.f32.gmra.mxu0 %v3334
      %v3906 = vpop.f32.mrf.mxu0
      %v3907 = vadd.f32 0.0, %v3906
      %v3908 = vpop.f32.mrf.mxu0
      %3909 = vdwg.mxu0
      %v3910 = vadd.f32 %v3819, %v3902
      %v3911 = vadd.f32 %v3824, %v3907
      %v3912 = vmul.f32 %v3910, 0.5
      %v3913 = vmul.f32 %v3911, 0.5
      %v3914 = vtanh.pop %v3912
      %v3915 = vtanh.pop %v3913
      %v3916 = vmul.f32 %v3914, 0.5
      %v3917 = vmul.f32 %v3915, 0.5
      %v3918 = vadd.f32 %v3916, 0.5
      %v3919 = vadd.f32 %v3917, 0.5
      %v3920 = vtanh.pop %v3910
      %v3921 = vtanh.pop %v3911
      %v3922 = vmul.f32 %v3918, 0.0
      %v3923 = vmul.f32 %v3919, 0.0
      %3926 = vrot.lane.b32.xlu0 %v3920, 72
      %v3927 = vpop.permute.xlu0 %3926
      %3928 = vrot.lane.b32.xlu0 %v3921, 72
      %v3929 = vpop.permute.xlu0 %3928
      %v3932 = vmul.f32 %v3918, %v3927
      %v3933 = vmul.f32 %v3919, %v3929
      %3936 = vrot.lane.b32.xlu0 %v3932, 28
      %v3937 = vpop.permute.xlu0 %3936
      %3938 = vrot.lane.b32.xlu0 %v3933, 28
      %v3939 = vpop.permute.xlu0 %3938
      %v3942 = vadd.f32 %v3922, %v3937
      %v3943 = vadd.f32 %v3923, %v3939
      %v3944 = vtanh.pop %v3942
      %v3945 = vtanh.pop %v3943
      %3948 = vrot.lane.b32.xlu0 %v3944, 56
      %v3949 = vpop.permute.xlu0 %3948
      %3950 = vrot.lane.b32.xlu0 %v3945, 56
      %v3951 = vpop.permute.xlu0 %3950
      %v3954 = vmul.f32 %v3918, %v3949
      %v3955 = vmul.f32 %v3919, %v3951
      %3958 = vrot.lane.b32.xlu0 %v3954, 44
      %v3959 = vpop.permute.xlu0 %3958
      %3960 = vrot.lane.b32.xlu0 %v3955, 44
      %v3961 = vpop.permute.xlu0 %3960
      %v3962 = vsel %vm3332, %v3959, 0
      %v3964 = vsel %vm3332, %v3961, 0
      %3966 = vmatprep.subr.mxu0 0.0
      %3967 = vmatpush1.msra.mxu0 0.0
      %3968 = vmatprep.subr.mxu0 0.0
      %3969 = vmatpush1.msra.mxu0 0.0
      %3970 = vmatprep.subr.mxu0 0.0
      %3971 = vmatpush1.msra.mxu0 0.0
      %3972 = vmatprep.subr.mxu0 0.0
      %3973 = vmatpush1.msra.mxu0 0.0
      %3974 = vmatprep.subr.mxu0 0.0
      %3975 = vmatpush1.msra.mxu0 0.0
      %3976 = vmatprep.subr.mxu0 0.0
      %3977 = vmatpush1.msra.mxu0 0.0
      %3978 = vmatprep.subr.mxu0 0.0
      %3979 = vmatpush1.msra.mxu0 0.0
      %3980 = vmatprep.subr.mxu0 0.0
      %3981 = vmatpush1.msra.mxu0 0.0
      %3982 = vmatprep.subr.mxu0 0.0
      %3983 = vmatpush1.msra.mxu0 0.0
      %3984 = vmatprep.subr.mxu0 0.0
      %3985 = vmatpush1.msra.mxu0 0.0
      %3986 = vmatprep.subr.mxu0 0.0
      %3987 = vmatpush1.msra.mxu0 0.0
      %3988 = vmatprep.subr.mxu0 0.0
      %3989 = vmatpush1.msra.mxu0 0.0
      %3990 = vmatprep.subr.mxu0 0.0
      %3991 = vmatpush1.msra.mxu0 %v3833
      %3992 = vmatprep.subr.mxu0 0.0
      %3993 = vmatpush1.msra.mxu0 %v3830
      %3994 = vmatprep.subr.mxu0 0.0
      %3995 = vmatpush1.msra.mxu0 %v3829
      %3996 = vmatprep.subr.mxu0 0.0
      %3997 = vmatpush1.msra.mxu0 %v3828
      %3998 = vmatprep.subr.mxu0 0.0
      %3999 = vmatpush2.msra.mxu0 0.0
      %4000 = vmatprep.subr.mxu0 0.0
      %4001 = vmatpush2.msra.mxu0 0.0
      %4002 = vmatprep.subr.mxu0 0.0
      %4003 = vmatpush2.msra.mxu0 0.0
      %4004 = vmatprep.subr.mxu0 0.0
      %4005 = vmatpush2.msra.mxu0 0.0
      %4006 = vmatprep.subr.mxu0 0.0
      %4007 = vmatpush2.msra.mxu0 0.0
      %4008 = vmatprep.subr.mxu0 0.0
      %4009 = vmatpush2.msra.mxu0 0.0
      %4010 = vmatprep.subr.mxu0 0.0
      %4011 = vmatpush2.msra.mxu0 0.0
      %4012 = vmatprep.subr.mxu0 0.0
      %4013 = vmatpush2.msra.mxu0 0.0
      %4014 = vmatprep.subr.mxu0 0.0
      %4015 = vmatpush2.msra.mxu0 0.0
      %4016 = vmatprep.subr.mxu0 0.0
      %4017 = vmatpush2.msra.mxu0 0.0
      %4018 = vmatprep.subr.mxu0 0.0
      %4019 = vmatpush2.msra.mxu0 0.0
      %4020 = vmatprep.subr.mxu0 0.0
      %4021 = vmatpush2.msra.mxu0 0.0
      %4022 = vmatprep.subr.mxu0 0.0
      %4023 = vmatpush2.msra.mxu0 0.0
      %4024 = vmatprep.subr.mxu0 0.0
      %4025 = vmatpush2.msra.mxu0 0.0
      %4026 = vmatprep.subr.mxu0 0.0
      %4027 = vmatpush2.msra.mxu0 0.0
      %4028 = vmatprep.subr.mxu0 0.0
      %4029 = vmatpush2.msra.mxu0 0.0
      %4030 = vmatprep.mubr.f32.mxu0 0.0
      %4031 = vmatmul.mubr.f32.gmra.mxu0 %v3962
      %v4032 = vpop.f32.mrf.mxu0
      %v4033 = vadd.f32 0.0, %v4032
      %v4034 = vpop.f32.mrf.mxu0
      %4035 = vmatprep.mubr.f32.mxu0 0.0
      %4036 = vmatmul.mubr.f32.gmra.mxu0 %v3964
      %v4037 = vpop.f32.mrf.mxu0
      %v4038 = vadd.f32 0.0, %v4037
      %v4039 = vpop.f32.mrf.mxu0
      %4040 = vdwg.mxu0
      %v4041 = vadd.f32 %v3809, %v4033
      %v4042 = vadd.f32 %v3814, %v4038
      %v4043 = vmul.f32 %v4041, 0.5
      %v4044 = vmul.f32 %v4042, 0.5
      %v4045 = vtanh.pop %v4043
      %v4046 = vtanh.pop %v4044
      %v4047 = vmul.f32 %v4045, 0.5
      %v4048 = vmul.f32 %v4046, 0.5
      %v4049 = vadd.f32 %v4047, 0.5
      %v4050 = vadd.f32 %v4048, 0.5
      %v4051 = vtanh.pop %v4041
      %v4052 = vtanh.pop %v4042
      %v4053 = vmul.f32 %v4049, %v3942
      %v4054 = vmul.f32 %v4050, %v3943
      %4057 = vrot.lane.b32.xlu0 %v4051, 72
      %v4058 = vpop.permute.xlu0 %4057
      %4059 = vrot.lane.b32.xlu0 %v4052, 72
      %v4060 = vpop.permute.xlu0 %4059
      %v4063 = vmul.f32 %v4049, %v4058
      %v4064 = vmul.f32 %v4050, %v4060
      %4067 = vrot.lane.b32.xlu0 %v4063, 28
      %v4068 = vpop.permute.xlu0 %4067
      %4069 = vrot.lane.b32.xlu0 %v4064, 28
      %v4070 = vpop.permute.xlu0 %4069
      %v4073 = vadd.f32 %v4053, %v4068
      %v4074 = vadd.f32 %v4054, %v4070
      %v4075 = vtanh.pop %v4073
      %v4076 = vtanh.pop %v4074
      %4079 = vrot.lane.b32.xlu0 %v4075, 56
      %v4080 = vpop.permute.xlu0 %4079
      %4081 = vrot.lane.b32.xlu0 %v4076, 56
      %v4082 = vpop.permute.xlu0 %4081
      %v4085 = vmul.f32 %v4049, %v4080
      %v4086 = vmul.f32 %v4050, %v4082
      %4089 = vrot.lane.b32.xlu0 %v4085, 44
      %v4090 = vpop.permute.xlu0 %4089
      %4091 = vrot.lane.b32.xlu0 %v4086, 44
      %v4092 = vpop.permute.xlu0 %4091
      %v4093 = vsel %vm3332, %v4090, 0
      %v4095 = vsel %vm3332, %v4092, 0
      %4097 = vmatprep.subr.mxu0 0.0
      %4098 = vmatpush1.msra.mxu0 0.0
      %4099 = vmatprep.subr.mxu0 0.0
      %4100 = vmatpush1.msra.mxu0 0.0
      %4101 = vmatprep.subr.mxu0 0.0
      %4102 = vmatpush1.msra.mxu0 0.0
      %4103 = vmatprep.subr.mxu0 0.0
      %4104 = vmatpush1.msra.mxu0 0.0
      %4105 = vmatprep.subr.mxu0 0.0
      %4106 = vmatpush1.msra.mxu0 0.0
      %4107 = vmatprep.subr.mxu0 0.0
      %4108 = vmatpush1.msra.mxu0 0.0
      %4109 = vmatprep.subr.mxu0 0.0
      %4110 = vmatpush1.msra.mxu0 0.0
      %4111 = vmatprep.subr.mxu0 0.0
      %4112 = vmatpush1.msra.mxu0 0.0
      %4113 = vmatprep.subr.mxu0 0.0
      %4114 = vmatpush1.msra.mxu0 0.0
      %4115 = vmatprep.subr.mxu0 0.0
      %4116 = vmatpush1.msra.mxu0 0.0
      %4117 = vmatprep.subr.mxu0 0.0
      %4118 = vmatpush1.msra.mxu0 0.0
      %4119 = vmatprep.subr.mxu0 0.0
      %4120 = vmatpush1.msra.mxu0 0.0
      %4121 = vmatprep.subr.mxu0 0.0
      %4122 = vmatpush1.msra.mxu0 %v3833
      %4123 = vmatprep.subr.mxu0 0.0
      %4124 = vmatpush1.msra.mxu0 %v3830
      %4125 = vmatprep.subr.mxu0 0.0
      %4126 = vmatpush1.msra.mxu0 %v3829
      %4127 = vmatprep.subr.mxu0 0.0
      %4128 = vmatpush1.msra.mxu0 %v3828
      %4129 = vmatprep.subr.mxu0 0.0
      %4130 = vmatpush2.msra.mxu0 0.0
      %4131 = vmatprep.subr.mxu0 0.0
      %4132 = vmatpush2.msra.mxu0 0.0
      %4133 = vmatprep.subr.mxu0 0.0
      %4134 = vmatpush2.msra.mxu0 0.0
      %4135 = vmatprep.subr.mxu0 0.0
      %4136 = vmatpush2.msra.mxu0 0.0
      %4137 = vmatprep.subr.mxu0 0.0
      %4138 = vmatpush2.msra.mxu0 0.0
      %4139 = vmatprep.subr.mxu0 0.0
      %4140 = vmatpush2.msra.mxu0 0.0
      %4141 = vmatprep.subr.mxu0 0.0
      %4142 = vmatpush2.msra.mxu0 0.0
      %4143 = vmatprep.subr.mxu0 0.0
      %4144 = vmatpush2.msra.mxu0 0.0
      %4145 = vmatprep.subr.mxu0 0.0
      %4146 = vmatpush2.msra.mxu0 0.0
      %4147 = vmatprep.subr.mxu0 0.0
      %4148 = vmatpush2.msra.mxu0 0.0
      %4149 = vmatprep.subr.mxu0 0.0
      %4150 = vmatpush2.msra.mxu0 0.0
      %4151 = vmatprep.subr.mxu0 0.0
      %4152 = vmatpush2.msra.mxu0 0.0
      %4153 = vmatprep.subr.mxu0 0.0
      %4154 = vmatpush2.msra.mxu0 0.0
      %4155 = vmatprep.subr.mxu0 0.0
      %4156 = vmatpush2.msra.mxu0 0.0
      %4157 = vmatprep.subr.mxu0 0.0
      %4158 = vmatpush2.msra.mxu0 0.0
      %4159 = vmatprep.subr.mxu0 0.0
      %4160 = vmatpush2.msra.mxu0 0.0
      %4161 = vmatprep.mubr.f32.mxu0 0.0
      %4162 = vmatmul.mubr.f32.gmra.mxu0 %v4093
      %v4163 = vpop.f32.mrf.mxu0
      %v4164 = vadd.f32 0.0, %v4163
      %v4165 = vpop.f32.mrf.mxu0
      %4166 = vmatprep.mubr.f32.mxu0 0.0
      %4167 = vmatmul.mubr.f32.gmra.mxu0 %v4095
      %v4168 = vpop.f32.mrf.mxu0
      %v4169 = vadd.f32 0.0, %v4168
      %v4170 = vpop.f32.mrf.mxu0
      %4171 = vdwg.mxu0
      %v4172 = vadd.f32 %v3799, %v4164
      %v4173 = vadd.f32 %v3804, %v4169
      %v4174 = vmul.f32 %v4172, 0.5
      %v4175 = vmul.f32 %v4173, 0.5
      %v4176 = vtanh.pop %v4174
      %v4177 = vtanh.pop %v4175
      %v4178 = vmul.f32 %v4176, 0.5
      %v4179 = vmul.f32 %v4177, 0.5
      %v4180 = vadd.f32 %v4178, 0.5
      %v4181 = vadd.f32 %v4179, 0.5
      %v4182 = vtanh.pop %v4172
      %v4183 = vtanh.pop %v4173
      %v4184 = vmul.f32 %v4180, %v4073
      %v4185 = vmul.f32 %v4181, %v4074
      %4188 = vrot.lane.b32.xlu0 %v4182, 72
      %v4189 = vpop.permute.xlu0 %4188
      %4190 = vrot.lane.b32.xlu0 %v4183, 72
      %v4191 = vpop.permute.xlu0 %4190
      %v4194 = vmul.f32 %v4180, %v4189
      %v4195 = vmul.f32 %v4181, %v4191
      %4198 = vrot.lane.b32.xlu0 %v4194, 28
      %v4199 = vpop.permute.xlu0 %4198
      %4200 = vrot.lane.b32.xlu0 %v4195, 28
      %v4201 = vpop.permute.xlu0 %4200
      %v4204 = vadd.f32 %v4184, %v4199
      %v4205 = vadd.f32 %v4185, %v4201
      %v4206 = vtanh.pop %v4204
      %v4207 = vtanh.pop %v4205
      %4210 = vrot.lane.b32.xlu0 %v4206, 56
      %v4211 = vpop.permute.xlu0 %4210
      %4212 = vrot.lane.b32.xlu0 %v4207, 56
      %v4213 = vpop.permute.xlu0 %4212
      %v4216 = vmul.f32 %v4180, %v4211
      %v4217 = vmul.f32 %v4181, %v4213
      %v4218 = vld [vmem:[%s11] sm:$0x1]
      %v4219 = vld [vmem:[%s12] sm:$0x1]
      %v4220 = vld [vmem:[#allocation2] sm:$0x1]
      %v4222 = vlaneseq
      %v4223 = vshrl.u32 %v4222, 7
      %v4224 = vsub.s32 0, %v4223
      %v4225 = vrot.slane %v4218, %v4224
      %4226 = vrot.lane.b32.xlu0 %v4225, 84
      %v4227 = vpop.permute.xlu0 %4226
      %v4229 = vmul.f32 %v3458, %v4227
      %v4230 = vmul.f32 %v3459, %v4227
      %4233 = vrot.lane.b32.xlu0 %v4229, 44
      %v4234 = vpop.permute.xlu0 %4233
      %4235 = vrot.lane.b32.xlu0 %v4230, 44
      %v4236 = vpop.permute.xlu0 %4235
      %v4239 = vsel %vm3332, %v4234, 0.0
      %4240 = vadd.xlane.f32.xlu0 %v4239
      %v4241 = vpop.xlane.xlu0 %4240
      %v4242 = vsel %vm3332, %v4236, 0.0
      %4243 = vadd.xlane.f32.xlu0 %v4242
      %v4244 = vpop.xlane.xlu0 %4243
      %v4246 = vlaneseq
      %v4247 = vshrl.u32 %v4246, 7
      %v4248 = vsub.s32 0, %v4247
      %v4249 = vrot.slane %v4219, %v4248
      %4250 = vrot.lane.b32.xlu0 %v4249, 84
      %v4251 = vpop.permute.xlu0 %4250
      %v4253 = vmul.f32 %v4216, %v4251
      %v4254 = vmul.f32 %v4217, %v4251
      %4257 = vrot.lane.b32.xlu0 %v4253, 44
      %v4258 = vpop.permute.xlu0 %4257
      %4259 = vrot.lane.b32.xlu0 %v4254, 44
      %v4260 = vpop.permute.xlu0 %4259
      %v4263 = vsel %vm3332, %v4258, 0.0
      %4264 = vadd.xlane.f32.xlu0 %v4263
      %v4265 = vpop.xlane.xlu0 %4264
      %v4266 = vsel %vm3332, %v4260, 0.0
      %4267 = vadd.xlane.f32.xlu0 %v4266
      %v4268 = vpop.xlane.xlu0 %4267
      %v4269 = vadd.f32 %v4241, %v4265
      %v4270 = vadd.f32 %v4244, %v4268
      %v4272 = vlaneseq
      %v4273 = vshrl.u32 %v4272, 7
      %v4274 = vsub.s32 0, %v4273
      %v4275 = vrot.slane %v4220, %v4274
      %v4277 = vadd.f32 %v4269, %v4275
      %v4278 = vadd.f32 %v4270, %v4275
      %v4279 = vmul.f32 %v3589, %v4227
      %v4280 = vmul.f32 %v3590, %v4227
      %4283 = vrot.lane.b32.xlu0 %v4279, 44
      %v4284 = vpop.permute.xlu0 %4283
      %4285 = vrot.lane.b32.xlu0 %v4280, 44
      %v4286 = vpop.permute.xlu0 %4285
      %v4289 = vsel %vm3332, %v4284, 0.0
      %4290 = vadd.xlane.f32.xlu0 %v4289
      %v4291 = vpop.xlane.xlu0 %4290
      %v4292 = vsel %vm3332, %v4286, 0.0
      %4293 = vadd.xlane.f32.xlu0 %v4292
      %v4294 = vpop.xlane.xlu0 %4293
      %v4295 = vmul.f32 %v4085, %v4251
      %v4296 = vmul.f32 %v4086, %v4251
      %4299 = vrot.lane.b32.xlu0 %v4295, 44
      %v4300 = vpop.permute.xlu0 %4299
      %4301 = vrot.lane.b32.xlu0 %v4296, 44
      %v4302 = vpop.permute.xlu0 %4301
      %v4305 = vsel %vm3332, %v4300, 0.0
      %4306 = vadd.xlane.f32.xlu0 %v4305
      %v4307 = vpop.xlane.xlu0 %4306
      %v4308 = vsel %vm3332, %v4302, 0.0
      %4309 = vadd.xlane.f32.xlu0 %v4308
      %v4310 = vpop.xlane.xlu0 %4309
      %v4311 = vadd.f32 %v4291, %v4307
      %v4312 = vadd.f32 %v4294, %v4310
      %v4313 = vadd.f32 %v4311, %v4275
      %v4314 = vadd.f32 %v4312, %v4275
      %v4315 = vmul.f32 %v3720, %v4227
      %v4316 = vmul.f32 %v3721, %v4227
      %4319 = vrot.lane.b32.xlu0 %v4315, 44
      %v4320 = vpop.permute.xlu0 %4319
      %4321 = vrot.lane.b32.xlu0 %v4316, 44
      %v4322 = vpop.permute.xlu0 %4321
      %v4325 = vsel %vm3332, %v4320, 0.0
      %4326 = vadd.xlane.f32.xlu0 %v4325
      %v4327 = vpop.xlane.xlu0 %4326
      %v4328 = vsel %vm3332, %v4322, 0.0
      %4329 = vadd.xlane.f32.xlu0 %v4328
      %v4330 = vpop.xlane.xlu0 %4329
      %v4331 = vmul.f32 %v3954, %v4251
      %v4332 = vmul.f32 %v3955, %v4251
      %4335 = vrot.lane.b32.xlu0 %v4331, 44
      %v4336 = vpop.permute.xlu0 %4335
      %4337 = vrot.lane.b32.xlu0 %v4332, 44
      %v4338 = vpop.permute.xlu0 %4337
      %v4341 = vsel %vm3332, %v4336, 0.0
      %4342 = vadd.xlane.f32.xlu0 %v4341
      %v4343 = vpop.xlane.xlu0 %4342
      %v4344 = vsel %vm3332, %v4338, 0.0
      %4345 = vadd.xlane.f32.xlu0 %v4344
      %v4346 = vpop.xlane.xlu0 %4345
      %v4347 = vadd.f32 %v4327, %v4343
      %v4348 = vadd.f32 %v4330, %v4346
      %v4349 = vadd.f32 %v4347, %v4275
      %v4350 = vadd.f32 %v4348, %v4275
      %4353 = vrot.lane.b32.xlu0 %v4313, 1
      %v4354 = vpop.permute.xlu0 %4353
      %4355 = vrot.lane.b32.xlu0 %v4314, 1
      %v4356 = vpop.permute.xlu0 %4355
      %4361 = vrot.lane.b32.xlu0 %v4349, 2
      %v4362 = vpop.permute.xlu0 %4361
      %4363 = vrot.lane.b32.xlu0 %v4350, 2
      %v4364 = vpop.permute.xlu0 %4363
      %vm4367 = vcmask 7168
      %v4368 = vsel %vm4367, %v4277, %v4354
      %v4369 = vsel %vm4367, %v4278, %v4356
      %vm4370 = vcmask 15360
      %v4371 = vsel %vm4370, %v4368, %v4362
      %v4372 = vsel %vm4370, %v4369, %v4364
      %vm4373 = vcmask 23552
      %v4374 = vsel %vm4373, %v4371, -inf
      %4375 = vmax.xlane.f32.xlu0 %v4374
      %v4376 = vpop.xlane.xlu0 %4375
      %v4377 = vsel %vm4373, %v4372, -inf
      %4378 = vmax.xlane.f32.xlu0 %v4377
      %v4379 = vpop.xlane.xlu0 %4378
      %v4380 = vsub.f32 %v4371, %v4376
      %v4381 = vsub.f32 %v4372, %v4379
      %v4382 = vmul.f32 %v4380, 1.442695
      %v4383 = vpow.pop %v4382
      %v4384 = vmul.f32 %v4381, 1.442695
      %v4385 = vpow.pop %v4384
      %v4386 = vsel %vm4373, %v4383, 0.0
      %4387 = vadd.xlane.f32.xlu0 %v4386
      %v4388 = vpop.xlane.xlu0 %4387
      %v4389 = vsel %vm4373, %v4385, 0.0
      %4390 = vadd.xlane.f32.xlu0 %v4389
      %v4391 = vpop.xlane.xlu0 %4390
      %v4392 = vrcp.pop %v4388
      %v4393 = vrcp.pop %v4391
      %v4394 = vmul.f32 %v4383, %v4392
      %v4395 = vmul.f32 %v4385, %v4393
      %4397 = vset.pattern.permute.xlu0 0
      %4398 = vperm.xlu0 %4397, %v4394
      %v4399 = vpop.permute.xlu0 %4398
      %4402 = vset.pattern.permute.xlu0 0
      %4403 = vperm.xlu0 %4402, %v4395
      %v4404 = vpop.permute.xlu0 %4403
      %v4406 = vmul.f32 %v4399, %v1417
      %v4407 = vmul.f32 %v4404, %v1418
      %4408 = vset.pattern.permute.xlu0 1
      %4409 = vperm.xlu0 %4408, %v4394
      %v4410 = vpop.permute.xlu0 %4409
      %4412 = vset.pattern.permute.xlu0 1
      %4413 = vperm.xlu0 %4412, %v4395
      %v4414 = vpop.permute.xlu0 %4413
      %v4416 = vmul.f32 %v4410, %v2311
      %v4417 = vmul.f32 %v4414, %v2312
      %v4418 = vadd.f32 %v4406, %v4416
      %v4419 = vadd.f32 %v4407, %v4417
      %4420 = vset.pattern.permute.xlu0 2
      %4421 = vperm.xlu0 %4420, %v4394
      %v4422 = vpop.permute.xlu0 %4421
      %4424 = vset.pattern.permute.xlu0 2
      %4425 = vperm.xlu0 %4424, %v4395
      %v4426 = vpop.permute.xlu0 %4425
      %v4428 = vmul.f32 %v4422, %v3205
      %v4429 = vmul.f32 %v4426, %v3206
      %v4430 = vadd.f32 %v4418, %v4428
      %v4431 = vadd.f32 %v4419, %v4429
      %4432 = vst.msk [vmem:[%s509] sm:$0xff] %vm775, %v4430
      %4433 = vst.msk [vmem:[%s509 + $0x8] sm:$0xff] %vm775, %v4431
      %p4434 = scmp.lt.s32.totalorder %s27, 7
      %s4435 = scalar_select %p4434, %s27, 7
      %s4436 = smul.addr %s4435, 2
      %s4437 = smul.addr %s4436, 8
      %s4438 = scalar_lea.vmem %s14, %s4437
      // Predicated region
      $region77: #{tpu_custom_call.1} parent=75 // pred_check
        %p4439 = pneg %p354
      $region78: #{tpu_custom_call.1} parent=75 // pred_check_branch
        %4441 = sbr.rel (%p4439) target = $region80
      $region79: #{tpu_custom_call.1} parent=75 // pred_region
        _
      $region80: #{tpu_custom_call.1} parent=75 // pred_fallthru
        _
    $region76: #{tpu_custom_call.1} parent=5 // pred_fallthru
      _
    %p4442 = scmp.le.s32.totalorder 2, %s22
    // Predicated region
    $region81: #{tpu_custom_call.1} parent=5 // pred_check
      %p4443 = pneg %p4442
    $region82: #{tpu_custom_call.1} parent=5 // pred_check_branch
      %4445 = sbr.rel (%p4443) target = $region84
    $region83: #{tpu_custom_call.1} parent=5 // pred_region
      %s4446 = ssub.s32 %s22, 2
      // Predicated region
      $region85: #{tpu_custom_call.1} parent=83 // pred_check
        %p4447 = pneg %p360
      $region86: #{tpu_custom_call.1} parent=83 // pred_check_branch
        %4449 = sbr.rel (%p4447) target = $region88
      $region87: #{tpu_custom_call.1} parent=83 // pred_region
        %p4450 = scmp.lt.s32.totalorder %s28, 7
        %s4451 = scalar_select %p4450, %s28, 7
        %s4452 = smul.addr %s4451, 2
        %s4453 = smul.addr %s4452, 8
        %s4454 = scalar_lea.vmem %s14, %s4453
      $region88: #{tpu_custom_call.1} parent=83 // pred_fallthru
        _
    $region84: #{tpu_custom_call.1} parent=5 // pred_fallthru
      _
  $region6: #{tpu_custom_call.1} parent=0 // loop_footer
    %s26 = sadd.s32 1, %s22
  $region7: #{tpu_custom_call.1} parent=0 // loop_footer_branch
    %21 = sbr.rel target = $region3
  $region8: #{tpu_custom_call.1} parent=0 // loop_exit
    _

</llo_original>
